<compile_context>
chip_gen: v6e
topology: v6e:2x2x1
jax: 0.10.0
libtpu: 0.0.40
codegen_flags: <defaults>
</compile_context>

<pallas_src>
import functools

import jax
import jax.numpy as jnp
from jax.experimental import pallas as pl
from jax.experimental.pallas import tpu as pltpu


# --------------------------------------------------------------------------
# Dense (Linear) kernel:  (M, K) @ (K, N) + bias
# --------------------------------------------------------------------------
def _linear_kernel(x_ref, w_ref, b_ref, o_ref):
    acc = jnp.dot(x_ref[...], w_ref[...], preferred_element_type=jnp.float32)
    o_ref[...] = (acc + b_ref[...]).astype(o_ref.dtype)


def linear(x2d, w, b):
    M, K = x2d.shape
    K2, N = w.shape
    assert K == K2
    return pl.pallas_call(
        _linear_kernel,
        out_shape=jax.ShapeDtypeStruct((M, N), x2d.dtype),
        grid_spec=pl.GridSpec(
            grid=(1,),
            in_specs=[pl.BlockSpec((M, K), lambda i: (0, 0)),
                      pl.BlockSpec((K, N), lambda i: (0, 0)),
                      pl.BlockSpec((1, N), lambda i: (0, 0))],
            out_specs=pl.BlockSpec((M, N), lambda i: (0, 0)),
        ),
        compiler_params=pltpu.CompilerParams(dimension_semantics=("arbitrary",)),
        cost_estimate=pl.CostEstimate(
            flops=2 * M * K * N, transcendentals=0,
            bytes_accessed=4 * (M * K + K * N + N + M * N)),
    )(x2d, w, b.reshape(1, N))


# --------------------------------------------------------------------------
# Capsule projection kernel: u[j, b, w*E+e] = sum_d x[j, b, d] * W_r[j, d, w*E+e]
# (this is `self.W @ x` from the torch module, with W pre-arranged once in the wrapper)
# --------------------------------------------------------------------------
def _capsule_kernel(x_ref, w_ref, o_ref, *, jt):
    # x_ref: (jt, B, dh); w_ref: (jt, dh, words*E); o_ref: (jt, B, words*E)
    for jj in range(jt):  # static unroll; each is a plain 2-D MXU matmul
        o_ref[jj] = jnp.dot(x_ref[jj], w_ref[jj],
                            preferred_element_type=jnp.float32).astype(o_ref.dtype)


def _pick_chunk(n, target=8):
    c = min(n, target)
    while n % c:
        c -= 1
    return c


def capsule_project(x_t, w_r):
    N, B, dh = x_t.shape
    N2, dh2, WE = w_r.shape
    assert N == N2 and dh == dh2
    jt = _pick_chunk(N, 8)
    return pl.pallas_call(
        functools.partial(_capsule_kernel, jt=jt),
        out_shape=jax.ShapeDtypeStruct((N, B, WE), x_t.dtype),
        grid_spec=pl.GridSpec(
            grid=(N // jt,),
            in_specs=[pl.BlockSpec((jt, B, dh), lambda i: (i, 0, 0)),
                      pl.BlockSpec((jt, dh, WE), lambda i: (i, 0, 0))],
            out_specs=pl.BlockSpec((jt, B, WE), lambda i: (i, 0, 0)),
        ),
        compiler_params=pltpu.CompilerParams(dimension_semantics=("parallel",)),
        cost_estimate=pl.CostEstimate(
            flops=2 * N * B * dh * WE, transcendentals=0,
            bytes_accessed=4 * (N * B * dh + N * dh * WE + N * B * WE)),
    )(x_t, w_r)


# --------------------------------------------------------------------------
# Dynamic routing kernel (one batch element per grid step; iterations unrolled)
# --------------------------------------------------------------------------
def _routing_kernel(u_ref, v_ref, *, iterations):
    u = u_ref[0].astype(jnp.float32)            # (N, words, E)
    b = jnp.zeros_like(u)                       # routing logits (constant along E, as in torch)
    v = jnp.zeros_like(u[0:1])
    for i in range(iterations):                 # small static int -> unrolled
        m = jnp.max(b, axis=1, keepdims=True)                   # softmax over 'words'
        e = jnp.exp(b - m)
        c = e / jnp.sum(e, axis=1, keepdims=True)               # (N, words, E)
        s = jnp.sum(c * u, axis=0, keepdims=True)               # (1, words, E)
        sn = jnp.sqrt(jnp.sum(s * s, axis=2, keepdims=True))    # (1, words, 1)
        v = (sn / (1.0 + sn * sn)) * s                          # squash
        if i < iterations - 1:
            b = b + jnp.sum(u * v, axis=2, keepdims=True)       # agreement (broadcast along E)
    v_ref[...] = v.astype(v_ref.dtype)


def dynamic_routing(u_hat, iterations):
    B, N, W, E = u_hat.shape
    return pl.pallas_call(
        functools.partial(_routing_kernel, iterations=iterations),
        out_shape=jax.ShapeDtypeStruct((B, W, E), u_hat.dtype),
        grid_spec=pl.GridSpec(
            grid=(B,),
            in_specs=[pl.BlockSpec((1, N, W, E), lambda bi: (bi, 0, 0, 0))],
            out_specs=pl.BlockSpec((1, W, E), lambda bi: (bi, 0, 0)),
        ),
        compiler_params=pltpu.CompilerParams(dimension_semantics=("parallel",)),
        cost_estimate=pl.CostEstimate(
            flops=8 * iterations * B * N * W * E,
            transcendentals=iterations * B * N * W * E,
            bytes_accessed=4 * (B * N * W * E + B * W * E)),
    )(u_hat)


# --------------------------------------------------------------------------
# Module wrapper (forward pass only)
# --------------------------------------------------------------------------
class Routing:
    """JAX/Pallas equivalent of the PyTorch Routing module."""

    def __init__(self, iterations, words, dim, heads=8, dim_head=32, *, key):
        self.iterations = int(iterations)
        self.words = int(words)
        self.heads = int(heads)
        self.dim_head = int(dim_head)
        self.dim = int(dim)
        inner_dim = dim_head * heads
        self.inner_dim = inner_dim
        self.project = (inner_dim == dim)       # matches `project_out` in the torch code
        self.bias = 0.0

        n_caps = words * heads
        kw, k1, k2, k3, k4 = jax.random.split(key, 5)
        # torch.randn init for the routing weight
        self.W = jax.random.normal(kw, (1, n_caps, words, inner_dim, dim_head), jnp.float32)
        if self.project:
            lim_i = 1.0 / (dim ** 0.5)
            self.inner_w = jax.random.uniform(k1, (dim, inner_dim), jnp.float32, -lim_i, lim_i)
            self.inner_b = jax.random.uniform(k2, (inner_dim,), jnp.float32, -lim_i, lim_i)
            lim_o = 1.0 / (inner_dim ** 0.5)
            self.outer_w = jax.random.uniform(k3, (inner_dim, dim), jnp.float32, -lim_o, lim_o)
            self.outer_b = jax.random.uniform(k4, (dim,), jnp.float32, -lim_o, lim_o)

        # Pre-arrange the routing weight once (parameter preprocessing, not per-forward work):
        #   W_r[j, d, w*E + e] = W[0, j, w, e, d]
        self.W_r = jnp.transpose(self.W[0], (0, 3, 1, 2)).reshape(
            n_caps, dim_head, words * inner_dim)

    def __call__(self, x):
        B, n, d = x.shape
        h, dh, E, nw = self.heads, self.dim_head, self.inner_dim, self.words
        assert n == nw, (n, nw)   # torch broadcasting in `self.W @ x` requires n == words
        N = n * h

        # 1) inner projection
        if self.project:
            xi = linear(x.reshape(B * n, d), self.inner_w, self.inner_b).reshape(B, n, E)
        else:
            xi = x                # nn.Identity()

        # 2) rearrange 'b n (h d) -> b (n h) d'  (metadata only)
        xr = xi.reshape(B, n, h, dh).reshape(B, N, dh)

        # 3) per-capsule projection: u_hat[b,j,w,e] = sum_d W[0,j,w,e,d] * xr[b,j,d]  (+ bias=0)
        xt = jnp.transpose(xr, (1, 0, 2))                      # (N, B, dh)
        u = capsule_project(xt, self.W_r)                      # (N, B, words*E)
        u_hat = jnp.transpose(u, (1, 0, 2)).reshape(B, N, nw, E) + self.bias

        # 4) dynamic routing (includes the final .squeeze(1))
        v = dynamic_routing(u_hat, self.iterations)            # (B, words, E)

        # 5) outer projection
        if self.project:
            return linear(v.reshape(B * nw, E),
                          self.outer_w, self.outer_b).reshape(B, nw, self.dim)
        return v


# --------------------------------------------------------------------------
# Pure-JAX reference (mirrors the torch forward exactly; detach has no forward effect)
# --------------------------------------------------------------------------
def routing_reference(mod, x):
    hi = jax.lax.Precision.HIGHEST
    B, n, d = x.shape
    h, dh, E = mod.heads, mod.dim_head, mod.inner_dim
    N = n * h
    xi = (jnp.einsum('bnd,de->bne', x, mod.inner_w, precision=hi) + mod.inner_b
          if mod.project else x)
    xr = xi.reshape(B, n, h, dh).reshape(B, N, dh)
    u_hat = jnp.einsum('jwed,bjd->bjwe', mod.W[0], xr, precision=hi) + mod.bias
    b_log = jnp.zeros_like(u_hat)
    v = None
    for i in range(mod.iterations):
        c = jax.nn.softmax(b_log, axis=2)
        s = jnp.sum(c * u_hat, axis=1, keepdims=True)
        sn = jnp.sqrt(jnp.sum(s * s, axis=-1, keepdims=True))
        v = sn / (1.0 + sn ** 2) * s
        if i < mod.iterations - 1:
            b_log = b_log + jnp.sum(u_hat * v, axis=3, keepdims=True)
    v = v[:, 0]
    if mod.project:
        return jnp.einsum('bwe,ed->bwd', v, mod.outer_w, precision=hi) + mod.outer_b
    return v


if __name__ == "__main__":
    key = jax.random.PRNGKey(0)
    k_param, k_x = jax.random.split(key)

    iterations, words, heads, dim_head = 3, 8, 4, 32
    dim = heads * dim_head          # 128 == inner_dim -> Linear projections are active
    batch, seq = 2, words           # n must equal `words` for the torch broadcast to be valid

    mod = Routing(iterations, words, dim, heads=heads, dim_head=dim_head, key=k_param)
    x = jax.random.normal(k_x, (batch, seq, dim), dtype=jnp.float32)

    fwd = jax.jit(mod.__call__)
    y = jax.block_until_ready(fwd(x))

    ref = jax.block_until_ready(routing_reference(mod, x))

    assert y.shape == (batch, words, dim), y.shape
    assert y.dtype == x.dtype
    max_err = float(jnp.max(jnp.abs(y - ref)))
    assert bool(jnp.allclose(y, ref, rtol=5e-2, atol=2e-2)), max_err
    print("KERNEL_OK")
</pallas_src>

<mosaic_0001>
module attributes {stable_mosaic.version = 11 : i64} {
  func.func @_linear_kernel(%arg0: i32, %arg1: memref<16x128xf32, #tpu.memory_space<vmem>>, %arg2: memref<128x128xf32, #tpu.memory_space<vmem>>, %arg3: memref<1x128xf32, #tpu.memory_space<vmem>>, %arg4: memref<16x128xf32, #tpu.memory_space<vmem>>) attributes {dimension_semantics = [#tpu.dimension_semantics<arbitrary>], iteration_bounds = array<i64: 1>, scalar_prefetch = 0 : i64, scratch_operands = 0 : i64, tpu.core_type = #tpu.core_type<tc>, window_params = [{pipeline_mode = #tpu.pipeline_mode<synchronous>, transform_indices = @transform_0, window_bounds = array<i64: 16, 128>}, {pipeline_mode = #tpu.pipeline_mode<synchronous>, transform_indices = @transform_1, window_bounds = array<i64: 128, 128>}, {pipeline_mode = #tpu.pipeline_mode<synchronous>, transform_indices = @transform_2, window_bounds = array<i64: 1, 128>}, {pipeline_mode = #tpu.pipeline_mode<synchronous>, transform_indices = @transform_3, window_bounds = array<i64: 16, 128>}]} {
    %c0 = arith.constant 0 : index
    %c0_0 = arith.constant 0 : index
    %0 = vector.load %arg1[%c0, %c0_0] : memref<16x128xf32, #tpu.memory_space<vmem>>, vector<16x128xf32>
    %c0_1 = arith.constant 0 : index
    %c0_2 = arith.constant 0 : index
    %1 = vector.load %arg2[%c0_1, %c0_2] : memref<128x128xf32, #tpu.memory_space<vmem>>, vector<128x128xf32>
    %cst = arith.constant dense<0.000000e+00> : vector<16x128xf32>
    %2 = tpu.matmul %0, %1, %cst {dimension_numbers = #tpu.dot_dimension_numbers<[1], [0], [0], [1], [0, 0, 1, 1], [], []>} : vector<16x128xf32>, vector<128x128xf32>, vector<16x128xf32> -> vector<16x128xf32>
    %c0_3 = arith.constant 0 : index
    %c0_4 = arith.constant 0 : index
    %3 = vector.load %arg3[%c0_3, %c0_4] : memref<1x128xf32, #tpu.memory_space<vmem>>, vector<1x128xf32>
    %4 = vector.broadcast %3 : vector<1x128xf32> to vector<16x128xf32>
    %5 = arith.addf %2, %4 : vector<16x128xf32>
    %c0_5 = arith.constant 0 : index
    %c0_6 = arith.constant 0 : index
    %6 = vector.load %arg4[%c0_5, %c0_6] : memref<16x128xf32, #tpu.memory_space<vmem>>, vector<16x128xf32>
    tpu.vector_store %arg4[%c0_5, %c0_6], %5 {strides = array<i32>} : memref<16x128xf32, #tpu.memory_space<vmem>>, vector<16x128xf32>,
    return
  }
  func.func @transform_0(%arg0: i32) -> (i32, i32) {
    %c0_i32 = arith.constant 0 : i32
    %c0_i32_0 = arith.constant 0 : i32
    %c0_i32_1 = arith.constant 0 : i32
    return %c0_i32, %c0_i32_0 : i32, i32
  }
  func.func @transform_1(%arg0: i32) -> (i32, i32) {
    %c0_i32 = arith.constant 0 : i32
    %c0_i32_0 = arith.constant 0 : i32
    %c0_i32_1 = arith.constant 0 : i32
    return %c0_i32, %c0_i32_0 : i32, i32
  }
  func.func @transform_2(%arg0: i32) -> (i32, i32) {
    %c0_i32 = arith.constant 0 : i32
    %c0_i32_0 = arith.constant 0 : i32
    %c0_i32_1 = arith.constant 0 : i32
    return %c0_i32, %c0_i32_0 : i32, i32
  }
  func.func @transform_3(%arg0: i32) -> (i32, i32) {
    %c0_i32 = arith.constant 0 : i32
    %c0_i32_0 = arith.constant 0 : i32
    %c0_i32_1 = arith.constant 0 : i32
    return %c0_i32, %c0_i32_0 : i32, i32
  }
}

module attributes {stable_mosaic.version = 11 : i64} {
  func.func @_capsule_kernel(%arg0: i32, %arg1: memref<8x2x32xf32, #tpu.memory_space<vmem>>, %arg2: memref<8x32x1024xf32, #tpu.memory_space<vmem>>, %arg3: memref<8x2x1024xf32, #tpu.memory_space<vmem>>) attributes {dimension_semantics = [#tpu.dimension_semantics<parallel>], iteration_bounds = array<i64: 4>, scalar_prefetch = 0 : i64, scratch_operands = 0 : i64, tpu.core_type = #tpu.core_type<tc>, window_params = [{transform_indices = @transform_0, window_bounds = array<i64: 8, 2, 32>}, {transform_indices = @transform_1, window_bounds = array<i64: 8, 32, 1024>}, {transform_indices = @transform_2, window_bounds = array<i64: 8, 2, 1024>}]} {
    %c0 = arith.constant 0 : index
    %c0_0 = arith.constant 0 : index
    %c0_1 = arith.constant 0 : index
    %0 = vector.load %arg1[%c0, %c0_0, %c0_1] : memref<8x2x32xf32, #tpu.memory_space<vmem>>, vector<1x2x32xf32>
    %1 = vector.shape_cast %0 : vector<1x2x32xf32> to vector<2x32xf32>
    %c0_2 = arith.constant 0 : index
    %c0_3 = arith.constant 0 : index
    %c0_4 = arith.constant 0 : index
    %2 = vector.load %arg2[%c0_2, %c0_3, %c0_4] : memref<8x32x1024xf32, #tpu.memory_space<vmem>>, vector<1x32x1024xf32>
    %3 = vector.shape_cast %2 : vector<1x32x1024xf32> to vector<32x1024xf32>
    %cst = arith.constant dense<0.000000e+00> : vector<2x1024xf32>
    %4 = tpu.matmul %1, %3, %cst {dimension_numbers = #tpu.dot_dimension_numbers<[1], [0], [0], [1], [0, 0, 1, 1], [], []>} : vector<2x32xf32>, vector<32x1024xf32>, vector<2x1024xf32> -> vector<2x1024xf32>
    %c0_5 = arith.constant 0 : index
    %c0_6 = arith.constant 0 : index
    %c0_7 = arith.constant 0 : index
    %5 = vector.load %arg3[%c0_5, %c0_6, %c0_7] : memref<8x2x1024xf32, #tpu.memory_space<vmem>>, vector<1x2x1024xf32>
    %6 = vector.shape_cast %5 : vector<1x2x1024xf32> to vector<2x1024xf32>
    %7 = vector.shape_cast %4 : vector<2x1024xf32> to vector<1x2x1024xf32>
    tpu.vector_store %arg3[%c0_5, %c0_6, %c0_7], %7 {strides = array<i32>} : memref<8x2x1024xf32, #tpu.memory_space<vmem>>, vector<1x2x1024xf32>,
    %c1 = arith.constant 1 : index
    %c0_8 = arith.constant 0 : index
    %c0_9 = arith.constant 0 : index
    %8 = vector.load %arg1[%c1, %c0_8, %c0_9] : memref<8x2x32xf32, #tpu.memory_space<vmem>>, vector<1x2x32xf32>
    %9 = vector.shape_cast %8 : vector<1x2x32xf32> to vector<2x32xf32>
    %c1_10 = arith.constant 1 : index
    %c0_11 = arith.constant 0 : index
    %c0_12 = arith.constant 0 : index
    %10 = vector.load %arg2[%c1_10, %c0_11, %c0_12] : memref<8x32x1024xf32, #tpu.memory_space<vmem>>, vector<1x32x1024xf32>
    %11 = vector.shape_cast %10 : vector<1x32x1024xf32> to vector<32x1024xf32>
    %cst_13 = arith.constant dense<0.000000e+00> : vector<2x1024xf32>
    %12 = tpu.matmul %9, %11, %cst_13 {dimension_numbers = #tpu.dot_dimension_numbers<[1], [0], [0], [1], [0, 0, 1, 1], [], []>} : vector<2x32xf32>, vector<32x1024xf32>, vector<2x1024xf32> -> vector<2x1024xf32>
    %c1_14 = arith.constant 1 : index
    %c0_15 = arith.constant 0 : index
    %c0_16 = arith.constant 0 : index
    %13 = vector.load %arg3[%c1_14, %c0_15, %c0_16] : memref<8x2x1024xf32, #tpu.memory_space<vmem>>, vector<1x2x1024xf32>
    %14 = vector.shape_cast %13 : vector<1x2x1024xf32> to vector<2x1024xf32>
    %15 = vector.shape_cast %12 : vector<2x1024xf32> to vector<1x2x1024xf32>
    tpu.vector_store %arg3[%c1_14, %c0_15, %c0_16], %15 {strides = array<i32>} : memref<8x2x1024xf32, #tpu.memory_space<vmem>>, vector<1x2x1024xf32>,
    %c2 = arith.constant 2 : index
    %c0_17 = arith.constant 0 : index
    %c0_18 = arith.constant 0 : index
    %16 = vector.load %arg1[%c2, %c0_17, %c0_18] : memref<8x2x32xf32, #tpu.memory_space<vmem>>, vector<1x2x32xf32>
    %17 = vector.shape_cast %16 : vector<1x2x32xf32> to vector<2x32xf32>
    %c2_19 = arith.constant 2 : index
    %c0_20 = arith.constant 0 : index
    %c0_21 = arith.constant 0 : index
    %18 = vector.load %arg2[%c2_19, %c0_20, %c0_21] : memref<8x32x1024xf32, #tpu.memory_space<vmem>>, vector<1x32x1024xf32>
    %19 = vector.shape_cast %18 : vector<1x32x1024xf32> to vector<32x1024xf32>
    %cst_22 = arith.constant dense<0.000000e+00> : vector<2x1024xf32>
    %20 = tpu.matmul %17, %19, %cst_22 {dimension_numbers = #tpu.dot_dimension_numbers<[1], [0], [0], [1], [0, 0, 1, 1], [], []>} : vector<2x32xf32>, vector<32x1024xf32>, vector<2x1024xf32> -> vector<2x1024xf32>
    %c2_23 = arith.constant 2 : index
    %c0_24 = arith.constant 0 : index
    %c0_25 = arith.constant 0 : index
    %21 = vector.load %arg3[%c2_23, %c0_24, %c0_25] : memref<8x2x1024xf32, #tpu.memory_space<vmem>>, vector<1x2x1024xf32>
    %22 = vector.shape_cast %21 : vector<1x2x1024xf32> to vector<2x1024xf32>
    %23 = vector.shape_cast %20 : vector<2x1024xf32> to vector<1x2x1024xf32>
    tpu.vector_store %arg3[%c2_23, %c0_24, %c0_25], %23 {strides = array<i32>} : memref<8x2x1024xf32, #tpu.memory_space<vmem>>, vector<1x2x1024xf32>,
    %c3 = arith.constant 3 : index
    %c0_26 = arith.constant 0 : index
    %c0_27 = arith.constant 0 : index
    %24 = vector.load %arg1[%c3, %c0_26, %c0_27] : memref<8x2x32xf32, #tpu.memory_space<vmem>>, vector<1x2x32xf32>
    %25 = vector.shape_cast %24 : vector<1x2x32xf32> to vector<2x32xf32>
    %c3_28 = arith.constant 3 : index
    %c0_29 = arith.constant 0 : index
    %c0_30 = arith.constant 0 : index
    %26 = vector.load %arg2[%c3_28, %c0_29, %c0_30] : memref<8x32x1024xf32, #tpu.memory_space<vmem>>, vector<1x32x1024xf32>
    %27 = vector.shape_cast %26 : vector<1x32x1024xf32> to vector<32x1024xf32>
    %cst_31 = arith.constant dense<0.000000e+00> : vector<2x1024xf32>
    %28 = tpu.matmul %25, %27, %cst_31 {dimension_numbers = #tpu.dot_dimension_numbers<[1], [0], [0], [1], [0, 0, 1, 1], [], []>} : vector<2x32xf32>, vector<32x1024xf32>, vector<2x1024xf32> -> vector<2x1024xf32>
    %c3_32 = arith.constant 3 : index
    %c0_33 = arith.constant 0 : index
    %c0_34 = arith.constant 0 : index
    %29 = vector.load %arg3[%c3_32, %c0_33, %c0_34] : memref<8x2x1024xf32, #tpu.memory_space<vmem>>, vector<1x2x1024xf32>
    %30 = vector.shape_cast %29 : vector<1x2x1024xf32> to vector<2x1024xf32>
    %31 = vector.shape_cast %28 : vector<2x1024xf32> to vector<1x2x1024xf32>
    tpu.vector_store %arg3[%c3_32, %c0_33, %c0_34], %31 {strides = array<i32>} : memref<8x2x1024xf32, #tpu.memory_space<vmem>>, vector<1x2x1024xf32>,
    %c4 = arith.constant 4 : index
    %c0_35 = arith.constant 0 : index
    %c0_36 = arith.constant 0 : index
    %32 = vector.load %arg1[%c4, %c0_35, %c0_36] : memref<8x2x32xf32, #tpu.memory_space<vmem>>, vector<1x2x32xf32>
    %33 = vector.shape_cast %32 : vector<1x2x32xf32> to vector<2x32xf32>
    %c4_37 = arith.constant 4 : index
    %c0_38 = arith.constant 0 : index
    %c0_39 = arith.constant 0 : index
    %34 = vector.load %arg2[%c4_37, %c0_38, %c0_39] : memref<8x32x1024xf32, #tpu.memory_space<vmem>>, vector<1x32x1024xf32>
    %35 = vector.shape_cast %34 : vector<1x32x1024xf32> to vector<32x1024xf32>
    %cst_40 = arith.constant dense<0.000000e+00> : vector<2x1024xf32>
    %36 = tpu.matmul %33, %35, %cst_40 {dimension_numbers = #tpu.dot_dimension_numbers<[1], [0], [0], [1], [0, 0, 1, 1], [], []>} : vector<2x32xf32>, vector<32x1024xf32>, vector<2x1024xf32> -> vector<2x1024xf32>
    %c4_41 = arith.constant 4 : index
    %c0_42 = arith.constant 0 : index
    %c0_43 = arith.constant 0 : index
    %37 = vector.load %arg3[%c4_41, %c0_42, %c0_43] : memref<8x2x1024xf32, #tpu.memory_space<vmem>>, vector<1x2x1024xf32>
    %38 = vector.shape_cast %37 : vector<1x2x1024xf32> to vector<2x1024xf32>
    %39 = vector.shape_cast %36 : vector<2x1024xf32> to vector<1x2x1024xf32>
    tpu.vector_store %arg3[%c4_41, %c0_42, %c0_43], %39 {strides = array<i32>} : memref<8x2x1024xf32, #tpu.memory_space<vmem>>, vector<1x2x1024xf32>,
    %c5 = arith.constant 5 : index
    %c0_44 = arith.constant 0 : index
    %c0_45 = arith.constant 0 : index
    %40 = vector.load %arg1[%c5, %c0_44, %c0_45] : memref<8x2x32xf32, #tpu.memory_space<vmem>>, vector<1x2x32xf32>
    %41 = vector.shape_cast %40 : vector<1x2x32xf32> to vector<2x32xf32>
    %c5_46 = arith.constant 5 : index
    %c0_47 = arith.constant 0 : index
    %c0_48 = arith.constant 0 : index
    %42 = vector.load %arg2[%c5_46, %c0_47, %c0_48] : memref<8x32x1024xf32, #tpu.memory_space<vmem>>, vector<1x32x1024xf32>
    %43 = vector.shape_cast %42 : vector<1x32x1024xf32> to vector<32x1024xf32>
    %cst_49 = arith.constant dense<0.000000e+00> : vector<2x1024xf32>
    %44 = tpu.matmul %41, %43, %cst_49 {dimension_numbers = #tpu.dot_dimension_numbers<[1], [0], [0], [1], [0, 0, 1, 1], [], []>} : vector<2x32xf32>, vector<32x1024xf32>, vector<2x1024xf32> -> vector<2x1024xf32>
    %c5_50 = arith.constant 5 : index
    %c0_51 = arith.constant 0 : index
    %c0_52 = arith.constant 0 : index
    %45 = vector.load %arg3[%c5_50, %c0_51, %c0_52] : memref<8x2x1024xf32, #tpu.memory_space<vmem>>, vector<1x2x1024xf32>
    %46 = vector.shape_cast %45 : vector<1x2x1024xf32> to vector<2x1024xf32>
    %47 = vector.shape_cast %44 : vector<2x1024xf32> to vector<1x2x1024xf32>
    tpu.vector_store %arg3[%c5_50, %c0_51, %c0_52], %47 {strides = array<i32>} : memref<8x2x1024xf32, #tpu.memory_space<vmem>>, vector<1x2x1024xf32>,
    %c6 = arith.constant 6 : index
    %c0_53 = arith.constant 0 : index
    %c0_54 = arith.constant 0 : index
    %48 = vector.load %arg1[%c6, %c0_53, %c0_54] : memref<8x2x32xf32, #tpu.memory_space<vmem>>, vector<1x2x32xf32>
    %49 = vector.shape_cast %48 : vector<1x2x32xf32> to vector<2x32xf32>
    %c6_55 = arith.constant 6 : index
    %c0_56 = arith.constant 0 : index
    %c0_57 = arith.constant 0 : index
    %50 = vector.load %arg2[%c6_55, %c0_56, %c0_57] : memref<8x32x1024xf32, #tpu.memory_space<vmem>>, vector<1x32x1024xf32>
    %51 = vector.shape_cast %50 : vector<1x32x1024xf32> to vector<32x1024xf32>
    %cst_58 = arith.constant dense<0.000000e+00> : vector<2x1024xf32>
    %52 = tpu.matmul %49, %51, %cst_58 {dimension_numbers = #tpu.dot_dimension_numbers<[1], [0], [0], [1], [0, 0, 1, 1], [], []>} : vector<2x32xf32>, vector<32x1024xf32>, vector<2x1024xf32> -> vector<2x1024xf32>
    %c6_59 = arith.constant 6 : index
    %c0_60 = arith.constant 0 : index
    %c0_61 = arith.constant 0 : index
    %53 = vector.load %arg3[%c6_59, %c0_60, %c0_61] : memref<8x2x1024xf32, #tpu.memory_space<vmem>>, vector<1x2x1024xf32>
    %54 = vector.shape_cast %53 : vector<1x2x1024xf32> to vector<2x1024xf32>
    %55 = vector.shape_cast %52 : vector<2x1024xf32> to vector<1x2x1024xf32>
    tpu.vector_store %arg3[%c6_59, %c0_60, %c0_61], %55 {strides = array<i32>} : memref<8x2x1024xf32, #tpu.memory_space<vmem>>, vector<1x2x1024xf32>,
    %c7 = arith.constant 7 : index
    %c0_62 = arith.constant 0 : index
    %c0_63 = arith.constant 0 : index
    %56 = vector.load %arg1[%c7, %c0_62, %c0_63] : memref<8x2x32xf32, #tpu.memory_space<vmem>>, vector<1x2x32xf32>
    %57 = vector.shape_cast %56 : vector<1x2x32xf32> to vector<2x32xf32>
    %c7_64 = arith.constant 7 : index
    %c0_65 = arith.constant 0 : index
    %c0_66 = arith.constant 0 : index
    %58 = vector.load %arg2[%c7_64, %c0_65, %c0_66] : memref<8x32x1024xf32, #tpu.memory_space<vmem>>, vector<1x32x1024xf32>
    %59 = vector.shape_cast %58 : vector<1x32x1024xf32> to vector<32x1024xf32>
    %cst_67 = arith.constant dense<0.000000e+00> : vector<2x1024xf32>
    %60 = tpu.matmul %57, %59, %cst_67 {dimension_numbers = #tpu.dot_dimension_numbers<[1], [0], [0], [1], [0, 0, 1, 1], [], []>} : vector<2x32xf32>, vector<32x1024xf32>, vector<2x1024xf32> -> vector<2x1024xf32>
    %c7_68 = arith.constant 7 : index
    %c0_69 = arith.constant 0 : index
    %c0_70 = arith.constant 0 : index
    %61 = vector.load %arg3[%c7_68, %c0_69, %c0_70] : memref<8x2x1024xf32, #tpu.memory_space<vmem>>, vector<1x2x1024xf32>
    %62 = vector.shape_cast %61 : vector<1x2x1024xf32> to vector<2x1024xf32>
    %63 = vector.shape_cast %60 : vector<2x1024xf32> to vector<1x2x1024xf32>
    tpu.vector_store %arg3[%c7_68, %c0_69, %c0_70], %63 {strides = array<i32>} : memref<8x2x1024xf32, #tpu.memory_space<vmem>>, vector<1x2x1024xf32>,
    return
  }
  func.func @transform_0(%arg0: i32) -> (i32, i32, i32) {
    %c0_i32 = arith.constant 0 : i32
    %c0_i32_0 = arith.constant 0 : i32
    %c0_i32_1 = arith.constant 0 : i32
    return %arg0, %c0_i32, %c0_i32_0 : i32, i32, i32
  }
  func.func @transform_1(%arg0: i32) -> (i32, i32, i32) {
    %c0_i32 = arith.constant 0 : i32
    %c0_i32_0 = arith.constant 0 : i32
    %c0_i32_1 = arith.constant 0 : i32
    return %arg0, %c0_i32, %c0_i32_0 : i32, i32, i32
  }
  func.func @transform_2(%arg0: i32) -> (i32, i32, i32) {
    %c0_i32 = arith.constant 0 : i32
    %c0_i32_0 = arith.constant 0 : i32
    %c0_i32_1 = arith.constant 0 : i32
    return %arg0, %c0_i32, %c0_i32_0 : i32, i32, i32
  }
}

module attributes {stable_mosaic.version = 11 : i64} {
  func.func @_routing_kernel(%arg0: i32, %arg1: memref<1x32x8x128xf32, #tpu.memory_space<vmem>>, %arg2: memref<1x8x128xf32, #tpu.memory_space<vmem>>) attributes {dimension_semantics = [#tpu.dimension_semantics<parallel>], iteration_bounds = array<i64: 2>, scalar_prefetch = 0 : i64, scratch_operands = 0 : i64, tpu.core_type = #tpu.core_type<tc>, window_params = [{transform_indices = @transform_0, window_bounds = array<i64: 1, 32, 8, 128>}, {transform_indices = @transform_1, window_bounds = array<i64: 1, 8, 128>}]} {
    %c0 = arith.constant 0 : index
    %c0_0 = arith.constant 0 : index
    %c0_1 = arith.constant 0 : index
    %c0_2 = arith.constant 0 : index
    %0 = vector.load %arg1[%c0, %c0_0, %c0_1, %c0_2] : memref<1x32x8x128xf32, #tpu.memory_space<vmem>>, vector<1x32x8x128xf32>
    %1 = vector.shape_cast %0 : vector<1x32x8x128xf32> to vector<32x8x128xf32>
    %cst = arith.constant 0.000000e+00 : f32
    %2 = vector.broadcast %cst : f32 to vector<32x8x128xf32>
    %cst_3 = arith.constant dense<0xFF800000> : vector<32x128xf32>
    %3 = vector.multi_reduction <maximumf>, %2, %cst_3 [1] : vector<32x8x128xf32> to vector<32x128xf32>
    %4 = vector.shape_cast %3 : vector<32x128xf32> to vector<32x1x128xf32>
    %5 = vector.broadcast %4 : vector<32x1x128xf32> to vector<32x8x128xf32>
    %6 = arith.subf %2, %5 : vector<32x8x128xf32>
    %7 = math.exp %6 : vector<32x8x128xf32>
    %cst_4 = arith.constant dense<0.000000e+00> : vector<32x128xf32>
    %8 = vector.multi_reduction <add>, %7, %cst_4 [1] : vector<32x8x128xf32> to vector<32x128xf32>
    %9 = vector.shape_cast %8 : vector<32x128xf32> to vector<32x1x128xf32>
    %10 = vector.broadcast %9 : vector<32x1x128xf32> to vector<32x8x128xf32>
    %11 = arith.divf %7, %10 : vector<32x8x128xf32>
    %12 = arith.mulf %11, %1 : vector<32x8x128xf32>
    %cst_5 = arith.constant dense<0.000000e+00> : vector<8x128xf32>
    %13 = vector.multi_reduction <add>, %12, %cst_5 [0] : vector<32x8x128xf32> to vector<8x128xf32>
    %14 = vector.shape_cast %13 : vector<8x128xf32> to vector<1x8x128xf32>
    %15 = arith.mulf %14, %14 : vector<1x8x128xf32>
    %cst_6 = arith.constant dense<0.000000e+00> : vector<1x8xf32>
    %16 = vector.multi_reduction <add>, %15, %cst_6 [2] : vector<1x8x128xf32> to vector<1x8xf32>
    %17 = vector.shape_cast %16 : vector<1x8xf32> to vector<1x8x1xf32>
    %18 = math.sqrt %17 : vector<1x8x1xf32>
    %19 = arith.mulf %18, %18 : vector<1x8x1xf32>
    %cst_7 = arith.constant 1.000000e+00 : f32
    %20 = vector.broadcast %cst_7 : f32 to vector<1x8x1xf32>
    %21 = arith.addf %20, %19 : vector<1x8x1xf32>
    %22 = arith.divf %18, %21 : vector<1x8x1xf32>
    %23 = vector.broadcast %22 : vector<1x8x1xf32> to vector<1x8x128xf32>
    %24 = arith.mulf %23, %14 : vector<1x8x128xf32>
    %25 = vector.broadcast %24 : vector<1x8x128xf32> to vector<32x8x128xf32>
    %26 = arith.mulf %1, %25 : vector<32x8x128xf32>
    %cst_8 = arith.constant dense<0.000000e+00> : vector<32x8xf32>
    %27 = vector.multi_reduction <add>, %26, %cst_8 [2] : vector<32x8x128xf32> to vector<32x8xf32>
    %28 = vector.shape_cast %27 : vector<32x8xf32> to vector<32x8x1xf32>
    %29 = vector.broadcast %28 : vector<32x8x1xf32> to vector<32x8x128xf32>
    %30 = arith.addf %2, %29 : vector<32x8x128xf32>
    %cst_9 = arith.constant dense<0xFF800000> : vector<32x128xf32>
    %31 = vector.multi_reduction <maximumf>, %30, %cst_9 [1] : vector<32x8x128xf32> to vector<32x128xf32>
    %32 = vector.shape_cast %31 : vector<32x128xf32> to vector<32x1x128xf32>
    %33 = vector.broadcast %32 : vector<32x1x128xf32> to vector<32x8x128xf32>
    %34 = arith.subf %30, %33 : vector<32x8x128xf32>
    %35 = math.exp %34 : vector<32x8x128xf32>
    %cst_10 = arith.constant dense<0.000000e+00> : vector<32x128xf32>
    %36 = vector.multi_reduction <add>, %35, %cst_10 [1] : vector<32x8x128xf32> to vector<32x128xf32>
    %37 = vector.shape_cast %36 : vector<32x128xf32> to vector<32x1x128xf32>
    %38 = vector.broadcast %37 : vector<32x1x128xf32> to vector<32x8x128xf32>
    %39 = arith.divf %35, %38 : vector<32x8x128xf32>
    %40 = arith.mulf %39, %1 : vector<32x8x128xf32>
    %cst_11 = arith.constant dense<0.000000e+00> : vector<8x128xf32>
    %41 = vector.multi_reduction <add>, %40, %cst_11 [0] : vector<32x8x128xf32> to vector<8x128xf32>
    %42 = vector.shape_cast %41 : vector<8x128xf32> to vector<1x8x128xf32>
    %43 = arith.mulf %42, %42 : vector<1x8x128xf32>
    %cst_12 = arith.constant dense<0.000000e+00> : vector<1x8xf32>
    %44 = vector.multi_reduction <add>, %43, %cst_12 [2] : vector<1x8x128xf32> to vector<1x8xf32>
    %45 = vector.shape_cast %44 : vector<1x8xf32> to vector<1x8x1xf32>
    %46 = math.sqrt %45 : vector<1x8x1xf32>
    %47 = arith.mulf %46, %46 : vector<1x8x1xf32>
    %cst_13 = arith.constant 1.000000e+00 : f32
    %48 = vector.broadcast %cst_13 : f32 to vector<1x8x1xf32>
    %49 = arith.addf %48, %47 : vector<1x8x1xf32>
    %50 = arith.divf %46, %49 : vector<1x8x1xf32>
    %51 = vector.broadcast %50 : vector<1x8x1xf32> to vector<1x8x128xf32>
    %52 = arith.mulf %51, %42 : vector<1x8x128xf32>
    %53 = vector.broadcast %52 : vector<1x8x128xf32> to vector<32x8x128xf32>
    %54 = arith.mulf %1, %53 : vector<32x8x128xf32>
    %cst_14 = arith.constant dense<0.000000e+00> : vector<32x8xf32>
    %55 = vector.multi_reduction <add>, %54, %cst_14 [2] : vector<32x8x128xf32> to vector<32x8xf32>
    %56 = vector.shape_cast %55 : vector<32x8xf32> to vector<32x8x1xf32>
    %57 = vector.broadcast %56 : vector<32x8x1xf32> to vector<32x8x128xf32>
    %58 = arith.addf %30, %57 : vector<32x8x128xf32>
    %cst_15 = arith.constant dense<0xFF800000> : vector<32x128xf32>
    %59 = vector.multi_reduction <maximumf>, %58, %cst_15 [1] : vector<32x8x128xf32> to vector<32x128xf32>
    %60 = vector.shape_cast %59 : vector<32x128xf32> to vector<32x1x128xf32>
    %61 = vector.broadcast %60 : vector<32x1x128xf32> to vector<32x8x128xf32>
    %62 = arith.subf %58, %61 : vector<32x8x128xf32>
    %63 = math.exp %62 : vector<32x8x128xf32>
    %cst_16 = arith.constant dense<0.000000e+00> : vector<32x128xf32>
    %64 = vector.multi_reduction <add>, %63, %cst_16 [1] : vector<32x8x128xf32> to vector<32x128xf32>
    %65 = vector.shape_cast %64 : vector<32x128xf32> to vector<32x1x128xf32>
    %66 = vector.broadcast %65 : vector<32x1x128xf32> to vector<32x8x128xf32>
    %67 = arith.divf %63, %66 : vector<32x8x128xf32>
    %68 = arith.mulf %67, %1 : vector<32x8x128xf32>
    %cst_17 = arith.constant dense<0.000000e+00> : vector<8x128xf32>
    %69 = vector.multi_reduction <add>, %68, %cst_17 [0] : vector<32x8x128xf32> to vector<8x128xf32>
    %70 = vector.shape_cast %69 : vector<8x128xf32> to vector<1x8x128xf32>
    %71 = arith.mulf %70, %70 : vector<1x8x128xf32>
    %cst_18 = arith.constant dense<0.000000e+00> : vector<1x8xf32>
    %72 = vector.multi_reduction <add>, %71, %cst_18 [2] : vector<1x8x128xf32> to vector<1x8xf32>
    %73 = vector.shape_cast %72 : vector<1x8xf32> to vector<1x8x1xf32>
    %74 = math.sqrt %73 : vector<1x8x1xf32>
    %75 = arith.mulf %74, %74 : vector<1x8x1xf32>
    %cst_19 = arith.constant 1.000000e+00 : f32
    %76 = vector.broadcast %cst_19 : f32 to vector<1x8x1xf32>
    %77 = arith.addf %76, %75 : vector<1x8x1xf32>
    %78 = arith.divf %74, %77 : vector<1x8x1xf32>
    %79 = vector.broadcast %78 : vector<1x8x1xf32> to vector<1x8x128xf32>
    %80 = arith.mulf %79, %70 : vector<1x8x128xf32>
    %c0_20 = arith.constant 0 : index
    %c0_21 = arith.constant 0 : index
    %c0_22 = arith.constant 0 : index
    %81 = vector.load %arg2[%c0_20, %c0_21, %c0_22] : memref<1x8x128xf32, #tpu.memory_space<vmem>>, vector<1x8x128xf32>
    tpu.vector_store %arg2[%c0_20, %c0_21, %c0_22], %80 {strides = array<i32>} : memref<1x8x128xf32, #tpu.memory_space<vmem>>, vector<1x8x128xf32>,
    return
  }
  func.func @transform_0(%arg0: i32) -> (i32, i32, i32, i32) {
    %c0_i32 = arith.constant 0 : i32
    %c0_i32_0 = arith.constant 0 : i32
    %c0_i32_1 = arith.constant 0 : i32
    %c0_i32_2 = arith.constant 0 : i32
    return %arg0, %c0_i32, %c0_i32_0, %c0_i32_1 : i32, i32, i32, i32
  }
  func.func @transform_1(%arg0: i32) -> (i32, i32, i32) {
    %c0_i32 = arith.constant 0 : i32
    %c0_i32_0 = arith.constant 0 : i32
    %c0_i32_1 = arith.constant 0 : i32
    return %arg0, %c0_i32, %c0_i32_0 : i32, i32, i32
  }
}

module attributes {stable_mosaic.version = 11 : i64} {
  func.func @_linear_kernel(%arg0: i32, %arg1: memref<16x128xf32, #tpu.memory_space<vmem>>, %arg2: memref<128x128xf32, #tpu.memory_space<vmem>>, %arg3: memref<1x128xf32, #tpu.memory_space<vmem>>, %arg4: memref<16x128xf32, #tpu.memory_space<vmem>>) attributes {dimension_semantics = [#tpu.dimension_semantics<arbitrary>], iteration_bounds = array<i64: 1>, scalar_prefetch = 0 : i64, scratch_operands = 0 : i64, tpu.core_type = #tpu.core_type<tc>, window_params = [{pipeline_mode = #tpu.pipeline_mode<synchronous>, transform_indices = @transform_0, window_bounds = array<i64: 16, 128>}, {pipeline_mode = #tpu.pipeline_mode<synchronous>, transform_indices = @transform_1, window_bounds = array<i64: 128, 128>}, {pipeline_mode = #tpu.pipeline_mode<synchronous>, transform_indices = @transform_2, window_bounds = array<i64: 1, 128>}, {pipeline_mode = #tpu.pipeline_mode<synchronous>, transform_indices = @transform_3, window_bounds = array<i64: 16, 128>}]} {
    %c0 = arith.constant 0 : index
    %c0_0 = arith.constant 0 : index
    %0 = vector.load %arg1[%c0, %c0_0] : memref<16x128xf32, #tpu.memory_space<vmem>>, vector<16x128xf32>
    %c0_1 = arith.constant 0 : index
    %c0_2 = arith.constant 0 : index
    %1 = vector.load %arg2[%c0_1, %c0_2] : memref<128x128xf32, #tpu.memory_space<vmem>>, vector<128x128xf32>
    %cst = arith.constant dense<0.000000e+00> : vector<16x128xf32>
    %2 = tpu.matmul %0, %1, %cst {dimension_numbers = #tpu.dot_dimension_numbers<[1], [0], [0], [1], [0, 0, 1, 1], [], []>} : vector<16x128xf32>, vector<128x128xf32>, vector<16x128xf32> -> vector<16x128xf32>
    %c0_3 = arith.constant 0 : index
    %c0_4 = arith.constant 0 : index
    %3 = vector.load %arg3[%c0_3, %c0_4] : memref<1x128xf32, #tpu.memory_space<vmem>>, vector<1x128xf32>
    %4 = vector.broadcast %3 : vector<1x128xf32> to vector<16x128xf32>
    %5 = arith.addf %2, %4 : vector<16x128xf32>
    %c0_5 = arith.constant 0 : index
    %c0_6 = arith.constant 0 : index
    %6 = vector.load %arg4[%c0_5, %c0_6] : memref<16x128xf32, #tpu.memory_space<vmem>>, vector<16x128xf32>
    tpu.vector_store %arg4[%c0_5, %c0_6], %5 {strides = array<i32>} : memref<16x128xf32, #tpu.memory_space<vmem>>, vector<16x128xf32>,
    return
  }
  func.func @transform_0(%arg0: i32) -> (i32, i32) {
    %c0_i32 = arith.constant 0 : i32
    %c0_i32_0 = arith.constant 0 : i32
    %c0_i32_1 = arith.constant 0 : i32
    return %c0_i32, %c0_i32_0 : i32, i32
  }
  func.func @transform_1(%arg0: i32) -> (i32, i32) {
    %c0_i32 = arith.constant 0 : i32
    %c0_i32_0 = arith.constant 0 : i32
    %c0_i32_1 = arith.constant 0 : i32
    return %c0_i32, %c0_i32_0 : i32, i32
  }
  func.func @transform_2(%arg0: i32) -> (i32, i32) {
    %c0_i32 = arith.constant 0 : i32
    %c0_i32_0 = arith.constant 0 : i32
    %c0_i32_1 = arith.constant 0 : i32
    return %c0_i32, %c0_i32_0 : i32, i32
  }
  func.func @transform_3(%arg0: i32) -> (i32, i32) {
    %c0_i32 = arith.constant 0 : i32
    %c0_i32_0 = arith.constant 0 : i32
    %c0_i32_1 = arith.constant 0 : i32
    return %c0_i32, %c0_i32_0 : i32, i32
  }
}

</mosaic_0001>

<llo_original>
// kernel: a_call__.4
$region0: #{a_call__.4}
  #allocation0 [shape = 'u32[]', space=smem, size = 0x4, offset = 0x4, fixed_abs, tag = 'smem constant byte address 0x4 - core index']
  #allocation1 [shape = 'u32[144,128]{1,0:T(1,128)}', space=vmem, size = 0x12000, scoped, tag = 'internal scratch']
  %s0 = inlined_call_operand.hbm [shape: f32[16,128], index: 0, kind: input, shape index: {}]
  %s1 = inlined_call_operand.hbm [shape: f32[128,128], index: 1, kind: input, shape index: {}]
  %s2 = inlined_call_operand.hbm [shape: f32[1,128], index: 2, kind: input, shape index: {}]
  %s3 = inlined_call_operand.vmem [shape: f32[16,128], index: 3, kind: output, shape index: {}]
  %s4 = sld [smem:[#allocation0]]
  $region34: #{a_call__.4} parent=0
    _
  %s6 = ssub.s32 1, %s4
  %s7 = scalar_select 0, %s6, %s4
  $region1: #{a_call__.4} parent=0
    #allocation2 [shape = 'u8[8192]{0}', space=vmem, size = 0x2000, scoped, tag = 'input window, operand 0, single buffered']
    #allocation3 [shape = 's32[1]{0}', space=sflag, size = 0x4, scoped, tag = 'scoped memory for a_call__.4']
    #allocation4 [shape = 'u8[65536]{0}', space=vmem, size = 0x10000, scoped, tag = 'input window, operand 1, single buffered']
    #allocation5 [shape = 's32[1]{0}', space=sflag, size = 0x4, scoped, tag = 'scoped memory for a_call__.4']
    #allocation6 [shape = 'u8[512]{0}', space=vmem, size = 0x400, scoped, tag = 'input window, operand 2, single buffered']
    %8 = vsyncpa [#allocation3], 0
    %9 = vsyncpa [#allocation5], 0
    // Predicated region
    $region2: #{a_call__.4} parent=1 // pred_check
      _
    $region3: #{a_call__.4} parent=1 // pred_check_branch
      %11 = sbr.rel (0) target = $region5
    $region4: #{a_call__.4} parent=1 // pred_region
      %s13 = ssub.s32 256, 256
      %14 = vsyncadd [#allocation3], %s13
      %s15 = sshll.u32 [#allocation2], 4
      %s16 = int_to_ptr.vmem [resolvable:$true] %s15
      %21 = dma.hbm_to_vmem [thread:$0]  %s0, 256, %s16, [#allocation3], 128, 128, 8
    $region5: #{a_call__.4} parent=1 // pred_fallthru
      _
    // Predicated region
    $region6: #{a_call__.4} parent=1 // pred_check
      _
    $region7: #{a_call__.4} parent=1 // pred_check_branch
      %23 = sbr.rel (0) target = $region9
    $region8: #{a_call__.4} parent=1 // pred_region
      %s25 = ssub.s32 2048, 2048
      %26 = vsyncadd [#allocation5], %s25
      %s27 = sshll.u32 [#allocation4], 4
      %s28 = int_to_ptr.vmem [resolvable:$true] %s27
      %33 = dma.hbm_to_vmem [thread:$0]  %s1, 2048, %s28, [#allocation5], 128, 128, 8
    $region9: #{a_call__.4} parent=1 // pred_fallthru
      _
    // Predicated region
    $region10: #{a_call__.4} parent=1 // pred_check
      _
    $region11: #{a_call__.4} parent=1 // pred_check_branch
      %35 = sbr.rel (0) target = $region13
    $region12: #{a_call__.4} parent=1 // pred_region
      %s37 = ssub.s32 16, 16
      %38 = vsyncadd [#allocation5], %s37
      %s40 = sshll.u32 [#allocation6], 4
      %s41 = int_to_ptr.vmem [resolvable:$true] %s40
      %43 = dma.hbm_to_vmem [thread:$0]  %s2, 16, %s41, [#allocation5]
    $region13: #{a_call__.4} parent=1 // pred_fallthru
      _
    // Predicated region
    $region14: #{a_call__.4} parent=1 // pred_check
      _
    $region15: #{a_call__.4} parent=1 // pred_check_branch
      %45 = sbr.rel (0) target = $region17
    $region16: #{a_call__.4} parent=1 // pred_region
      %46 = dma.done [#allocation3], 256
    $region17: #{a_call__.4} parent=1 // pred_fallthru
      _
    // Predicated region
    $region18: #{a_call__.4} parent=1 // pred_check
      _
    $region19: #{a_call__.4} parent=1 // pred_check_branch
      %48 = sbr.rel (0) target = $region21
    $region20: #{a_call__.4} parent=1 // pred_region
      %49 = dma.done [#allocation5], 2048
    $region21: #{a_call__.4} parent=1 // pred_fallthru
      _
    // Predicated region
    $region22: #{a_call__.4} parent=1 // pred_check
      _
    $region23: #{a_call__.4} parent=1 // pred_check_branch
      %51 = sbr.rel (0) target = $region25
    $region24: #{a_call__.4} parent=1 // pred_region
      %52 = dma.done [#allocation5], 16
    $region25: #{a_call__.4} parent=1 // pred_fallthru
      _
    %v53 = vld [vmem:[#allocation2] sm:$0xff]
    %v54 = vld [vmem:[#allocation2 + $0x8] sm:$0xff]
    %v55 = vld [vmem:[#allocation4] sm:$0xff]
    %v56 = vld [vmem:[#allocation4 + $0x8] sm:$0xff]
    %v57 = vld [vmem:[#allocation4 + $0x10] sm:$0xff]
    %v58 = vld [vmem:[#allocation4 + $0x18] sm:$0xff]
    %v59 = vld [vmem:[#allocation4 + $0x20] sm:$0xff]
    %v60 = vld [vmem:[#allocation4 + $0x28] sm:$0xff]
    %v61 = vld [vmem:[#allocation4 + $0x30] sm:$0xff]
    %v62 = vld [vmem:[#allocation4 + $0x38] sm:$0xff]
    %v63 = vld [vmem:[#allocation4 + $0x40] sm:$0xff]
    %v64 = vld [vmem:[#allocation4 + $0x48] sm:$0xff]
    %v65 = vld [vmem:[#allocation4 + $0x50] sm:$0xff]
    %v66 = vld [vmem:[#allocation4 + $0x58] sm:$0xff]
    %v67 = vld [vmem:[#allocation4 + $0x60] sm:$0xff]
    %v68 = vld [vmem:[#allocation4 + $0x68] sm:$0xff]
    %v69 = vld [vmem:[#allocation4 + $0x70] sm:$0xff]
    %v70 = vld [vmem:[#allocation4 + $0x78] sm:$0xff]
    %v71 = vld [vmem:[#allocation6] sm:$0x1]
    %v73 = vlaneseq
    %v74 = vshrl.u32 %v73, 7
    %v75 = vsub.s32 0, %v74
    %v76 = vrot.slane %v71, %v75
    %78 = vmatprep.subr.mxu0 0.0
    %79 = vmatpush1.msra.mxu0 %v70
    %80 = vmatprep.subr.mxu0 0.0
    %81 = vmatpush1.msra.mxu0 %v69
    %82 = vmatprep.subr.mxu0 0.0
    %83 = vmatpush1.msra.mxu0 %v68
    %84 = vmatprep.subr.mxu0 0.0
    %85 = vmatpush1.msra.mxu0 %v67
    %86 = vmatprep.subr.mxu0 0.0
    %87 = vmatpush1.msra.mxu0 %v66
    %88 = vmatprep.subr.mxu0 0.0
    %89 = vmatpush1.msra.mxu0 %v65
    %90 = vmatprep.subr.mxu0 0.0
    %91 = vmatpush1.msra.mxu0 %v64
    %92 = vmatprep.subr.mxu0 0.0
    %93 = vmatpush1.msra.mxu0 %v63
    %94 = vmatprep.subr.mxu0 0.0
    %95 = vmatpush1.msra.mxu0 %v62
    %96 = vmatprep.subr.mxu0 0.0
    %97 = vmatpush1.msra.mxu0 %v61
    %98 = vmatprep.subr.mxu0 0.0
    %99 = vmatpush1.msra.mxu0 %v60
    %100 = vmatprep.subr.mxu0 0.0
    %101 = vmatpush1.msra.mxu0 %v59
    %102 = vmatprep.subr.mxu0 0.0
    %103 = vmatpush1.msra.mxu0 %v58
    %104 = vmatprep.subr.mxu0 0.0
    %105 = vmatpush1.msra.mxu0 %v57
    %106 = vmatprep.subr.mxu0 0.0
    %107 = vmatpush1.msra.mxu0 %v56
    %108 = vmatprep.subr.mxu0 0.0
    %109 = vmatpush1.msra.mxu0 %v55
    %110 = vmatprep.subr.mxu0 0.0
    %111 = vmatpush2.msra.mxu0 0.0
    %112 = vmatprep.subr.mxu0 0.0
    %113 = vmatpush2.msra.mxu0 0.0
    %114 = vmatprep.subr.mxu0 0.0
    %115 = vmatpush2.msra.mxu0 0.0
    %116 = vmatprep.subr.mxu0 0.0
    %117 = vmatpush2.msra.mxu0 0.0
    %118 = vmatprep.subr.mxu0 0.0
    %119 = vmatpush2.msra.mxu0 0.0
    %120 = vmatprep.subr.mxu0 0.0
    %121 = vmatpush2.msra.mxu0 0.0
    %122 = vmatprep.subr.mxu0 0.0
    %123 = vmatpush2.msra.mxu0 0.0
    %124 = vmatprep.subr.mxu0 0.0
    %125 = vmatpush2.msra.mxu0 0.0
    %126 = vmatprep.subr.mxu0 0.0
    %127 = vmatpush2.msra.mxu0 0.0
    %128 = vmatprep.subr.mxu0 0.0
    %129 = vmatpush2.msra.mxu0 0.0
    %130 = vmatprep.subr.mxu0 0.0
    %131 = vmatpush2.msra.mxu0 0.0
    %132 = vmatprep.subr.mxu0 0.0
    %133 = vmatpush2.msra.mxu0 0.0
    %134 = vmatprep.subr.mxu0 0.0
    %135 = vmatpush2.msra.mxu0 0.0
    %136 = vmatprep.subr.mxu0 0.0
    %137 = vmatpush2.msra.mxu0 0.0
    %138 = vmatprep.subr.mxu0 0.0
    %139 = vmatpush2.msra.mxu0 0.0
    %140 = vmatprep.subr.mxu0 0.0
    %141 = vmatpush2.msra.mxu0 0.0
    %142 = vmatprep.mubr.f32.mxu0 0.0
    %143 = vmatmul.mubr.f32.gmra.mxu0 %v53
    %v144 = vpop.f32.mrf.mxu0
    %v145 = vadd.f32 %v76, %v144
    %v146 = vpop.f32.mrf.mxu0
    %147 = vmatprep.mubr.f32.mxu0 0.0
    %148 = vmatmul.mubr.f32.gmra.mxu0 %v54
    %v149 = vpop.f32.mrf.mxu0
    %v150 = vadd.f32 %v76, %v149
    %v151 = vpop.f32.mrf.mxu0
    %152 = vdwg.mxu0
    %153 = vst [vmem:[%s3] sm:$0xff] %v145
    %154 = vst [vmem:[%s3 + $0x8] sm:$0xff] %v150
    // Predicated region
    $region26: #{a_call__.4} parent=1 // pred_check
      _
    $region27: #{a_call__.4} parent=1 // pred_check_branch
      %156 = sbr.rel (0) target = $region29
    $region28: #{a_call__.4} parent=1 // pred_region
      _
    $region29: #{a_call__.4} parent=1 // pred_fallthru
      _
    // Predicated region
    $region30: #{a_call__.4} parent=1 // pred_check
      _
    $region31: #{a_call__.4} parent=1 // pred_check_branch
      %158 = sbr.rel (0) target = $region33
    $region32: #{a_call__.4} parent=1 // pred_region
      _
    $region33: #{a_call__.4} parent=1 // pred_fallthru
      _
    %159 = vsyncpa [#allocation3], 1
    %160 = vsyncpa [#allocation5], 1

// kernel: a_call__.7
$region0: #{a_call__.7}
  #allocation0 [shape = 'u32[]', space=smem, size = 0x4, offset = 0x4, fixed_abs, tag = 'smem constant byte address 0x4 - core index']
  #allocation1 [shape = 'u32[144,128]{1,0:T(1,128)}', space=vmem, size = 0x12000, scoped, tag = 'internal scratch']
  %s0 = inlined_call_operand.vmem [shape: f32[16,128], index: 0, kind: input, shape index: {}]
  %s1 = inlined_call_operand.vmem [shape: f32[128,128], index: 1, kind: input, shape index: {}]
  %s2 = inlined_call_operand.vmem [shape: f32[1,128], index: 2, kind: input, shape index: {}]
  %s3 = inlined_call_operand.hbm [shape: f32[16,128], index: 3, kind: output, shape index: {}]
  %s4 = sld [smem:[#allocation0]]
  $region22: #{a_call__.7} parent=0
    _
  %s6 = ssub.s32 1, %s4
  %s7 = scalar_select 0, %s6, %s4
  $region1: #{a_call__.7} parent=0
    #allocation2 [shape = 'u8[8192]{0}', space=vmem, size = 0x2000, scoped, tag = 'output window, operand 0, single buffered']
    #allocation3 [shape = 's32[1]{0}', space=sflag, size = 0x4, scoped, tag = 'scoped memory for a_call__.7']
    %8 = vsyncpa [#allocation3], 0
    // Predicated region
    $region2: #{a_call__.7} parent=1 // pred_check
      _
    $region3: #{a_call__.7} parent=1 // pred_check_branch
      %10 = sbr.rel (0) target = $region5
    $region4: #{a_call__.7} parent=1 // pred_region
      _
    $region5: #{a_call__.7} parent=1 // pred_fallthru
      _
    // Predicated region
    $region6: #{a_call__.7} parent=1 // pred_check
      _
    $region7: #{a_call__.7} parent=1 // pred_check_branch
      %12 = sbr.rel (0) target = $region9
    $region8: #{a_call__.7} parent=1 // pred_region
      _
    $region9: #{a_call__.7} parent=1 // pred_fallthru
      _
    // Predicated region
    $region10: #{a_call__.7} parent=1 // pred_check
      _
    $region11: #{a_call__.7} parent=1 // pred_check_branch
      %14 = sbr.rel (0) target = $region13
    $region12: #{a_call__.7} parent=1 // pred_region
      _
    $region13: #{a_call__.7} parent=1 // pred_fallthru
      _
    %v15 = vld [vmem:[%s0] sm:$0xff]
    %v16 = vld [vmem:[%s0 + $0x8] sm:$0xff]
    %v17 = vld [vmem:[%s1] sm:$0xff]
    %v18 = vld [vmem:[%s1 + $0x8] sm:$0xff]
    %v19 = vld [vmem:[%s1 + $0x10] sm:$0xff]
    %v20 = vld [vmem:[%s1 + $0x18] sm:$0xff]
    %v21 = vld [vmem:[%s1 + $0x20] sm:$0xff]
    %v22 = vld [vmem:[%s1 + $0x28] sm:$0xff]
    %v23 = vld [vmem:[%s1 + $0x30] sm:$0xff]
    %v24 = vld [vmem:[%s1 + $0x38] sm:$0xff]
    %v25 = vld [vmem:[%s1 + $0x40] sm:$0xff]
    %v26 = vld [vmem:[%s1 + $0x48] sm:$0xff]
    %v27 = vld [vmem:[%s1 + $0x50] sm:$0xff]
    %v28 = vld [vmem:[%s1 + $0x58] sm:$0xff]
    %v29 = vld [vmem:[%s1 + $0x60] sm:$0xff]
    %v30 = vld [vmem:[%s1 + $0x68] sm:$0xff]
    %v31 = vld [vmem:[%s1 + $0x70] sm:$0xff]
    %v32 = vld [vmem:[%s1 + $0x78] sm:$0xff]
    %v33 = vld [vmem:[%s2] sm:$0x1]
    %v35 = vlaneseq
    %v36 = vshrl.u32 %v35, 7
    %v37 = vsub.s32 0, %v36
    %v38 = vrot.slane %v33, %v37
    %40 = vmatprep.subr.mxu0 0.0
    %41 = vmatpush1.msra.mxu0 %v32
    %42 = vmatprep.subr.mxu0 0.0
    %43 = vmatpush1.msra.mxu0 %v31
    %44 = vmatprep.subr.mxu0 0.0
    %45 = vmatpush1.msra.mxu0 %v30
    %46 = vmatprep.subr.mxu0 0.0
    %47 = vmatpush1.msra.mxu0 %v29
    %48 = vmatprep.subr.mxu0 0.0
    %49 = vmatpush1.msra.mxu0 %v28
    %50 = vmatprep.subr.mxu0 0.0
    %51 = vmatpush1.msra.mxu0 %v27
    %52 = vmatprep.subr.mxu0 0.0
    %53 = vmatpush1.msra.mxu0 %v26
    %54 = vmatprep.subr.mxu0 0.0
    %55 = vmatpush1.msra.mxu0 %v25
    %56 = vmatprep.subr.mxu0 0.0
    %57 = vmatpush1.msra.mxu0 %v24
    %58 = vmatprep.subr.mxu0 0.0
    %59 = vmatpush1.msra.mxu0 %v23
    %60 = vmatprep.subr.mxu0 0.0
    %61 = vmatpush1.msra.mxu0 %v22
    %62 = vmatprep.subr.mxu0 0.0
    %63 = vmatpush1.msra.mxu0 %v21
    %64 = vmatprep.subr.mxu0 0.0
    %65 = vmatpush1.msra.mxu0 %v20
    %66 = vmatprep.subr.mxu0 0.0
    %67 = vmatpush1.msra.mxu0 %v19
    %68 = vmatprep.subr.mxu0 0.0
    %69 = vmatpush1.msra.mxu0 %v18
    %70 = vmatprep.subr.mxu0 0.0
    %71 = vmatpush1.msra.mxu0 %v17
    %72 = vmatprep.subr.mxu0 0.0
    %73 = vmatpush2.msra.mxu0 0.0
    %74 = vmatprep.subr.mxu0 0.0
    %75 = vmatpush2.msra.mxu0 0.0
    %76 = vmatprep.subr.mxu0 0.0
    %77 = vmatpush2.msra.mxu0 0.0
    %78 = vmatprep.subr.mxu0 0.0
    %79 = vmatpush2.msra.mxu0 0.0
    %80 = vmatprep.subr.mxu0 0.0
    %81 = vmatpush2.msra.mxu0 0.0
    %82 = vmatprep.subr.mxu0 0.0
    %83 = vmatpush2.msra.mxu0 0.0
    %84 = vmatprep.subr.mxu0 0.0
    %85 = vmatpush2.msra.mxu0 0.0
    %86 = vmatprep.subr.mxu0 0.0
    %87 = vmatpush2.msra.mxu0 0.0
    %88 = vmatprep.subr.mxu0 0.0
    %89 = vmatpush2.msra.mxu0 0.0
    %90 = vmatprep.subr.mxu0 0.0
    %91 = vmatpush2.msra.mxu0 0.0
    %92 = vmatprep.subr.mxu0 0.0
    %93 = vmatpush2.msra.mxu0 0.0
    %94 = vmatprep.subr.mxu0 0.0
    %95 = vmatpush2.msra.mxu0 0.0
    %96 = vmatprep.subr.mxu0 0.0
    %97 = vmatpush2.msra.mxu0 0.0
    %98 = vmatprep.subr.mxu0 0.0
    %99 = vmatpush2.msra.mxu0 0.0
    %100 = vmatprep.subr.mxu0 0.0
    %101 = vmatpush2.msra.mxu0 0.0
    %102 = vmatprep.subr.mxu0 0.0
    %103 = vmatpush2.msra.mxu0 0.0
    %104 = vmatprep.mubr.f32.mxu0 0.0
    %105 = vmatmul.mubr.f32.gmra.mxu0 %v15
    %v106 = vpop.f32.mrf.mxu0
    %v107 = vadd.f32 %v38, %v106
    %v108 = vpop.f32.mrf.mxu0
    %109 = vmatprep.mubr.f32.mxu0 0.0
    %110 = vmatmul.mubr.f32.gmra.mxu0 %v16
    %v111 = vpop.f32.mrf.mxu0
    %v112 = vadd.f32 %v38, %v111
    %v113 = vpop.f32.mrf.mxu0
    %114 = vdwg.mxu0
    %115 = vst [vmem:[#allocation2] sm:$0xff] %v107
    %116 = vst [vmem:[#allocation2 + $0x8] sm:$0xff] %v112
    // Predicated region
    $region14: #{a_call__.7} parent=1 // pred_check
      _
    $region15: #{a_call__.7} parent=1 // pred_check_branch
      %118 = sbr.rel (0) target = $region17
    $region16: #{a_call__.7} parent=1 // pred_region
      %s120 = ssub.s32 256, 256
      %121 = vsyncadd [#allocation3], %s120
      %s122 = sshll.u32 [#allocation2], 4
      %s123 = int_to_ptr.vmem [resolvable:$true] %s122
      %128 = dma.vmem_to_hbm [thread:$0]  %s123, 256, %s3, [#allocation3], 128, 128, 8
    $region17: #{a_call__.7} parent=1 // pred_fallthru
      _
    // Predicated region
    $region18: #{a_call__.7} parent=1 // pred_check
      _
    $region19: #{a_call__.7} parent=1 // pred_check_branch
      %130 = sbr.rel (0) target = $region21
    $region20: #{a_call__.7} parent=1 // pred_region
      %131 = dma.done [#allocation3], 256
    $region21: #{a_call__.7} parent=1 // pred_fallthru
      _
    %132 = vsyncpa [#allocation3], 1

// kernel: a_call__.6
$region0: #{a_call__.6}
  #allocation0 [shape = 'u32[]', space=smem, size = 0x4, offset = 0x4, fixed_abs, tag = 'smem constant byte address 0x4 - core index']
  #allocation1 [shape = 'u32[144,128]{1,0:T(1,128)}', space=vmem, size = 0x12000, scoped, tag = 'internal scratch']
  %s0 = inlined_call_operand.vmem [shape: f32[2,32,8,128], index: 0, kind: input, shape index: {}]
  %s1 = inlined_call_operand.vmem [shape: f32[2,8,128], index: 1, kind: output, shape index: {}]
  %s2 = sld [smem:[#allocation0]]
  $region37: #{a_call__.6} parent=0
    _
  %s4 = ssub.s32 1, %s2
  %s5 = scalar_select 0, %s4, %s2
  loop: start=0, step=1, limit=4
  $region2: #{a_call__.6} parent=0 // loop_pre_header
    _
  $region3: #{a_call__.6} parent=0 // loop_header
    %s7 = sphi 0, %s11
    %p8 = scmp.ge.s32.totalorder %s7, 4
    %s17 = sphi 0, %s19
    %s20 = sphi 0, %s17
    %s21 = sphi 0, %s20
    %s37 = sphi 0, %s21
    %s43 = sphi 0, %s45
    %s46 = sphi 0, %s43
    %s47 = sphi 0, %s46
    %s63 = sphi 0, %s47
  $region4: #{a_call__.6} parent=0 // loop_header_branch
    %10 = sbr.rel (%p8) target = $region8
  $region5: #{a_call__.6} parent=0 // loop_body
    %s12 = ssub.s32 %s7, 1
    %s13 = ssub.s32 %s7, 2
    %s14 = sadd.s32 %s7, 1
    %s15 = ssub.s32 %s7, %s14
    %p16 = scmp.eq.s32.totalorder %s15, 0
    %s18 = sadd.s32 %s17, 1
    %s19 = scalar_select %p16, %s17, %s18
    %p22 = pneg %p16
    %p23 = scmp.eq.s32.totalorder %s7, 1
    %p24 = por %p22, %p23
    %p25 = scmp.ne.s32.totalorder %s17, %s20
    %p26 = scmp.eq.s32.totalorder %s7, 0
    %p27 = por %p25, %p26
    %p28 = scmp.ne.s32.totalorder %s17, %s20
    %p29 = scmp.eq.s32.totalorder %s12, 1
    %p30 = por %p28, %p29
    %p31 = scmp.ne.s32.totalorder %s20, %s21
    %p32 = scmp.eq.s32.totalorder %s12, 0
    %p33 = por %p31, %p32
    %p34 = scmp.ne.s32.totalorder %s20, %s21
    %p35 = scmp.eq.s32.totalorder %s13, 1
    %p36 = por %p34, %p35
    %p38 = scmp.ne.s32.totalorder %s21, %s37
    %p39 = scmp.eq.s32.totalorder %s13, 0
    %p40 = por %p38, %p39
    %s41 = ssub.s32 %s7, %s14
    %p42 = scmp.eq.s32.totalorder %s41, 0
    %s44 = sadd.s32 %s43, 1
    %s45 = scalar_select %p42, %s43, %s44
    %p48 = pneg %p42
    %p49 = scmp.eq.s32.totalorder %s7, 1
    %p50 = por %p48, %p49
    %p51 = scmp.ne.s32.totalorder %s43, %s46
    %p52 = scmp.eq.s32.totalorder %s7, 0
    %p53 = por %p51, %p52
    %p54 = scmp.ne.s32.totalorder %s43, %s46
    %p55 = scmp.eq.s32.totalorder %s12, 1
    %p56 = por %p54, %p55
    %p57 = scmp.ne.s32.totalorder %s46, %s47
    %p58 = scmp.eq.s32.totalorder %s12, 0
    %p59 = por %p57, %p58
    %p60 = scmp.ne.s32.totalorder %s46, %s47
    %p61 = scmp.eq.s32.totalorder %s13, 1
    %p62 = por %p60, %p61
    %p64 = scmp.ne.s32.totalorder %s47, %s63
    %p65 = scmp.eq.s32.totalorder %s13, 0
    %p66 = por %p64, %p65
    %p67 = scmp.le.s32.totalorder 1, %s7
    %p68 = scmp.lt.s32.totalorder %s7, 3
    %p69 = pnand %p67, %p68
    %p70 = pneg %p69
    // Predicated region
    $region9: #{a_call__.6} parent=5 // pred_check
      _
    $region10: #{a_call__.6} parent=5 // pred_check_branch
      %72 = sbr.rel (%p69) target = $region12
    $region11: #{a_call__.6} parent=5 // pred_region
      %s73 = ssub.s32 %s7, 1
    $region12: #{a_call__.6} parent=5 // pred_fallthru
      _
    %p74 = scmp.lt.s32.totalorder %s7, 2
    // Predicated region
    $region13: #{a_call__.6} parent=5 // pred_check
      %p75 = pneg %p74
    $region14: #{a_call__.6} parent=5 // pred_check_branch
      %77 = sbr.rel (%p75) target = $region16
    $region15: #{a_call__.6} parent=5 // pred_region
      // Predicated region
      $region17: #{a_call__.6} parent=15 // pred_check
        %p78 = pneg %p27
      $region18: #{a_call__.6} parent=15 // pred_check_branch
        %80 = sbr.rel (%p78) target = $region20
      $region19: #{a_call__.6} parent=15 // pred_region
        %p81 = scmp.lt.s32.totalorder %s7, 1
        %s82 = scalar_select %p81, %s7, 1
        %s83 = smul.addr %s82, 32
        %s84 = smul.addr %s83, 8
        %s85 = scalar_lea.vmem %s0, %s84
      $region20: #{a_call__.6} parent=15 // pred_fallthru
        _
    $region16: #{a_call__.6} parent=5 // pred_fallthru
      _
    %p86 = scmp.le.s32.totalorder 1, %s7
    %p87 = scmp.lt.s32.totalorder %s7, 3
    %p88 = pnand %p86, %p87
    %p89 = pneg %p88
    // Predicated region
    $region21: #{a_call__.6} parent=5 // pred_check
      _
    $region22: #{a_call__.6} parent=5 // pred_check_branch
      %91 = sbr.rel (%p88) target = $region24
    $region23: #{a_call__.6} parent=5 // pred_region
      %s92 = ssub.s32 %s7, 1
      %p93 = scmp.lt.s32.totalorder %s12, 1
      %s94 = scalar_select %p93, %s12, 1
      %s95 = smul.addr %s94, 32
      %s96 = smul.addr %s95, 8
      %s97 = scalar_lea.vmem %s0, %s96
      %p98 = pneg %p33
      %p99 = pneg %p30
      %p100 = pneg %p59
      %p101 = pneg %p56
      %p102 = scmp.lt.s32.totalorder %s12, 1
      %s103 = scalar_select %p102, %s12, 1
      %s104 = smul.addr %s103, 8
      %s105 = scalar_lea.vmem %s1, %s104
      %p106 = scmp.lt.s32.totalorder %s12, 1
      %s107 = scalar_select %p106, %s12, 1
      %s108 = smul.addr %s107, 32
      %s109 = smul.addr %s108, 8
      %s110 = scalar_lea.vmem %s0, %s109
      %p111 = scmp.lt.s32.totalorder %s12, 1
      %s112 = scalar_select %p111, %s12, 1
      %s113 = smul.addr %s112, 8
      %s114 = scalar_lea.vmem %s1, %s113
      %v115 = vld [vmem:[%s110] sm:$0xff]
      %v116 = vld [vmem:[%s110 + $0x8] sm:$0xff]
      %v117 = vld [vmem:[%s110 + $0x10] sm:$0xff]
      %v118 = vld [vmem:[%s110 + $0x18] sm:$0xff]
      %v119 = vld [vmem:[%s110 + $0x20] sm:$0xff]
      %v120 = vld [vmem:[%s110 + $0x28] sm:$0xff]
      %v121 = vld [vmem:[%s110 + $0x30] sm:$0xff]
      %v122 = vld [vmem:[%s110 + $0x38] sm:$0xff]
      %v123 = vld [vmem:[%s110 + $0x40] sm:$0xff]
      %v124 = vld [vmem:[%s110 + $0x48] sm:$0xff]
      %v125 = vld [vmem:[%s110 + $0x50] sm:$0xff]
      %v126 = vld [vmem:[%s110 + $0x58] sm:$0xff]
      %v127 = vld [vmem:[%s110 + $0x60] sm:$0xff]
      %v128 = vld [vmem:[%s110 + $0x68] sm:$0xff]
      %v129 = vld [vmem:[%s110 + $0x70] sm:$0xff]
      %v130 = vld [vmem:[%s110 + $0x78] sm:$0xff]
      %v131 = vld [vmem:[%s110 + $0x80] sm:$0xff]
      %v132 = vld [vmem:[%s110 + $0x88] sm:$0xff]
      %v133 = vld [vmem:[%s110 + $0x90] sm:$0xff]
      %v134 = vld [vmem:[%s110 + $0x98] sm:$0xff]
      %v135 = vld [vmem:[%s110 + $0xa0] sm:$0xff]
      %v136 = vld [vmem:[%s110 + $0xa8] sm:$0xff]
      %v137 = vld [vmem:[%s110 + $0xb0] sm:$0xff]
      %v138 = vld [vmem:[%s110 + $0xb8] sm:$0xff]
      %v139 = vld [vmem:[%s110 + $0xc0] sm:$0xff]
      %v140 = vld [vmem:[%s110 + $0xc8] sm:$0xff]
      %v141 = vld [vmem:[%s110 + $0xd0] sm:$0xff]
      %v142 = vld [vmem:[%s110 + $0xd8] sm:$0xff]
      %v143 = vld [vmem:[%s110 + $0xe0] sm:$0xff]
      %v144 = vld [vmem:[%s110 + $0xe8] sm:$0xff]
      %v145 = vld [vmem:[%s110 + $0xf0] sm:$0xff]
      %v146 = vld [vmem:[%s110 + $0xf8] sm:$0xff]
      %v147 = vrcp.pop 8.0
      %v148 = vmul.f32 1.0, %v147
      %v149 = vmul.f32 %v148, %v115
      %v150 = vmul.f32 %v148, %v116
      %v151 = vmul.f32 %v148, %v117
      %v152 = vmul.f32 %v148, %v118
      %v153 = vmul.f32 %v148, %v119
      %v154 = vmul.f32 %v148, %v120
      %v155 = vmul.f32 %v148, %v121
      %v156 = vmul.f32 %v148, %v122
      %v157 = vmul.f32 %v148, %v123
      %v158 = vmul.f32 %v148, %v124
      %v159 = vmul.f32 %v148, %v125
      %v160 = vmul.f32 %v148, %v126
      %v161 = vmul.f32 %v148, %v127
      %v162 = vmul.f32 %v148, %v128
      %v163 = vmul.f32 %v148, %v129
      %v164 = vmul.f32 %v148, %v130
      %v165 = vmul.f32 %v148, %v131
      %v166 = vmul.f32 %v148, %v132
      %v167 = vmul.f32 %v148, %v133
      %v168 = vmul.f32 %v148, %v134
      %v169 = vmul.f32 %v148, %v135
      %v170 = vmul.f32 %v148, %v136
      %v171 = vmul.f32 %v148, %v137
      %v172 = vmul.f32 %v148, %v138
      %v173 = vmul.f32 %v148, %v139
      %v174 = vmul.f32 %v148, %v140
      %v175 = vmul.f32 %v148, %v141
      %v176 = vmul.f32 %v148, %v142
      %v177 = vmul.f32 %v148, %v143
      %v178 = vmul.f32 %v148, %v144
      %v179 = vmul.f32 %v148, %v145
      %v180 = vmul.f32 %v148, %v146
      %v181 = vadd.f32 %v149, %v150
      %v182 = vadd.f32 %v181, %v151
      %v183 = vadd.f32 %v182, %v152
      %v184 = vadd.f32 %v183, %v153
      %v185 = vadd.f32 %v184, %v154
      %v186 = vadd.f32 %v185, %v155
      %v187 = vadd.f32 %v186, %v156
      %v188 = vadd.f32 %v187, %v157
      %v189 = vadd.f32 %v188, %v158
      %v190 = vadd.f32 %v189, %v159
      %v191 = vadd.f32 %v190, %v160
      %v192 = vadd.f32 %v191, %v161
      %v193 = vadd.f32 %v192, %v162
      %v194 = vadd.f32 %v193, %v163
      %v195 = vadd.f32 %v194, %v164
      %v196 = vadd.f32 %v195, %v165
      %v197 = vadd.f32 %v196, %v166
      %v198 = vadd.f32 %v197, %v167
      %v199 = vadd.f32 %v198, %v168
      %v200 = vadd.f32 %v199, %v169
      %v201 = vadd.f32 %v200, %v170
      %v202 = vadd.f32 %v201, %v171
      %v203 = vadd.f32 %v202, %v172
      %v204 = vadd.f32 %v203, %v173
      %v205 = vadd.f32 %v204, %v174
      %v206 = vadd.f32 %v205, %v175
      %v207 = vadd.f32 %v206, %v176
      %v208 = vadd.f32 %v207, %v177
      %v209 = vadd.f32 %v208, %v178
      %v210 = vadd.f32 %v209, %v179
      %v211 = vadd.f32 %v210, %v180
      %v212 = vmul.f32 %v211, %v211
      %213 = vadd.xlane.f32.xlu0 %v212
      %v214 = vpop.xlane.xlu0 %213
      %v215 = vrsqrt.pop %v214
      %v216 = vmul.f32 %v214, %v215
      %vm217 = vcmp.eq.f32.partialorder %v214, inf
      %v218 = vsel %vm217, %v214, %v216
      %vm219 = vcmp.eq.f32.partialorder %v214, 0.0
      %v220 = vand.u32 %v214, 2147483648
      %v221 = vsel %vm219, %v220, %v218
      %v222 = vmul.f32 %v221, %v221
      %v223 = vadd.f32 %v222, 1.0
      %v224 = vrcp.pop %v223
      %v225 = vmul.f32 %v221, %v224
      %v226 = vmul.f32 %v225, %v211
      %v227 = vmul.f32 %v115, %v226
      %v228 = vmul.f32 %v116, %v226
      %v229 = vmul.f32 %v117, %v226
      %v230 = vmul.f32 %v118, %v226
      %v231 = vmul.f32 %v119, %v226
      %v232 = vmul.f32 %v120, %v226
      %v233 = vmul.f32 %v121, %v226
      %v234 = vmul.f32 %v122, %v226
      %v235 = vmul.f32 %v123, %v226
      %v236 = vmul.f32 %v124, %v226
      %v237 = vmul.f32 %v125, %v226
      %v238 = vmul.f32 %v126, %v226
      %v239 = vmul.f32 %v127, %v226
      %v240 = vmul.f32 %v128, %v226
      %v241 = vmul.f32 %v129, %v226
      %v242 = vmul.f32 %v130, %v226
      %v243 = vmul.f32 %v131, %v226
      %v244 = vmul.f32 %v132, %v226
      %v245 = vmul.f32 %v133, %v226
      %v246 = vmul.f32 %v134, %v226
      %v247 = vmul.f32 %v135, %v226
      %v248 = vmul.f32 %v136, %v226
      %v249 = vmul.f32 %v137, %v226
      %v250 = vmul.f32 %v138, %v226
      %v251 = vmul.f32 %v139, %v226
      %v252 = vmul.f32 %v140, %v226
      %v253 = vmul.f32 %v141, %v226
      %v254 = vmul.f32 %v142, %v226
      %v255 = vmul.f32 %v143, %v226
      %v256 = vmul.f32 %v144, %v226
      %v257 = vmul.f32 %v145, %v226
      %v258 = vmul.f32 %v146, %v226
      %259 = vadd.xlane.f32.xlu0 %v227
      %v260 = vpop.xlane.xlu0 %259
      %261 = vadd.xlane.f32.xlu0 %v228
      %v262 = vpop.xlane.xlu0 %261
      %263 = vadd.xlane.f32.xlu0 %v229
      %v264 = vpop.xlane.xlu0 %263
      %265 = vadd.xlane.f32.xlu0 %v230
      %v266 = vpop.xlane.xlu0 %265
      %267 = vadd.xlane.f32.xlu0 %v231
      %v268 = vpop.xlane.xlu0 %267
      %269 = vadd.xlane.f32.xlu0 %v232
      %v270 = vpop.xlane.xlu0 %269
      %271 = vadd.xlane.f32.xlu0 %v233
      %v272 = vpop.xlane.xlu0 %271
      %273 = vadd.xlane.f32.xlu0 %v234
      %v274 = vpop.xlane.xlu0 %273
      %275 = vadd.xlane.f32.xlu0 %v235
      %v276 = vpop.xlane.xlu0 %275
      %277 = vadd.xlane.f32.xlu0 %v236
      %v278 = vpop.xlane.xlu0 %277
      %279 = vadd.xlane.f32.xlu0 %v237
      %v280 = vpop.xlane.xlu0 %279
      %281 = vadd.xlane.f32.xlu0 %v238
      %v282 = vpop.xlane.xlu0 %281
      %283 = vadd.xlane.f32.xlu0 %v239
      %v284 = vpop.xlane.xlu0 %283
      %285 = vadd.xlane.f32.xlu0 %v240
      %v286 = vpop.xlane.xlu0 %285
      %287 = vadd.xlane.f32.xlu0 %v241
      %v288 = vpop.xlane.xlu0 %287
      %289 = vadd.xlane.f32.xlu0 %v242
      %v290 = vpop.xlane.xlu0 %289
      %291 = vadd.xlane.f32.xlu0 %v243
      %v292 = vpop.xlane.xlu0 %291
      %293 = vadd.xlane.f32.xlu0 %v244
      %v294 = vpop.xlane.xlu0 %293
      %295 = vadd.xlane.f32.xlu0 %v245
      %v296 = vpop.xlane.xlu0 %295
      %297 = vadd.xlane.f32.xlu0 %v246
      %v298 = vpop.xlane.xlu0 %297
      %299 = vadd.xlane.f32.xlu0 %v247
      %v300 = vpop.xlane.xlu0 %299
      %301 = vadd.xlane.f32.xlu0 %v248
      %v302 = vpop.xlane.xlu0 %301
      %303 = vadd.xlane.f32.xlu0 %v249
      %v304 = vpop.xlane.xlu0 %303
      %305 = vadd.xlane.f32.xlu0 %v250
      %v306 = vpop.xlane.xlu0 %305
      %307 = vadd.xlane.f32.xlu0 %v251
      %v308 = vpop.xlane.xlu0 %307
      %309 = vadd.xlane.f32.xlu0 %v252
      %v310 = vpop.xlane.xlu0 %309
      %311 = vadd.xlane.f32.xlu0 %v253
      %v312 = vpop.xlane.xlu0 %311
      %313 = vadd.xlane.f32.xlu0 %v254
      %v314 = vpop.xlane.xlu0 %313
      %315 = vadd.xlane.f32.xlu0 %v255
      %v316 = vpop.xlane.xlu0 %315
      %317 = vadd.xlane.f32.xlu0 %v256
      %v318 = vpop.xlane.xlu0 %317
      %319 = vadd.xlane.f32.xlu0 %v257
      %v320 = vpop.xlane.xlu0 %319
      %321 = vadd.xlane.f32.xlu0 %v258
      %v322 = vpop.xlane.xlu0 %321
      %v323 = vadd.f32 %v260, 0.0
      %v324 = vadd.f32 %v262, 0.0
      %v325 = vadd.f32 %v264, 0.0
      %v326 = vadd.f32 %v266, 0.0
      %v327 = vadd.f32 %v268, 0.0
      %v328 = vadd.f32 %v270, 0.0
      %v329 = vadd.f32 %v272, 0.0
      %v330 = vadd.f32 %v274, 0.0
      %v331 = vadd.f32 %v276, 0.0
      %v332 = vadd.f32 %v278, 0.0
      %v333 = vadd.f32 %v280, 0.0
      %v334 = vadd.f32 %v282, 0.0
      %v335 = vadd.f32 %v284, 0.0
      %v336 = vadd.f32 %v286, 0.0
      %v337 = vadd.f32 %v288, 0.0
      %v338 = vadd.f32 %v290, 0.0
      %v339 = vadd.f32 %v292, 0.0
      %v340 = vadd.f32 %v294, 0.0
      %v341 = vadd.f32 %v296, 0.0
      %v342 = vadd.f32 %v298, 0.0
      %v343 = vadd.f32 %v300, 0.0
      %v344 = vadd.f32 %v302, 0.0
      %v345 = vadd.f32 %v304, 0.0
      %v346 = vadd.f32 %v306, 0.0
      %v347 = vadd.f32 %v308, 0.0
      %v348 = vadd.f32 %v310, 0.0
      %v349 = vadd.f32 %v312, 0.0
      %v350 = vadd.f32 %v314, 0.0
      %v351 = vadd.f32 %v316, 0.0
      %v352 = vadd.f32 %v318, 0.0
      %v353 = vadd.f32 %v320, 0.0
      %v354 = vadd.f32 %v322, 0.0
      %v355 = vrot.slane %v323, 4
      %v356 = vmax.f32 %v323, %v355
      %v357 = vrot.slane %v356, 2
      %v358 = vmax.f32 %v356, %v357
      %v359 = vrot.slane %v358, 1
      %v360 = vmax.f32 %v358, %v359
      %v361 = vrot.slane %v324, 4
      %v362 = vmax.f32 %v324, %v361
      %v363 = vrot.slane %v362, 2
      %v364 = vmax.f32 %v362, %v363
      %v365 = vrot.slane %v364, 1
      %v366 = vmax.f32 %v364, %v365
      %v367 = vrot.slane %v325, 4
      %v368 = vmax.f32 %v325, %v367
      %v369 = vrot.slane %v368, 2
      %v370 = vmax.f32 %v368, %v369
      %v371 = vrot.slane %v370, 1
      %v372 = vmax.f32 %v370, %v371
      %v373 = vrot.slane %v326, 4
      %v374 = vmax.f32 %v326, %v373
      %v375 = vrot.slane %v374, 2
      %v376 = vmax.f32 %v374, %v375
      %v377 = vrot.slane %v376, 1
      %v378 = vmax.f32 %v376, %v377
      %v379 = vrot.slane %v327, 4
      %v380 = vmax.f32 %v327, %v379
      %v381 = vrot.slane %v380, 2
      %v382 = vmax.f32 %v380, %v381
      %v383 = vrot.slane %v382, 1
      %v384 = vmax.f32 %v382, %v383
      %v385 = vrot.slane %v328, 4
      %v386 = vmax.f32 %v328, %v385
      %v387 = vrot.slane %v386, 2
      %v388 = vmax.f32 %v386, %v387
      %v389 = vrot.slane %v388, 1
      %v390 = vmax.f32 %v388, %v389
      %v391 = vrot.slane %v329, 4
      %v392 = vmax.f32 %v329, %v391
      %v393 = vrot.slane %v392, 2
      %v394 = vmax.f32 %v392, %v393
      %v395 = vrot.slane %v394, 1
      %v396 = vmax.f32 %v394, %v395
      %v397 = vrot.slane %v330, 4
      %v398 = vmax.f32 %v330, %v397
      %v399 = vrot.slane %v398, 2
      %v400 = vmax.f32 %v398, %v399
      %v401 = vrot.slane %v400, 1
      %v402 = vmax.f32 %v400, %v401
      %v403 = vrot.slane %v331, 4
      %v404 = vmax.f32 %v331, %v403
      %v405 = vrot.slane %v404, 2
      %v406 = vmax.f32 %v404, %v405
      %v407 = vrot.slane %v406, 1
      %v408 = vmax.f32 %v406, %v407
      %v409 = vrot.slane %v332, 4
      %v410 = vmax.f32 %v332, %v409
      %v411 = vrot.slane %v410, 2
      %v412 = vmax.f32 %v410, %v411
      %v413 = vrot.slane %v412, 1
      %v414 = vmax.f32 %v412, %v413
      %v415 = vrot.slane %v333, 4
      %v416 = vmax.f32 %v333, %v415
      %v417 = vrot.slane %v416, 2
      %v418 = vmax.f32 %v416, %v417
      %v419 = vrot.slane %v418, 1
      %v420 = vmax.f32 %v418, %v419
      %v421 = vrot.slane %v334, 4
      %v422 = vmax.f32 %v334, %v421
      %v423 = vrot.slane %v422, 2
      %v424 = vmax.f32 %v422, %v423
      %v425 = vrot.slane %v424, 1
      %v426 = vmax.f32 %v424, %v425
      %v427 = vrot.slane %v335, 4
      %v428 = vmax.f32 %v335, %v427
      %v429 = vrot.slane %v428, 2
      %v430 = vmax.f32 %v428, %v429
      %v431 = vrot.slane %v430, 1
      %v432 = vmax.f32 %v430, %v431
      %v433 = vrot.slane %v336, 4
      %v434 = vmax.f32 %v336, %v433
      %v435 = vrot.slane %v434, 2
      %v436 = vmax.f32 %v434, %v435
      %v437 = vrot.slane %v436, 1
      %v438 = vmax.f32 %v436, %v437
      %v439 = vrot.slane %v337, 4
      %v440 = vmax.f32 %v337, %v439
      %v441 = vrot.slane %v440, 2
      %v442 = vmax.f32 %v440, %v441
      %v443 = vrot.slane %v442, 1
      %v444 = vmax.f32 %v442, %v443
      %v445 = vrot.slane %v338, 4
      %v446 = vmax.f32 %v338, %v445
      %v447 = vrot.slane %v446, 2
      %v448 = vmax.f32 %v446, %v447
      %v449 = vrot.slane %v448, 1
      %v450 = vmax.f32 %v448, %v449
      %v451 = vrot.slane %v339, 4
      %v452 = vmax.f32 %v339, %v451
      %v453 = vrot.slane %v452, 2
      %v454 = vmax.f32 %v452, %v453
      %v455 = vrot.slane %v454, 1
      %v456 = vmax.f32 %v454, %v455
      %v457 = vrot.slane %v340, 4
      %v458 = vmax.f32 %v340, %v457
      %v459 = vrot.slane %v458, 2
      %v460 = vmax.f32 %v458, %v459
      %v461 = vrot.slane %v460, 1
      %v462 = vmax.f32 %v460, %v461
      %v463 = vrot.slane %v341, 4
      %v464 = vmax.f32 %v341, %v463
      %v465 = vrot.slane %v464, 2
      %v466 = vmax.f32 %v464, %v465
      %v467 = vrot.slane %v466, 1
      %v468 = vmax.f32 %v466, %v467
      %v469 = vrot.slane %v342, 4
      %v470 = vmax.f32 %v342, %v469
      %v471 = vrot.slane %v470, 2
      %v472 = vmax.f32 %v470, %v471
      %v473 = vrot.slane %v472, 1
      %v474 = vmax.f32 %v472, %v473
      %v475 = vrot.slane %v343, 4
      %v476 = vmax.f32 %v343, %v475
      %v477 = vrot.slane %v476, 2
      %v478 = vmax.f32 %v476, %v477
      %v479 = vrot.slane %v478, 1
      %v480 = vmax.f32 %v478, %v479
      %v481 = vrot.slane %v344, 4
      %v482 = vmax.f32 %v344, %v481
      %v483 = vrot.slane %v482, 2
      %v484 = vmax.f32 %v482, %v483
      %v485 = vrot.slane %v484, 1
      %v486 = vmax.f32 %v484, %v485
      %v487 = vrot.slane %v345, 4
      %v488 = vmax.f32 %v345, %v487
      %v489 = vrot.slane %v488, 2
      %v490 = vmax.f32 %v488, %v489
      %v491 = vrot.slane %v490, 1
      %v492 = vmax.f32 %v490, %v491
      %v493 = vrot.slane %v346, 4
      %v494 = vmax.f32 %v346, %v493
      %v495 = vrot.slane %v494, 2
      %v496 = vmax.f32 %v494, %v495
      %v497 = vrot.slane %v496, 1
      %v498 = vmax.f32 %v496, %v497
      %v499 = vrot.slane %v347, 4
      %v500 = vmax.f32 %v347, %v499
      %v501 = vrot.slane %v500, 2
      %v502 = vmax.f32 %v500, %v501
      %v503 = vrot.slane %v502, 1
      %v504 = vmax.f32 %v502, %v503
      %v505 = vrot.slane %v348, 4
      %v506 = vmax.f32 %v348, %v505
      %v507 = vrot.slane %v506, 2
      %v508 = vmax.f32 %v506, %v507
      %v509 = vrot.slane %v508, 1
      %v510 = vmax.f32 %v508, %v509
      %v511 = vrot.slane %v349, 4
      %v512 = vmax.f32 %v349, %v511
      %v513 = vrot.slane %v512, 2
      %v514 = vmax.f32 %v512, %v513
      %v515 = vrot.slane %v514, 1
      %v516 = vmax.f32 %v514, %v515
      %v517 = vrot.slane %v350, 4
      %v518 = vmax.f32 %v350, %v517
      %v519 = vrot.slane %v518, 2
      %v520 = vmax.f32 %v518, %v519
      %v521 = vrot.slane %v520, 1
      %v522 = vmax.f32 %v520, %v521
      %v523 = vrot.slane %v351, 4
      %v524 = vmax.f32 %v351, %v523
      %v525 = vrot.slane %v524, 2
      %v526 = vmax.f32 %v524, %v525
      %v527 = vrot.slane %v526, 1
      %v528 = vmax.f32 %v526, %v527
      %v529 = vrot.slane %v352, 4
      %v530 = vmax.f32 %v352, %v529
      %v531 = vrot.slane %v530, 2
      %v532 = vmax.f32 %v530, %v531
      %v533 = vrot.slane %v532, 1
      %v534 = vmax.f32 %v532, %v533
      %v535 = vrot.slane %v353, 4
      %v536 = vmax.f32 %v353, %v535
      %v537 = vrot.slane %v536, 2
      %v538 = vmax.f32 %v536, %v537
      %v539 = vrot.slane %v538, 1
      %v540 = vmax.f32 %v538, %v539
      %v541 = vrot.slane %v354, 4
      %v542 = vmax.f32 %v354, %v541
      %v543 = vrot.slane %v542, 2
      %v544 = vmax.f32 %v542, %v543
      %v545 = vrot.slane %v544, 1
      %v546 = vmax.f32 %v544, %v545
      %v547 = vsub.f32 %v323, %v360
      %v548 = vsub.f32 %v324, %v366
      %v549 = vsub.f32 %v325, %v372
      %v550 = vsub.f32 %v326, %v378
      %v551 = vsub.f32 %v327, %v384
      %v552 = vsub.f32 %v328, %v390
      %v553 = vsub.f32 %v329, %v396
      %v554 = vsub.f32 %v330, %v402
      %v555 = vsub.f32 %v331, %v408
      %v556 = vsub.f32 %v332, %v414
      %v557 = vsub.f32 %v333, %v420
      %v558 = vsub.f32 %v334, %v426
      %v559 = vsub.f32 %v335, %v432
      %v560 = vsub.f32 %v336, %v438
      %v561 = vsub.f32 %v337, %v444
      %v562 = vsub.f32 %v338, %v450
      %v563 = vsub.f32 %v339, %v456
      %v564 = vsub.f32 %v340, %v462
      %v565 = vsub.f32 %v341, %v468
      %v566 = vsub.f32 %v342, %v474
      %v567 = vsub.f32 %v343, %v480
      %v568 = vsub.f32 %v344, %v486
      %v569 = vsub.f32 %v345, %v492
      %v570 = vsub.f32 %v346, %v498
      %v571 = vsub.f32 %v347, %v504
      %v572 = vsub.f32 %v348, %v510
      %v573 = vsub.f32 %v349, %v516
      %v574 = vsub.f32 %v350, %v522
      %v575 = vsub.f32 %v351, %v528
      %v576 = vsub.f32 %v352, %v534
      %v577 = vsub.f32 %v353, %v540
      %v578 = vsub.f32 %v354, %v546
      %v579 = vmul.f32 %v547, 1.442695
      %v580 = vpow.pop %v579
      %v581 = vmul.f32 %v548, 1.442695
      %v582 = vpow.pop %v581
      %v583 = vmul.f32 %v549, 1.442695
      %v584 = vpow.pop %v583
      %v585 = vmul.f32 %v550, 1.442695
      %v586 = vpow.pop %v585
      %v587 = vmul.f32 %v551, 1.442695
      %v588 = vpow.pop %v587
      %v589 = vmul.f32 %v552, 1.442695
      %v590 = vpow.pop %v589
      %v591 = vmul.f32 %v553, 1.442695
      %v592 = vpow.pop %v591
      %v593 = vmul.f32 %v554, 1.442695
      %v594 = vpow.pop %v593
      %v595 = vmul.f32 %v555, 1.442695
      %v596 = vpow.pop %v595
      %v597 = vmul.f32 %v556, 1.442695
      %v598 = vpow.pop %v597
      %v599 = vmul.f32 %v557, 1.442695
      %v600 = vpow.pop %v599
      %v601 = vmul.f32 %v558, 1.442695
      %v602 = vpow.pop %v601
      %v603 = vmul.f32 %v559, 1.442695
      %v604 = vpow.pop %v603
      %v605 = vmul.f32 %v560, 1.442695
      %v606 = vpow.pop %v605
      %v607 = vmul.f32 %v561, 1.442695
      %v608 = vpow.pop %v607
      %v609 = vmul.f32 %v562, 1.442695
      %v610 = vpow.pop %v609
      %v611 = vmul.f32 %v563, 1.442695
      %v612 = vpow.pop %v611
      %v613 = vmul.f32 %v564, 1.442695
      %v614 = vpow.pop %v613
      %v615 = vmul.f32 %v565, 1.442695
      %v616 = vpow.pop %v615
      %v617 = vmul.f32 %v566, 1.442695
      %v618 = vpow.pop %v617
      %v619 = vmul.f32 %v567, 1.442695
      %v620 = vpow.pop %v619
      %v621 = vmul.f32 %v568, 1.442695
      %v622 = vpow.pop %v621
      %v623 = vmul.f32 %v569, 1.442695
      %v624 = vpow.pop %v623
      %v625 = vmul.f32 %v570, 1.442695
      %v626 = vpow.pop %v625
      %v627 = vmul.f32 %v571, 1.442695
      %v628 = vpow.pop %v627
      %v629 = vmul.f32 %v572, 1.442695
      %v630 = vpow.pop %v629
      %v631 = vmul.f32 %v573, 1.442695
      %v632 = vpow.pop %v631
      %v633 = vmul.f32 %v574, 1.442695
      %v634 = vpow.pop %v633
      %v635 = vmul.f32 %v575, 1.442695
      %v636 = vpow.pop %v635
      %v637 = vmul.f32 %v576, 1.442695
      %v638 = vpow.pop %v637
      %v639 = vmul.f32 %v577, 1.442695
      %v640 = vpow.pop %v639
      %v641 = vmul.f32 %v578, 1.442695
      %v642 = vpow.pop %v641
      %v643 = vrot.slane %v580, 4
      %v644 = vadd.f32 %v580, %v643
      %v645 = vrot.slane %v644, 2
      %v646 = vadd.f32 %v644, %v645
      %v647 = vrot.slane %v646, 1
      %v648 = vadd.f32 %v646, %v647
      %v649 = vrot.slane %v582, 4
      %v650 = vadd.f32 %v582, %v649
      %v651 = vrot.slane %v650, 2
      %v652 = vadd.f32 %v650, %v651
      %v653 = vrot.slane %v652, 1
      %v654 = vadd.f32 %v652, %v653
      %v655 = vrot.slane %v584, 4
      %v656 = vadd.f32 %v584, %v655
      %v657 = vrot.slane %v656, 2
      %v658 = vadd.f32 %v656, %v657
      %v659 = vrot.slane %v658, 1
      %v660 = vadd.f32 %v658, %v659
      %v661 = vrot.slane %v586, 4
      %v662 = vadd.f32 %v586, %v661
      %v663 = vrot.slane %v662, 2
      %v664 = vadd.f32 %v662, %v663
      %v665 = vrot.slane %v664, 1
      %v666 = vadd.f32 %v664, %v665
      %v667 = vrot.slane %v588, 4
      %v668 = vadd.f32 %v588, %v667
      %v669 = vrot.slane %v668, 2
      %v670 = vadd.f32 %v668, %v669
      %v671 = vrot.slane %v670, 1
      %v672 = vadd.f32 %v670, %v671
      %v673 = vrot.slane %v590, 4
      %v674 = vadd.f32 %v590, %v673
      %v675 = vrot.slane %v674, 2
      %v676 = vadd.f32 %v674, %v675
      %v677 = vrot.slane %v676, 1
      %v678 = vadd.f32 %v676, %v677
      %v679 = vrot.slane %v592, 4
      %v680 = vadd.f32 %v592, %v679
      %v681 = vrot.slane %v680, 2
      %v682 = vadd.f32 %v680, %v681
      %v683 = vrot.slane %v682, 1
      %v684 = vadd.f32 %v682, %v683
      %v685 = vrot.slane %v594, 4
      %v686 = vadd.f32 %v594, %v685
      %v687 = vrot.slane %v686, 2
      %v688 = vadd.f32 %v686, %v687
      %v689 = vrot.slane %v688, 1
      %v690 = vadd.f32 %v688, %v689
      %v691 = vrot.slane %v596, 4
      %v692 = vadd.f32 %v596, %v691
      %v693 = vrot.slane %v692, 2
      %v694 = vadd.f32 %v692, %v693
      %v695 = vrot.slane %v694, 1
      %v696 = vadd.f32 %v694, %v695
      %v697 = vrot.slane %v598, 4
      %v698 = vadd.f32 %v598, %v697
      %v699 = vrot.slane %v698, 2
      %v700 = vadd.f32 %v698, %v699
      %v701 = vrot.slane %v700, 1
      %v702 = vadd.f32 %v700, %v701
      %v703 = vrot.slane %v600, 4
      %v704 = vadd.f32 %v600, %v703
      %v705 = vrot.slane %v704, 2
      %v706 = vadd.f32 %v704, %v705
      %v707 = vrot.slane %v706, 1
      %v708 = vadd.f32 %v706, %v707
      %v709 = vrot.slane %v602, 4
      %v710 = vadd.f32 %v602, %v709
      %v711 = vrot.slane %v710, 2
      %v712 = vadd.f32 %v710, %v711
      %v713 = vrot.slane %v712, 1
      %v714 = vadd.f32 %v712, %v713
      %v715 = vrot.slane %v604, 4
      %v716 = vadd.f32 %v604, %v715
      %v717 = vrot.slane %v716, 2
      %v718 = vadd.f32 %v716, %v717
      %v719 = vrot.slane %v718, 1
      %v720 = vadd.f32 %v718, %v719
      %v721 = vrot.slane %v606, 4
      %v722 = vadd.f32 %v606, %v721
      %v723 = vrot.slane %v722, 2
      %v724 = vadd.f32 %v722, %v723
      %v725 = vrot.slane %v724, 1
      %v726 = vadd.f32 %v724, %v725
      %v727 = vrot.slane %v608, 4
      %v728 = vadd.f32 %v608, %v727
      %v729 = vrot.slane %v728, 2
      %v730 = vadd.f32 %v728, %v729
      %v731 = vrot.slane %v730, 1
      %v732 = vadd.f32 %v730, %v731
      %v733 = vrot.slane %v610, 4
      %v734 = vadd.f32 %v610, %v733
      %v735 = vrot.slane %v734, 2
      %v736 = vadd.f32 %v734, %v735
      %v737 = vrot.slane %v736, 1
      %v738 = vadd.f32 %v736, %v737
      %v739 = vrot.slane %v612, 4
      %v740 = vadd.f32 %v612, %v739
      %v741 = vrot.slane %v740, 2
      %v742 = vadd.f32 %v740, %v741
      %v743 = vrot.slane %v742, 1
      %v744 = vadd.f32 %v742, %v743
      %v745 = vrot.slane %v614, 4
      %v746 = vadd.f32 %v614, %v745
      %v747 = vrot.slane %v746, 2
      %v748 = vadd.f32 %v746, %v747
      %v749 = vrot.slane %v748, 1
      %v750 = vadd.f32 %v748, %v749
      %v751 = vrot.slane %v616, 4
      %v752 = vadd.f32 %v616, %v751
      %v753 = vrot.slane %v752, 2
      %v754 = vadd.f32 %v752, %v753
      %v755 = vrot.slane %v754, 1
      %v756 = vadd.f32 %v754, %v755
      %v757 = vrot.slane %v618, 4
      %v758 = vadd.f32 %v618, %v757
      %v759 = vrot.slane %v758, 2
      %v760 = vadd.f32 %v758, %v759
      %v761 = vrot.slane %v760, 1
      %v762 = vadd.f32 %v760, %v761
      %v763 = vrot.slane %v620, 4
      %v764 = vadd.f32 %v620, %v763
      %v765 = vrot.slane %v764, 2
      %v766 = vadd.f32 %v764, %v765
      %v767 = vrot.slane %v766, 1
      %v768 = vadd.f32 %v766, %v767
      %v769 = vrot.slane %v622, 4
      %v770 = vadd.f32 %v622, %v769
      %v771 = vrot.slane %v770, 2
      %v772 = vadd.f32 %v770, %v771
      %v773 = vrot.slane %v772, 1
      %v774 = vadd.f32 %v772, %v773
      %v775 = vrot.slane %v624, 4
      %v776 = vadd.f32 %v624, %v775
      %v777 = vrot.slane %v776, 2
      %v778 = vadd.f32 %v776, %v777
      %v779 = vrot.slane %v778, 1
      %v780 = vadd.f32 %v778, %v779
      %v781 = vrot.slane %v626, 4
      %v782 = vadd.f32 %v626, %v781
      %v783 = vrot.slane %v782, 2
      %v784 = vadd.f32 %v782, %v783
      %v785 = vrot.slane %v784, 1
      %v786 = vadd.f32 %v784, %v785
      %v787 = vrot.slane %v628, 4
      %v788 = vadd.f32 %v628, %v787
      %v789 = vrot.slane %v788, 2
      %v790 = vadd.f32 %v788, %v789
      %v791 = vrot.slane %v790, 1
      %v792 = vadd.f32 %v790, %v791
      %v793 = vrot.slane %v630, 4
      %v794 = vadd.f32 %v630, %v793
      %v795 = vrot.slane %v794, 2
      %v796 = vadd.f32 %v794, %v795
      %v797 = vrot.slane %v796, 1
      %v798 = vadd.f32 %v796, %v797
      %v799 = vrot.slane %v632, 4
      %v800 = vadd.f32 %v632, %v799
      %v801 = vrot.slane %v800, 2
      %v802 = vadd.f32 %v800, %v801
      %v803 = vrot.slane %v802, 1
      %v804 = vadd.f32 %v802, %v803
      %v805 = vrot.slane %v634, 4
      %v806 = vadd.f32 %v634, %v805
      %v807 = vrot.slane %v806, 2
      %v808 = vadd.f32 %v806, %v807
      %v809 = vrot.slane %v808, 1
      %v810 = vadd.f32 %v808, %v809
      %v811 = vrot.slane %v636, 4
      %v812 = vadd.f32 %v636, %v811
      %v813 = vrot.slane %v812, 2
      %v814 = vadd.f32 %v812, %v813
      %v815 = vrot.slane %v814, 1
      %v816 = vadd.f32 %v814, %v815
      %v817 = vrot.slane %v638, 4
      %v818 = vadd.f32 %v638, %v817
      %v819 = vrot.slane %v818, 2
      %v820 = vadd.f32 %v818, %v819
      %v821 = vrot.slane %v820, 1
      %v822 = vadd.f32 %v820, %v821
      %v823 = vrot.slane %v640, 4
      %v824 = vadd.f32 %v640, %v823
      %v825 = vrot.slane %v824, 2
      %v826 = vadd.f32 %v824, %v825
      %v827 = vrot.slane %v826, 1
      %v828 = vadd.f32 %v826, %v827
      %v829 = vrot.slane %v642, 4
      %v830 = vadd.f32 %v642, %v829
      %v831 = vrot.slane %v830, 2
      %v832 = vadd.f32 %v830, %v831
      %v833 = vrot.slane %v832, 1
      %v834 = vadd.f32 %v832, %v833
      %v835 = vrcp.pop %v648
      %v836 = vmul.f32 %v580, %v835
      %v837 = vrcp.pop %v654
      %v838 = vmul.f32 %v582, %v837
      %v839 = vrcp.pop %v660
      %v840 = vmul.f32 %v584, %v839
      %v841 = vrcp.pop %v666
      %v842 = vmul.f32 %v586, %v841
      %v843 = vrcp.pop %v672
      %v844 = vmul.f32 %v588, %v843
      %v845 = vrcp.pop %v678
      %v846 = vmul.f32 %v590, %v845
      %v847 = vrcp.pop %v684
      %v848 = vmul.f32 %v592, %v847
      %v849 = vrcp.pop %v690
      %v850 = vmul.f32 %v594, %v849
      %v851 = vrcp.pop %v696
      %v852 = vmul.f32 %v596, %v851
      %v853 = vrcp.pop %v702
      %v854 = vmul.f32 %v598, %v853
      %v855 = vrcp.pop %v708
      %v856 = vmul.f32 %v600, %v855
      %v857 = vrcp.pop %v714
      %v858 = vmul.f32 %v602, %v857
      %v859 = vrcp.pop %v720
      %v860 = vmul.f32 %v604, %v859
      %v861 = vrcp.pop %v726
      %v862 = vmul.f32 %v606, %v861
      %v863 = vrcp.pop %v732
      %v864 = vmul.f32 %v608, %v863
      %v865 = vrcp.pop %v738
      %v866 = vmul.f32 %v610, %v865
      %v867 = vrcp.pop %v744
      %v868 = vmul.f32 %v612, %v867
      %v869 = vrcp.pop %v750
      %v870 = vmul.f32 %v614, %v869
      %v871 = vrcp.pop %v756
      %v872 = vmul.f32 %v616, %v871
      %v873 = vrcp.pop %v762
      %v874 = vmul.f32 %v618, %v873
      %v875 = vrcp.pop %v768
      %v876 = vmul.f32 %v620, %v875
      %v877 = vrcp.pop %v774
      %v878 = vmul.f32 %v622, %v877
      %v879 = vrcp.pop %v780
      %v880 = vmul.f32 %v624, %v879
      %v881 = vrcp.pop %v786
      %v882 = vmul.f32 %v626, %v881
      %v883 = vrcp.pop %v792
      %v884 = vmul.f32 %v628, %v883
      %v885 = vrcp.pop %v798
      %v886 = vmul.f32 %v630, %v885
      %v887 = vrcp.pop %v804
      %v888 = vmul.f32 %v632, %v887
      %v889 = vrcp.pop %v810
      %v890 = vmul.f32 %v634, %v889
      %v891 = vrcp.pop %v816
      %v892 = vmul.f32 %v636, %v891
      %v893 = vrcp.pop %v822
      %v894 = vmul.f32 %v638, %v893
      %v895 = vrcp.pop %v828
      %v896 = vmul.f32 %v640, %v895
      %v897 = vrcp.pop %v834
      %v898 = vmul.f32 %v642, %v897
      %v899 = vmul.f32 %v836, %v115
      %v900 = vmul.f32 %v838, %v116
      %v901 = vmul.f32 %v840, %v117
      %v902 = vmul.f32 %v842, %v118
      %v903 = vmul.f32 %v844, %v119
      %v904 = vmul.f32 %v846, %v120
      %v905 = vmul.f32 %v848, %v121
      %v906 = vmul.f32 %v850, %v122
      %v907 = vmul.f32 %v852, %v123
      %v908 = vmul.f32 %v854, %v124
      %v909 = vmul.f32 %v856, %v125
      %v910 = vmul.f32 %v858, %v126
      %v911 = vmul.f32 %v860, %v127
      %v912 = vmul.f32 %v862, %v128
      %v913 = vmul.f32 %v864, %v129
      %v914 = vmul.f32 %v866, %v130
      %v915 = vmul.f32 %v868, %v131
      %v916 = vmul.f32 %v870, %v132
      %v917 = vmul.f32 %v872, %v133
      %v918 = vmul.f32 %v874, %v134
      %v919 = vmul.f32 %v876, %v135
      %v920 = vmul.f32 %v878, %v136
      %v921 = vmul.f32 %v880, %v137
      %v922 = vmul.f32 %v882, %v138
      %v923 = vmul.f32 %v884, %v139
      %v924 = vmul.f32 %v886, %v140
      %v925 = vmul.f32 %v888, %v141
      %v926 = vmul.f32 %v890, %v142
      %v927 = vmul.f32 %v892, %v143
      %v928 = vmul.f32 %v894, %v144
      %v929 = vmul.f32 %v896, %v145
      %v930 = vmul.f32 %v898, %v146
      %v931 = vadd.f32 %v899, %v900
      %v932 = vadd.f32 %v931, %v901
      %v933 = vadd.f32 %v932, %v902
      %v934 = vadd.f32 %v933, %v903
      %v935 = vadd.f32 %v934, %v904
      %v936 = vadd.f32 %v935, %v905
      %v937 = vadd.f32 %v936, %v906
      %v938 = vadd.f32 %v937, %v907
      %v939 = vadd.f32 %v938, %v908
      %v940 = vadd.f32 %v939, %v909
      %v941 = vadd.f32 %v940, %v910
      %v942 = vadd.f32 %v941, %v911
      %v943 = vadd.f32 %v942, %v912
      %v944 = vadd.f32 %v943, %v913
      %v945 = vadd.f32 %v944, %v914
      %v946 = vadd.f32 %v945, %v915
      %v947 = vadd.f32 %v946, %v916
      %v948 = vadd.f32 %v947, %v917
      %v949 = vadd.f32 %v948, %v918
      %v950 = vadd.f32 %v949, %v919
      %v951 = vadd.f32 %v950, %v920
      %v952 = vadd.f32 %v951, %v921
      %v953 = vadd.f32 %v952, %v922
      %v954 = vadd.f32 %v953, %v923
      %v955 = vadd.f32 %v954, %v924
      %v956 = vadd.f32 %v955, %v925
      %v957 = vadd.f32 %v956, %v926
      %v958 = vadd.f32 %v957, %v927
      %v959 = vadd.f32 %v958, %v928
      %v960 = vadd.f32 %v959, %v929
      %v961 = vadd.f32 %v960, %v930
      %v962 = vmul.f32 %v961, %v961
      %963 = vadd.xlane.f32.xlu0 %v962
      %v964 = vpop.xlane.xlu0 %963
      %v965 = vrsqrt.pop %v964
      %v966 = vmul.f32 %v964, %v965
      %vm967 = vcmp.eq.f32.partialorder %v964, inf
      %v968 = vsel %vm967, %v964, %v966
      %vm969 = vcmp.eq.f32.partialorder %v964, 0.0
      %v970 = vand.u32 %v964, 2147483648
      %v971 = vsel %vm969, %v970, %v968
      %v972 = vmul.f32 %v971, %v971
      %v973 = vadd.f32 %v972, 1.0
      %v974 = vrcp.pop %v973
      %v975 = vmul.f32 %v971, %v974
      %v976 = vmul.f32 %v975, %v961
      %v977 = vmul.f32 %v115, %v976
      %v978 = vmul.f32 %v116, %v976
      %v979 = vmul.f32 %v117, %v976
      %v980 = vmul.f32 %v118, %v976
      %v981 = vmul.f32 %v119, %v976
      %v982 = vmul.f32 %v120, %v976
      %v983 = vmul.f32 %v121, %v976
      %v984 = vmul.f32 %v122, %v976
      %v985 = vmul.f32 %v123, %v976
      %v986 = vmul.f32 %v124, %v976
      %v987 = vmul.f32 %v125, %v976
      %v988 = vmul.f32 %v126, %v976
      %v989 = vmul.f32 %v127, %v976
      %v990 = vmul.f32 %v128, %v976
      %v991 = vmul.f32 %v129, %v976
      %v992 = vmul.f32 %v130, %v976
      %v993 = vmul.f32 %v131, %v976
      %v994 = vmul.f32 %v132, %v976
      %v995 = vmul.f32 %v133, %v976
      %v996 = vmul.f32 %v134, %v976
      %v997 = vmul.f32 %v135, %v976
      %v998 = vmul.f32 %v136, %v976
      %v999 = vmul.f32 %v137, %v976
      %v1000 = vmul.f32 %v138, %v976
      %v1001 = vmul.f32 %v139, %v976
      %v1002 = vmul.f32 %v140, %v976
      %v1003 = vmul.f32 %v141, %v976
      %v1004 = vmul.f32 %v142, %v976
      %v1005 = vmul.f32 %v143, %v976
      %v1006 = vmul.f32 %v144, %v976
      %v1007 = vmul.f32 %v145, %v976
      %v1008 = vmul.f32 %v146, %v976
      %1009 = vadd.xlane.f32.xlu0 %v977
      %v1010 = vpop.xlane.xlu0 %1009
      %1011 = vadd.xlane.f32.xlu0 %v978
      %v1012 = vpop.xlane.xlu0 %1011
      %1013 = vadd.xlane.f32.xlu0 %v979
      %v1014 = vpop.xlane.xlu0 %1013
      %1015 = vadd.xlane.f32.xlu0 %v980
      %v1016 = vpop.xlane.xlu0 %1015
      %1017 = vadd.xlane.f32.xlu0 %v981
      %v1018 = vpop.xlane.xlu0 %1017
      %1019 = vadd.xlane.f32.xlu0 %v982
      %v1020 = vpop.xlane.xlu0 %1019
      %1021 = vadd.xlane.f32.xlu0 %v983
      %v1022 = vpop.xlane.xlu0 %1021
      %1023 = vadd.xlane.f32.xlu0 %v984
      %v1024 = vpop.xlane.xlu0 %1023
      %1025 = vadd.xlane.f32.xlu0 %v985
      %v1026 = vpop.xlane.xlu0 %1025
      %1027 = vadd.xlane.f32.xlu0 %v986
      %v1028 = vpop.xlane.xlu0 %1027
      %1029 = vadd.xlane.f32.xlu0 %v987
      %v1030 = vpop.xlane.xlu0 %1029
      %1031 = vadd.xlane.f32.xlu0 %v988
      %v1032 = vpop.xlane.xlu0 %1031
      %1033 = vadd.xlane.f32.xlu0 %v989
      %v1034 = vpop.xlane.xlu0 %1033
      %1035 = vadd.xlane.f32.xlu0 %v990
      %v1036 = vpop.xlane.xlu0 %1035
      %1037 = vadd.xlane.f32.xlu0 %v991
      %v1038 = vpop.xlane.xlu0 %1037
      %1039 = vadd.xlane.f32.xlu0 %v992
      %v1040 = vpop.xlane.xlu0 %1039
      %1041 = vadd.xlane.f32.xlu0 %v993
      %v1042 = vpop.xlane.xlu0 %1041
      %1043 = vadd.xlane.f32.xlu0 %v994
      %v1044 = vpop.xlane.xlu0 %1043
      %1045 = vadd.xlane.f32.xlu0 %v995
      %v1046 = vpop.xlane.xlu0 %1045
      %1047 = vadd.xlane.f32.xlu0 %v996
      %v1048 = vpop.xlane.xlu0 %1047
      %1049 = vadd.xlane.f32.xlu0 %v997
      %v1050 = vpop.xlane.xlu0 %1049
      %1051 = vadd.xlane.f32.xlu0 %v998
      %v1052 = vpop.xlane.xlu0 %1051
      %1053 = vadd.xlane.f32.xlu0 %v999
      %v1054 = vpop.xlane.xlu0 %1053
      %1055 = vadd.xlane.f32.xlu0 %v1000
      %v1056 = vpop.xlane.xlu0 %1055
      %1057 = vadd.xlane.f32.xlu0 %v1001
      %v1058 = vpop.xlane.xlu0 %1057
      %1059 = vadd.xlane.f32.xlu0 %v1002
      %v1060 = vpop.xlane.xlu0 %1059
      %1061 = vadd.xlane.f32.xlu0 %v1003
      %v1062 = vpop.xlane.xlu0 %1061
      %1063 = vadd.xlane.f32.xlu0 %v1004
      %v1064 = vpop.xlane.xlu0 %1063
      %1065 = vadd.xlane.f32.xlu0 %v1005
      %v1066 = vpop.xlane.xlu0 %1065
      %1067 = vadd.xlane.f32.xlu0 %v1006
      %v1068 = vpop.xlane.xlu0 %1067
      %1069 = vadd.xlane.f32.xlu0 %v1007
      %v1070 = vpop.xlane.xlu0 %1069
      %1071 = vadd.xlane.f32.xlu0 %v1008
      %v1072 = vpop.xlane.xlu0 %1071
      %v1073 = vadd.f32 %v323, %v1010
      %v1074 = vadd.f32 %v324, %v1012
      %v1075 = vadd.f32 %v325, %v1014
      %v1076 = vadd.f32 %v326, %v1016
      %v1077 = vadd.f32 %v327, %v1018
      %v1078 = vadd.f32 %v328, %v1020
      %v1079 = vadd.f32 %v329, %v1022
      %v1080 = vadd.f32 %v330, %v1024
      %v1081 = vadd.f32 %v331, %v1026
      %v1082 = vadd.f32 %v332, %v1028
      %v1083 = vadd.f32 %v333, %v1030
      %v1084 = vadd.f32 %v334, %v1032
      %v1085 = vadd.f32 %v335, %v1034
      %v1086 = vadd.f32 %v336, %v1036
      %v1087 = vadd.f32 %v337, %v1038
      %v1088 = vadd.f32 %v338, %v1040
      %v1089 = vadd.f32 %v339, %v1042
      %v1090 = vadd.f32 %v340, %v1044
      %v1091 = vadd.f32 %v341, %v1046
      %v1092 = vadd.f32 %v342, %v1048
      %v1093 = vadd.f32 %v343, %v1050
      %v1094 = vadd.f32 %v344, %v1052
      %v1095 = vadd.f32 %v345, %v1054
      %v1096 = vadd.f32 %v346, %v1056
      %v1097 = vadd.f32 %v347, %v1058
      %v1098 = vadd.f32 %v348, %v1060
      %v1099 = vadd.f32 %v349, %v1062
      %v1100 = vadd.f32 %v350, %v1064
      %v1101 = vadd.f32 %v351, %v1066
      %v1102 = vadd.f32 %v352, %v1068
      %v1103 = vadd.f32 %v353, %v1070
      %v1104 = vadd.f32 %v354, %v1072
      %v1105 = vrot.slane %v1073, 4
      %v1106 = vmax.f32 %v1073, %v1105
      %v1107 = vrot.slane %v1106, 2
      %v1108 = vmax.f32 %v1106, %v1107
      %v1109 = vrot.slane %v1108, 1
      %v1110 = vmax.f32 %v1108, %v1109
      %v1111 = vrot.slane %v1074, 4
      %v1112 = vmax.f32 %v1074, %v1111
      %v1113 = vrot.slane %v1112, 2
      %v1114 = vmax.f32 %v1112, %v1113
      %v1115 = vrot.slane %v1114, 1
      %v1116 = vmax.f32 %v1114, %v1115
      %v1117 = vrot.slane %v1075, 4
      %v1118 = vmax.f32 %v1075, %v1117
      %v1119 = vrot.slane %v1118, 2
      %v1120 = vmax.f32 %v1118, %v1119
      %v1121 = vrot.slane %v1120, 1
      %v1122 = vmax.f32 %v1120, %v1121
      %v1123 = vrot.slane %v1076, 4
      %v1124 = vmax.f32 %v1076, %v1123
      %v1125 = vrot.slane %v1124, 2
      %v1126 = vmax.f32 %v1124, %v1125
      %v1127 = vrot.slane %v1126, 1
      %v1128 = vmax.f32 %v1126, %v1127
      %v1129 = vrot.slane %v1077, 4
      %v1130 = vmax.f32 %v1077, %v1129
      %v1131 = vrot.slane %v1130, 2
      %v1132 = vmax.f32 %v1130, %v1131
      %v1133 = vrot.slane %v1132, 1
      %v1134 = vmax.f32 %v1132, %v1133
      %v1135 = vrot.slane %v1078, 4
      %v1136 = vmax.f32 %v1078, %v1135
      %v1137 = vrot.slane %v1136, 2
      %v1138 = vmax.f32 %v1136, %v1137
      %v1139 = vrot.slane %v1138, 1
      %v1140 = vmax.f32 %v1138, %v1139
      %v1141 = vrot.slane %v1079, 4
      %v1142 = vmax.f32 %v1079, %v1141
      %v1143 = vrot.slane %v1142, 2
      %v1144 = vmax.f32 %v1142, %v1143
      %v1145 = vrot.slane %v1144, 1
      %v1146 = vmax.f32 %v1144, %v1145
      %v1147 = vrot.slane %v1080, 4
      %v1148 = vmax.f32 %v1080, %v1147
      %v1149 = vrot.slane %v1148, 2
      %v1150 = vmax.f32 %v1148, %v1149
      %v1151 = vrot.slane %v1150, 1
      %v1152 = vmax.f32 %v1150, %v1151
      %v1153 = vrot.slane %v1081, 4
      %v1154 = vmax.f32 %v1081, %v1153
      %v1155 = vrot.slane %v1154, 2
      %v1156 = vmax.f32 %v1154, %v1155
      %v1157 = vrot.slane %v1156, 1
      %v1158 = vmax.f32 %v1156, %v1157
      %v1159 = vrot.slane %v1082, 4
      %v1160 = vmax.f32 %v1082, %v1159
      %v1161 = vrot.slane %v1160, 2
      %v1162 = vmax.f32 %v1160, %v1161
      %v1163 = vrot.slane %v1162, 1
      %v1164 = vmax.f32 %v1162, %v1163
      %v1165 = vrot.slane %v1083, 4
      %v1166 = vmax.f32 %v1083, %v1165
      %v1167 = vrot.slane %v1166, 2
      %v1168 = vmax.f32 %v1166, %v1167
      %v1169 = vrot.slane %v1168, 1
      %v1170 = vmax.f32 %v1168, %v1169
      %v1171 = vrot.slane %v1084, 4
      %v1172 = vmax.f32 %v1084, %v1171
      %v1173 = vrot.slane %v1172, 2
      %v1174 = vmax.f32 %v1172, %v1173
      %v1175 = vrot.slane %v1174, 1
      %v1176 = vmax.f32 %v1174, %v1175
      %v1177 = vrot.slane %v1085, 4
      %v1178 = vmax.f32 %v1085, %v1177
      %v1179 = vrot.slane %v1178, 2
      %v1180 = vmax.f32 %v1178, %v1179
      %v1181 = vrot.slane %v1180, 1
      %v1182 = vmax.f32 %v1180, %v1181
      %v1183 = vrot.slane %v1086, 4
      %v1184 = vmax.f32 %v1086, %v1183
      %v1185 = vrot.slane %v1184, 2
      %v1186 = vmax.f32 %v1184, %v1185
      %v1187 = vrot.slane %v1186, 1
      %v1188 = vmax.f32 %v1186, %v1187
      %v1189 = vrot.slane %v1087, 4
      %v1190 = vmax.f32 %v1087, %v1189
      %v1191 = vrot.slane %v1190, 2
      %v1192 = vmax.f32 %v1190, %v1191
      %v1193 = vrot.slane %v1192, 1
      %v1194 = vmax.f32 %v1192, %v1193
      %v1195 = vrot.slane %v1088, 4
      %v1196 = vmax.f32 %v1088, %v1195
      %v1197 = vrot.slane %v1196, 2
      %v1198 = vmax.f32 %v1196, %v1197
      %v1199 = vrot.slane %v1198, 1
      %v1200 = vmax.f32 %v1198, %v1199
      %v1201 = vrot.slane %v1089, 4
      %v1202 = vmax.f32 %v1089, %v1201
      %v1203 = vrot.slane %v1202, 2
      %v1204 = vmax.f32 %v1202, %v1203
      %v1205 = vrot.slane %v1204, 1
      %v1206 = vmax.f32 %v1204, %v1205
      %v1207 = vrot.slane %v1090, 4
      %v1208 = vmax.f32 %v1090, %v1207
      %v1209 = vrot.slane %v1208, 2
      %v1210 = vmax.f32 %v1208, %v1209
      %v1211 = vrot.slane %v1210, 1
      %v1212 = vmax.f32 %v1210, %v1211
      %v1213 = vrot.slane %v1091, 4
      %v1214 = vmax.f32 %v1091, %v1213
      %v1215 = vrot.slane %v1214, 2
      %v1216 = vmax.f32 %v1214, %v1215
      %v1217 = vrot.slane %v1216, 1
      %v1218 = vmax.f32 %v1216, %v1217
      %v1219 = vrot.slane %v1092, 4
      %v1220 = vmax.f32 %v1092, %v1219
      %v1221 = vrot.slane %v1220, 2
      %v1222 = vmax.f32 %v1220, %v1221
      %v1223 = vrot.slane %v1222, 1
      %v1224 = vmax.f32 %v1222, %v1223
      %v1225 = vrot.slane %v1093, 4
      %v1226 = vmax.f32 %v1093, %v1225
      %v1227 = vrot.slane %v1226, 2
      %v1228 = vmax.f32 %v1226, %v1227
      %v1229 = vrot.slane %v1228, 1
      %v1230 = vmax.f32 %v1228, %v1229
      %v1231 = vrot.slane %v1094, 4
      %v1232 = vmax.f32 %v1094, %v1231
      %v1233 = vrot.slane %v1232, 2
      %v1234 = vmax.f32 %v1232, %v1233
      %v1235 = vrot.slane %v1234, 1
      %v1236 = vmax.f32 %v1234, %v1235
      %v1237 = vrot.slane %v1095, 4
      %v1238 = vmax.f32 %v1095, %v1237
      %v1239 = vrot.slane %v1238, 2
      %v1240 = vmax.f32 %v1238, %v1239
      %v1241 = vrot.slane %v1240, 1
      %v1242 = vmax.f32 %v1240, %v1241
      %v1243 = vrot.slane %v1096, 4
      %v1244 = vmax.f32 %v1096, %v1243
      %v1245 = vrot.slane %v1244, 2
      %v1246 = vmax.f32 %v1244, %v1245
      %v1247 = vrot.slane %v1246, 1
      %v1248 = vmax.f32 %v1246, %v1247
      %v1249 = vrot.slane %v1097, 4
      %v1250 = vmax.f32 %v1097, %v1249
      %v1251 = vrot.slane %v1250, 2
      %v1252 = vmax.f32 %v1250, %v1251
      %v1253 = vrot.slane %v1252, 1
      %v1254 = vmax.f32 %v1252, %v1253
      %v1255 = vrot.slane %v1098, 4
      %v1256 = vmax.f32 %v1098, %v1255
      %v1257 = vrot.slane %v1256, 2
      %v1258 = vmax.f32 %v1256, %v1257
      %v1259 = vrot.slane %v1258, 1
      %v1260 = vmax.f32 %v1258, %v1259
      %v1261 = vrot.slane %v1099, 4
      %v1262 = vmax.f32 %v1099, %v1261
      %v1263 = vrot.slane %v1262, 2
      %v1264 = vmax.f32 %v1262, %v1263
      %v1265 = vrot.slane %v1264, 1
      %v1266 = vmax.f32 %v1264, %v1265
      %v1267 = vrot.slane %v1100, 4
      %v1268 = vmax.f32 %v1100, %v1267
      %v1269 = vrot.slane %v1268, 2
      %v1270 = vmax.f32 %v1268, %v1269
      %v1271 = vrot.slane %v1270, 1
      %v1272 = vmax.f32 %v1270, %v1271
      %v1273 = vrot.slane %v1101, 4
      %v1274 = vmax.f32 %v1101, %v1273
      %v1275 = vrot.slane %v1274, 2
      %v1276 = vmax.f32 %v1274, %v1275
      %v1277 = vrot.slane %v1276, 1
      %v1278 = vmax.f32 %v1276, %v1277
      %v1279 = vrot.slane %v1102, 4
      %v1280 = vmax.f32 %v1102, %v1279
      %v1281 = vrot.slane %v1280, 2
      %v1282 = vmax.f32 %v1280, %v1281
      %v1283 = vrot.slane %v1282, 1
      %v1284 = vmax.f32 %v1282, %v1283
      %v1285 = vrot.slane %v1103, 4
      %v1286 = vmax.f32 %v1103, %v1285
      %v1287 = vrot.slane %v1286, 2
      %v1288 = vmax.f32 %v1286, %v1287
      %v1289 = vrot.slane %v1288, 1
      %v1290 = vmax.f32 %v1288, %v1289
      %v1291 = vrot.slane %v1104, 4
      %v1292 = vmax.f32 %v1104, %v1291
      %v1293 = vrot.slane %v1292, 2
      %v1294 = vmax.f32 %v1292, %v1293
      %v1295 = vrot.slane %v1294, 1
      %v1296 = vmax.f32 %v1294, %v1295
      %v1297 = vsub.f32 %v1073, %v1110
      %v1298 = vsub.f32 %v1074, %v1116
      %v1299 = vsub.f32 %v1075, %v1122
      %v1300 = vsub.f32 %v1076, %v1128
      %v1301 = vsub.f32 %v1077, %v1134
      %v1302 = vsub.f32 %v1078, %v1140
      %v1303 = vsub.f32 %v1079, %v1146
      %v1304 = vsub.f32 %v1080, %v1152
      %v1305 = vsub.f32 %v1081, %v1158
      %v1306 = vsub.f32 %v1082, %v1164
      %v1307 = vsub.f32 %v1083, %v1170
      %v1308 = vsub.f32 %v1084, %v1176
      %v1309 = vsub.f32 %v1085, %v1182
      %v1310 = vsub.f32 %v1086, %v1188
      %v1311 = vsub.f32 %v1087, %v1194
      %v1312 = vsub.f32 %v1088, %v1200
      %v1313 = vsub.f32 %v1089, %v1206
      %v1314 = vsub.f32 %v1090, %v1212
      %v1315 = vsub.f32 %v1091, %v1218
      %v1316 = vsub.f32 %v1092, %v1224
      %v1317 = vsub.f32 %v1093, %v1230
      %v1318 = vsub.f32 %v1094, %v1236
      %v1319 = vsub.f32 %v1095, %v1242
      %v1320 = vsub.f32 %v1096, %v1248
      %v1321 = vsub.f32 %v1097, %v1254
      %v1322 = vsub.f32 %v1098, %v1260
      %v1323 = vsub.f32 %v1099, %v1266
      %v1324 = vsub.f32 %v1100, %v1272
      %v1325 = vsub.f32 %v1101, %v1278
      %v1326 = vsub.f32 %v1102, %v1284
      %v1327 = vsub.f32 %v1103, %v1290
      %v1328 = vsub.f32 %v1104, %v1296
      %v1329 = vmul.f32 %v1297, 1.442695
      %v1330 = vpow.pop %v1329
      %v1331 = vmul.f32 %v1298, 1.442695
      %v1332 = vpow.pop %v1331
      %v1333 = vmul.f32 %v1299, 1.442695
      %v1334 = vpow.pop %v1333
      %v1335 = vmul.f32 %v1300, 1.442695
      %v1336 = vpow.pop %v1335
      %v1337 = vmul.f32 %v1301, 1.442695
      %v1338 = vpow.pop %v1337
      %v1339 = vmul.f32 %v1302, 1.442695
      %v1340 = vpow.pop %v1339
      %v1341 = vmul.f32 %v1303, 1.442695
      %v1342 = vpow.pop %v1341
      %v1343 = vmul.f32 %v1304, 1.442695
      %v1344 = vpow.pop %v1343
      %v1345 = vmul.f32 %v1305, 1.442695
      %v1346 = vpow.pop %v1345
      %v1347 = vmul.f32 %v1306, 1.442695
      %v1348 = vpow.pop %v1347
      %v1349 = vmul.f32 %v1307, 1.442695
      %v1350 = vpow.pop %v1349
      %v1351 = vmul.f32 %v1308, 1.442695
      %v1352 = vpow.pop %v1351
      %v1353 = vmul.f32 %v1309, 1.442695
      %v1354 = vpow.pop %v1353
      %v1355 = vmul.f32 %v1310, 1.442695
      %v1356 = vpow.pop %v1355
      %v1357 = vmul.f32 %v1311, 1.442695
      %v1358 = vpow.pop %v1357
      %v1359 = vmul.f32 %v1312, 1.442695
      %v1360 = vpow.pop %v1359
      %v1361 = vmul.f32 %v1313, 1.442695
      %v1362 = vpow.pop %v1361
      %v1363 = vmul.f32 %v1314, 1.442695
      %v1364 = vpow.pop %v1363
      %v1365 = vmul.f32 %v1315, 1.442695
      %v1366 = vpow.pop %v1365
      %v1367 = vmul.f32 %v1316, 1.442695
      %v1368 = vpow.pop %v1367
      %v1369 = vmul.f32 %v1317, 1.442695
      %v1370 = vpow.pop %v1369
      %v1371 = vmul.f32 %v1318, 1.442695
      %v1372 = vpow.pop %v1371
      %v1373 = vmul.f32 %v1319, 1.442695
      %v1374 = vpow.pop %v1373
      %v1375 = vmul.f32 %v1320, 1.442695
      %v1376 = vpow.pop %v1375
      %v1377 = vmul.f32 %v1321, 1.442695
      %v1378 = vpow.pop %v1377
      %v1379 = vmul.f32 %v1322, 1.442695
      %v1380 = vpow.pop %v1379
      %v1381 = vmul.f32 %v1323, 1.442695
      %v1382 = vpow.pop %v1381
      %v1383 = vmul.f32 %v1324, 1.442695
      %v1384 = vpow.pop %v1383
      %v1385 = vmul.f32 %v1325, 1.442695
      %v1386 = vpow.pop %v1385
      %v1387 = vmul.f32 %v1326, 1.442695
      %v1388 = vpow.pop %v1387
      %v1389 = vmul.f32 %v1327, 1.442695
      %v1390 = vpow.pop %v1389
      %v1391 = vmul.f32 %v1328, 1.442695
      %v1392 = vpow.pop %v1391
      %v1393 = vrot.slane %v1330, 4
      %v1394 = vadd.f32 %v1330, %v1393
      %v1395 = vrot.slane %v1394, 2
      %v1396 = vadd.f32 %v1394, %v1395
      %v1397 = vrot.slane %v1396, 1
      %v1398 = vadd.f32 %v1396, %v1397
      %v1399 = vrot.slane %v1332, 4
      %v1400 = vadd.f32 %v1332, %v1399
      %v1401 = vrot.slane %v1400, 2
      %v1402 = vadd.f32 %v1400, %v1401
      %v1403 = vrot.slane %v1402, 1
      %v1404 = vadd.f32 %v1402, %v1403
      %v1405 = vrot.slane %v1334, 4
      %v1406 = vadd.f32 %v1334, %v1405
      %v1407 = vrot.slane %v1406, 2
      %v1408 = vadd.f32 %v1406, %v1407
      %v1409 = vrot.slane %v1408, 1
      %v1410 = vadd.f32 %v1408, %v1409
      %v1411 = vrot.slane %v1336, 4
      %v1412 = vadd.f32 %v1336, %v1411
      %v1413 = vrot.slane %v1412, 2
      %v1414 = vadd.f32 %v1412, %v1413
      %v1415 = vrot.slane %v1414, 1
      %v1416 = vadd.f32 %v1414, %v1415
      %v1417 = vrot.slane %v1338, 4
      %v1418 = vadd.f32 %v1338, %v1417
      %v1419 = vrot.slane %v1418, 2
      %v1420 = vadd.f32 %v1418, %v1419
      %v1421 = vrot.slane %v1420, 1
      %v1422 = vadd.f32 %v1420, %v1421
      %v1423 = vrot.slane %v1340, 4
      %v1424 = vadd.f32 %v1340, %v1423
      %v1425 = vrot.slane %v1424, 2
      %v1426 = vadd.f32 %v1424, %v1425
      %v1427 = vrot.slane %v1426, 1
      %v1428 = vadd.f32 %v1426, %v1427
      %v1429 = vrot.slane %v1342, 4
      %v1430 = vadd.f32 %v1342, %v1429
      %v1431 = vrot.slane %v1430, 2
      %v1432 = vadd.f32 %v1430, %v1431
      %v1433 = vrot.slane %v1432, 1
      %v1434 = vadd.f32 %v1432, %v1433
      %v1435 = vrot.slane %v1344, 4
      %v1436 = vadd.f32 %v1344, %v1435
      %v1437 = vrot.slane %v1436, 2
      %v1438 = vadd.f32 %v1436, %v1437
      %v1439 = vrot.slane %v1438, 1
      %v1440 = vadd.f32 %v1438, %v1439
      %v1441 = vrot.slane %v1346, 4
      %v1442 = vadd.f32 %v1346, %v1441
      %v1443 = vrot.slane %v1442, 2
      %v1444 = vadd.f32 %v1442, %v1443
      %v1445 = vrot.slane %v1444, 1
      %v1446 = vadd.f32 %v1444, %v1445
      %v1447 = vrot.slane %v1348, 4
      %v1448 = vadd.f32 %v1348, %v1447
      %v1449 = vrot.slane %v1448, 2
      %v1450 = vadd.f32 %v1448, %v1449
      %v1451 = vrot.slane %v1450, 1
      %v1452 = vadd.f32 %v1450, %v1451
      %v1453 = vrot.slane %v1350, 4
      %v1454 = vadd.f32 %v1350, %v1453
      %v1455 = vrot.slane %v1454, 2
      %v1456 = vadd.f32 %v1454, %v1455
      %v1457 = vrot.slane %v1456, 1
      %v1458 = vadd.f32 %v1456, %v1457
      %v1459 = vrot.slane %v1352, 4
      %v1460 = vadd.f32 %v1352, %v1459
      %v1461 = vrot.slane %v1460, 2
      %v1462 = vadd.f32 %v1460, %v1461
      %v1463 = vrot.slane %v1462, 1
      %v1464 = vadd.f32 %v1462, %v1463
      %v1465 = vrot.slane %v1354, 4
      %v1466 = vadd.f32 %v1354, %v1465
      %v1467 = vrot.slane %v1466, 2
      %v1468 = vadd.f32 %v1466, %v1467
      %v1469 = vrot.slane %v1468, 1
      %v1470 = vadd.f32 %v1468, %v1469
      %v1471 = vrot.slane %v1356, 4
      %v1472 = vadd.f32 %v1356, %v1471
      %v1473 = vrot.slane %v1472, 2
      %v1474 = vadd.f32 %v1472, %v1473
      %v1475 = vrot.slane %v1474, 1
      %v1476 = vadd.f32 %v1474, %v1475
      %v1477 = vrot.slane %v1358, 4
      %v1478 = vadd.f32 %v1358, %v1477
      %v1479 = vrot.slane %v1478, 2
      %v1480 = vadd.f32 %v1478, %v1479
      %v1481 = vrot.slane %v1480, 1
      %v1482 = vadd.f32 %v1480, %v1481
      %v1483 = vrot.slane %v1360, 4
      %v1484 = vadd.f32 %v1360, %v1483
      %v1485 = vrot.slane %v1484, 2
      %v1486 = vadd.f32 %v1484, %v1485
      %v1487 = vrot.slane %v1486, 1
      %v1488 = vadd.f32 %v1486, %v1487
      %v1489 = vrot.slane %v1362, 4
      %v1490 = vadd.f32 %v1362, %v1489
      %v1491 = vrot.slane %v1490, 2
      %v1492 = vadd.f32 %v1490, %v1491
      %v1493 = vrot.slane %v1492, 1
      %v1494 = vadd.f32 %v1492, %v1493
      %v1495 = vrot.slane %v1364, 4
      %v1496 = vadd.f32 %v1364, %v1495
      %v1497 = vrot.slane %v1496, 2
      %v1498 = vadd.f32 %v1496, %v1497
      %v1499 = vrot.slane %v1498, 1
      %v1500 = vadd.f32 %v1498, %v1499
      %v1501 = vrot.slane %v1366, 4
      %v1502 = vadd.f32 %v1366, %v1501
      %v1503 = vrot.slane %v1502, 2
      %v1504 = vadd.f32 %v1502, %v1503
      %v1505 = vrot.slane %v1504, 1
      %v1506 = vadd.f32 %v1504, %v1505
      %v1507 = vrot.slane %v1368, 4
      %v1508 = vadd.f32 %v1368, %v1507
      %v1509 = vrot.slane %v1508, 2
      %v1510 = vadd.f32 %v1508, %v1509
      %v1511 = vrot.slane %v1510, 1
      %v1512 = vadd.f32 %v1510, %v1511
      %v1513 = vrot.slane %v1370, 4
      %v1514 = vadd.f32 %v1370, %v1513
      %v1515 = vrot.slane %v1514, 2
      %v1516 = vadd.f32 %v1514, %v1515
      %v1517 = vrot.slane %v1516, 1
      %v1518 = vadd.f32 %v1516, %v1517
      %v1519 = vrot.slane %v1372, 4
      %v1520 = vadd.f32 %v1372, %v1519
      %v1521 = vrot.slane %v1520, 2
      %v1522 = vadd.f32 %v1520, %v1521
      %v1523 = vrot.slane %v1522, 1
      %v1524 = vadd.f32 %v1522, %v1523
      %v1525 = vrot.slane %v1374, 4
      %v1526 = vadd.f32 %v1374, %v1525
      %v1527 = vrot.slane %v1526, 2
      %v1528 = vadd.f32 %v1526, %v1527
      %v1529 = vrot.slane %v1528, 1
      %v1530 = vadd.f32 %v1528, %v1529
      %v1531 = vrot.slane %v1376, 4
      %v1532 = vadd.f32 %v1376, %v1531
      %v1533 = vrot.slane %v1532, 2
      %v1534 = vadd.f32 %v1532, %v1533
      %v1535 = vrot.slane %v1534, 1
      %v1536 = vadd.f32 %v1534, %v1535
      %v1537 = vrot.slane %v1378, 4
      %v1538 = vadd.f32 %v1378, %v1537
      %v1539 = vrot.slane %v1538, 2
      %v1540 = vadd.f32 %v1538, %v1539
      %v1541 = vrot.slane %v1540, 1
      %v1542 = vadd.f32 %v1540, %v1541
      %v1543 = vrot.slane %v1380, 4
      %v1544 = vadd.f32 %v1380, %v1543
      %v1545 = vrot.slane %v1544, 2
      %v1546 = vadd.f32 %v1544, %v1545
      %v1547 = vrot.slane %v1546, 1
      %v1548 = vadd.f32 %v1546, %v1547
      %v1549 = vrot.slane %v1382, 4
      %v1550 = vadd.f32 %v1382, %v1549
      %v1551 = vrot.slane %v1550, 2
      %v1552 = vadd.f32 %v1550, %v1551
      %v1553 = vrot.slane %v1552, 1
      %v1554 = vadd.f32 %v1552, %v1553
      %v1555 = vrot.slane %v1384, 4
      %v1556 = vadd.f32 %v1384, %v1555
      %v1557 = vrot.slane %v1556, 2
      %v1558 = vadd.f32 %v1556, %v1557
      %v1559 = vrot.slane %v1558, 1
      %v1560 = vadd.f32 %v1558, %v1559
      %v1561 = vrot.slane %v1386, 4
      %v1562 = vadd.f32 %v1386, %v1561
      %v1563 = vrot.slane %v1562, 2
      %v1564 = vadd.f32 %v1562, %v1563
      %v1565 = vrot.slane %v1564, 1
      %v1566 = vadd.f32 %v1564, %v1565
      %v1567 = vrot.slane %v1388, 4
      %v1568 = vadd.f32 %v1388, %v1567
      %v1569 = vrot.slane %v1568, 2
      %v1570 = vadd.f32 %v1568, %v1569
      %v1571 = vrot.slane %v1570, 1
      %v1572 = vadd.f32 %v1570, %v1571
      %v1573 = vrot.slane %v1390, 4
      %v1574 = vadd.f32 %v1390, %v1573
      %v1575 = vrot.slane %v1574, 2
      %v1576 = vadd.f32 %v1574, %v1575
      %v1577 = vrot.slane %v1576, 1
      %v1578 = vadd.f32 %v1576, %v1577
      %v1579 = vrot.slane %v1392, 4
      %v1580 = vadd.f32 %v1392, %v1579
      %v1581 = vrot.slane %v1580, 2
      %v1582 = vadd.f32 %v1580, %v1581
      %v1583 = vrot.slane %v1582, 1
      %v1584 = vadd.f32 %v1582, %v1583
      %v1585 = vrcp.pop %v1398
      %v1586 = vmul.f32 %v1330, %v1585
      %v1587 = vrcp.pop %v1404
      %v1588 = vmul.f32 %v1332, %v1587
      %v1589 = vrcp.pop %v1410
      %v1590 = vmul.f32 %v1334, %v1589
      %v1591 = vrcp.pop %v1416
      %v1592 = vmul.f32 %v1336, %v1591
      %v1593 = vrcp.pop %v1422
      %v1594 = vmul.f32 %v1338, %v1593
      %v1595 = vrcp.pop %v1428
      %v1596 = vmul.f32 %v1340, %v1595
      %v1597 = vrcp.pop %v1434
      %v1598 = vmul.f32 %v1342, %v1597
      %v1599 = vrcp.pop %v1440
      %v1600 = vmul.f32 %v1344, %v1599
      %v1601 = vrcp.pop %v1446
      %v1602 = vmul.f32 %v1346, %v1601
      %v1603 = vrcp.pop %v1452
      %v1604 = vmul.f32 %v1348, %v1603
      %v1605 = vrcp.pop %v1458
      %v1606 = vmul.f32 %v1350, %v1605
      %v1607 = vrcp.pop %v1464
      %v1608 = vmul.f32 %v1352, %v1607
      %v1609 = vrcp.pop %v1470
      %v1610 = vmul.f32 %v1354, %v1609
      %v1611 = vrcp.pop %v1476
      %v1612 = vmul.f32 %v1356, %v1611
      %v1613 = vrcp.pop %v1482
      %v1614 = vmul.f32 %v1358, %v1613
      %v1615 = vrcp.pop %v1488
      %v1616 = vmul.f32 %v1360, %v1615
      %v1617 = vrcp.pop %v1494
      %v1618 = vmul.f32 %v1362, %v1617
      %v1619 = vrcp.pop %v1500
      %v1620 = vmul.f32 %v1364, %v1619
      %v1621 = vrcp.pop %v1506
      %v1622 = vmul.f32 %v1366, %v1621
      %v1623 = vrcp.pop %v1512
      %v1624 = vmul.f32 %v1368, %v1623
      %v1625 = vrcp.pop %v1518
      %v1626 = vmul.f32 %v1370, %v1625
      %v1627 = vrcp.pop %v1524
      %v1628 = vmul.f32 %v1372, %v1627
      %v1629 = vrcp.pop %v1530
      %v1630 = vmul.f32 %v1374, %v1629
      %v1631 = vrcp.pop %v1536
      %v1632 = vmul.f32 %v1376, %v1631
      %v1633 = vrcp.pop %v1542
      %v1634 = vmul.f32 %v1378, %v1633
      %v1635 = vrcp.pop %v1548
      %v1636 = vmul.f32 %v1380, %v1635
      %v1637 = vrcp.pop %v1554
      %v1638 = vmul.f32 %v1382, %v1637
      %v1639 = vrcp.pop %v1560
      %v1640 = vmul.f32 %v1384, %v1639
      %v1641 = vrcp.pop %v1566
      %v1642 = vmul.f32 %v1386, %v1641
      %v1643 = vrcp.pop %v1572
      %v1644 = vmul.f32 %v1388, %v1643
      %v1645 = vrcp.pop %v1578
      %v1646 = vmul.f32 %v1390, %v1645
      %v1647 = vrcp.pop %v1584
      %v1648 = vmul.f32 %v1392, %v1647
      %v1649 = vmul.f32 %v1586, %v115
      %v1650 = vmul.f32 %v1588, %v116
      %v1651 = vmul.f32 %v1590, %v117
      %v1652 = vmul.f32 %v1592, %v118
      %v1653 = vmul.f32 %v1594, %v119
      %v1654 = vmul.f32 %v1596, %v120
      %v1655 = vmul.f32 %v1598, %v121
      %v1656 = vmul.f32 %v1600, %v122
      %v1657 = vmul.f32 %v1602, %v123
      %v1658 = vmul.f32 %v1604, %v124
      %v1659 = vmul.f32 %v1606, %v125
      %v1660 = vmul.f32 %v1608, %v126
      %v1661 = vmul.f32 %v1610, %v127
      %v1662 = vmul.f32 %v1612, %v128
      %v1663 = vmul.f32 %v1614, %v129
      %v1664 = vmul.f32 %v1616, %v130
      %v1665 = vmul.f32 %v1618, %v131
      %v1666 = vmul.f32 %v1620, %v132
      %v1667 = vmul.f32 %v1622, %v133
      %v1668 = vmul.f32 %v1624, %v134
      %v1669 = vmul.f32 %v1626, %v135
      %v1670 = vmul.f32 %v1628, %v136
      %v1671 = vmul.f32 %v1630, %v137
      %v1672 = vmul.f32 %v1632, %v138
      %v1673 = vmul.f32 %v1634, %v139
      %v1674 = vmul.f32 %v1636, %v140
      %v1675 = vmul.f32 %v1638, %v141
      %v1676 = vmul.f32 %v1640, %v142
      %v1677 = vmul.f32 %v1642, %v143
      %v1678 = vmul.f32 %v1644, %v144
      %v1679 = vmul.f32 %v1646, %v145
      %v1680 = vmul.f32 %v1648, %v146
      %v1681 = vadd.f32 %v1649, %v1650
      %v1682 = vadd.f32 %v1681, %v1651
      %v1683 = vadd.f32 %v1682, %v1652
      %v1684 = vadd.f32 %v1683, %v1653
      %v1685 = vadd.f32 %v1684, %v1654
      %v1686 = vadd.f32 %v1685, %v1655
      %v1687 = vadd.f32 %v1686, %v1656
      %v1688 = vadd.f32 %v1687, %v1657
      %v1689 = vadd.f32 %v1688, %v1658
      %v1690 = vadd.f32 %v1689, %v1659
      %v1691 = vadd.f32 %v1690, %v1660
      %v1692 = vadd.f32 %v1691, %v1661
      %v1693 = vadd.f32 %v1692, %v1662
      %v1694 = vadd.f32 %v1693, %v1663
      %v1695 = vadd.f32 %v1694, %v1664
      %v1696 = vadd.f32 %v1695, %v1665
      %v1697 = vadd.f32 %v1696, %v1666
      %v1698 = vadd.f32 %v1697, %v1667
      %v1699 = vadd.f32 %v1698, %v1668
      %v1700 = vadd.f32 %v1699, %v1669
      %v1701 = vadd.f32 %v1700, %v1670
      %v1702 = vadd.f32 %v1701, %v1671
      %v1703 = vadd.f32 %v1702, %v1672
      %v1704 = vadd.f32 %v1703, %v1673
      %v1705 = vadd.f32 %v1704, %v1674
      %v1706 = vadd.f32 %v1705, %v1675
      %v1707 = vadd.f32 %v1706, %v1676
      %v1708 = vadd.f32 %v1707, %v1677
      %v1709 = vadd.f32 %v1708, %v1678
      %v1710 = vadd.f32 %v1709, %v1679
      %v1711 = vadd.f32 %v1710, %v1680
      %v1712 = vmul.f32 %v1711, %v1711
      %1713 = vadd.xlane.f32.xlu0 %v1712
      %v1714 = vpop.xlane.xlu0 %1713
      %v1715 = vrsqrt.pop %v1714
      %v1716 = vmul.f32 %v1714, %v1715
      %vm1717 = vcmp.eq.f32.partialorder %v1714, inf
      %v1718 = vsel %vm1717, %v1714, %v1716
      %vm1719 = vcmp.eq.f32.partialorder %v1714, 0.0
      %v1720 = vand.u32 %v1714, 2147483648
      %v1721 = vsel %vm1719, %v1720, %v1718
      %v1722 = vmul.f32 %v1721, %v1721
      %v1723 = vadd.f32 %v1722, 1.0
      %v1724 = vrcp.pop %v1723
      %v1725 = vmul.f32 %v1721, %v1724
      %v1726 = vmul.f32 %v1725, %v1711
      %1727 = vst [vmem:[%s114] sm:$0xff] %v1726
      %p1728 = scmp.lt.s32.totalorder %s12, 1
      %s1729 = scalar_select %p1728, %s12, 1
      %s1730 = smul.addr %s1729, 8
      %s1731 = scalar_lea.vmem %s1, %s1730
      // Predicated region
      $region25: #{a_call__.6} parent=23 // pred_check
        %p1732 = pneg %p56
      $region26: #{a_call__.6} parent=23 // pred_check_branch
        %1734 = sbr.rel (%p1732) target = $region28
      $region27: #{a_call__.6} parent=23 // pred_region
        _
      $region28: #{a_call__.6} parent=23 // pred_fallthru
        _
    $region24: #{a_call__.6} parent=5 // pred_fallthru
      _
    %p1735 = scmp.le.s32.totalorder 2, %s7
    // Predicated region
    $region29: #{a_call__.6} parent=5 // pred_check
      %p1736 = pneg %p1735
    $region30: #{a_call__.6} parent=5 // pred_check_branch
      %1738 = sbr.rel (%p1736) target = $region32
    $region31: #{a_call__.6} parent=5 // pred_region
      %s1739 = ssub.s32 %s7, 2
      // Predicated region
      $region33: #{a_call__.6} parent=31 // pred_check
        %p1740 = pneg %p62
      $region34: #{a_call__.6} parent=31 // pred_check_branch
        %1742 = sbr.rel (%p1740) target = $region36
      $region35: #{a_call__.6} parent=31 // pred_region
        %p1743 = scmp.lt.s32.totalorder %s13, 1
        %s1744 = scalar_select %p1743, %s13, 1
        %s1745 = smul.addr %s1744, 8
        %s1746 = scalar_lea.vmem %s1, %s1745
      $region36: #{a_call__.6} parent=31 // pred_fallthru
        _
    $region32: #{a_call__.6} parent=5 // pred_fallthru
      _
  $region6: #{a_call__.6} parent=0 // loop_footer
    %s11 = sadd.s32 1, %s7
  $region7: #{a_call__.6} parent=0 // loop_footer_branch
    %6 = sbr.rel target = $region3
  $region8: #{a_call__.6} parent=0 // loop_exit
    _

// kernel: a_call__.5
$region0: #{a_call__.5}
  #allocation0 [shape = 'u32[]', space=smem, size = 0x4, offset = 0x4, fixed_abs, tag = 'smem constant byte address 0x4 - core index']
  #allocation1 [shape = 'u32[144,128]{1,0:T(1,128)}', space=vmem, size = 0x12000, scoped, tag = 'internal scratch']
  %s0 = inlined_call_operand.vmem [shape: f32[32,2,32], index: 0, kind: input, shape index: {}]
  %s1 = inlined_call_operand.hbm [shape: f32[32,32,1024], index: 1, kind: input, shape index: {}]
  %s2 = inlined_call_operand.vmem [shape: f32[32,2,1024], index: 2, kind: output, shape index: {}]
  %s3 = sld [smem:[#allocation0]]
  $region45: #{a_call__.5} parent=0
    _
  %s5 = ssub.s32 1, %s3
  %s6 = scalar_select 0, %s5, %s3
  $region1: #{a_call__.5} parent=0
    #allocation2 [shape = 'u8[2097152]{0}', space=vmem, size = 0x200000, scoped, tag = 'input window, operand 1']
    #allocation3 [shape = 's32[2]{0}', space=sflag, size = 0x8, scoped, tag = 'scoped memory for a_call__.5']
    %7 = vsyncpa [#allocation3], 0
    %s8 = scalar_lea.sflag [#allocation3], 1
    %9 = vsyncpa %s8, 0
    loop: start=0, step=1, limit=6
    $region2: #{a_call__.5} parent=1 // loop_pre_header
      _
    $region3: #{a_call__.5} parent=1 // loop_header
      %s11 = sphi 0, %s15
      %p12 = scmp.ge.s32.totalorder %s11, 6
      %s21 = sphi 0, %s23
      %s24 = sphi 0, %s21
      %s25 = sphi 0, %s24
      %s41 = sphi 0, %s25
      %s47 = sphi 0, %s49
      %s50 = sphi 0, %s47
      %s51 = sphi 0, %s50
      %s67 = sphi 0, %s51
      %s73 = sphi 0, %s75
      %s76 = sphi 0, %s73
      %s77 = sphi 0, %s76
      %s93 = sphi 0, %s77
    $region4: #{a_call__.5} parent=1 // loop_header_branch
      %14 = sbr.rel (%p12) target = $region8
    $region5: #{a_call__.5} parent=1 // loop_body
      %s16 = ssub.s32 %s11, 1
      %s17 = ssub.s32 %s11, 2
      %s18 = sadd.s32 %s11, 1
      %s19 = ssub.s32 %s11, %s18
      %p20 = scmp.eq.s32.totalorder %s19, 0
      %s22 = sadd.s32 %s21, 1
      %s23 = scalar_select %p20, %s21, %s22
      %p26 = pneg %p20
      %p27 = scmp.eq.s32.totalorder %s11, 3
      %p28 = por %p26, %p27
      %p29 = scmp.ne.s32.totalorder %s21, %s24
      %p30 = scmp.eq.s32.totalorder %s11, 0
      %p31 = por %p29, %p30
      %p32 = scmp.ne.s32.totalorder %s21, %s24
      %p33 = scmp.eq.s32.totalorder %s16, 3
      %p34 = por %p32, %p33
      %p35 = scmp.ne.s32.totalorder %s24, %s25
      %p36 = scmp.eq.s32.totalorder %s16, 0
      %p37 = por %p35, %p36
      %p38 = scmp.ne.s32.totalorder %s24, %s25
      %p39 = scmp.eq.s32.totalorder %s17, 3
      %p40 = por %p38, %p39
      %p42 = scmp.ne.s32.totalorder %s25, %s41
      %p43 = scmp.eq.s32.totalorder %s17, 0
      %p44 = por %p42, %p43
      %s45 = ssub.s32 %s11, %s18
      %p46 = scmp.eq.s32.totalorder %s45, 0
      %s48 = sadd.s32 %s47, 1
      %s49 = scalar_select %p46, %s47, %s48
      %p52 = pneg %p46
      %p53 = scmp.eq.s32.totalorder %s11, 3
      %p54 = por %p52, %p53
      %p55 = scmp.ne.s32.totalorder %s47, %s50
      %p56 = scmp.eq.s32.totalorder %s11, 0
      %p57 = por %p55, %p56
      %p58 = scmp.ne.s32.totalorder %s47, %s50
      %p59 = scmp.eq.s32.totalorder %s16, 3
      %p60 = por %p58, %p59
      %p61 = scmp.ne.s32.totalorder %s50, %s51
      %p62 = scmp.eq.s32.totalorder %s16, 0
      %p63 = por %p61, %p62
      %p64 = scmp.ne.s32.totalorder %s50, %s51
      %p65 = scmp.eq.s32.totalorder %s17, 3
      %p66 = por %p64, %p65
      %p68 = scmp.ne.s32.totalorder %s51, %s67
      %p69 = scmp.eq.s32.totalorder %s17, 0
      %p70 = por %p68, %p69
      %s71 = ssub.s32 %s11, %s18
      %p72 = scmp.eq.s32.totalorder %s71, 0
      %s74 = sadd.s32 %s73, 1
      %s75 = scalar_select %p72, %s73, %s74
      %p78 = pneg %p72
      %p79 = scmp.eq.s32.totalorder %s11, 3
      %p80 = por %p78, %p79
      %p81 = scmp.ne.s32.totalorder %s73, %s76
      %p82 = scmp.eq.s32.totalorder %s11, 0
      %p83 = por %p81, %p82
      %p84 = scmp.ne.s32.totalorder %s73, %s76
      %p85 = scmp.eq.s32.totalorder %s16, 3
      %p86 = por %p84, %p85
      %p87 = scmp.ne.s32.totalorder %s76, %s77
      %p88 = scmp.eq.s32.totalorder %s16, 0
      %p89 = por %p87, %p88
      %p90 = scmp.ne.s32.totalorder %s76, %s77
      %p91 = scmp.eq.s32.totalorder %s17, 3
      %p92 = por %p90, %p91
      %p94 = scmp.ne.s32.totalorder %s77, %s93
      %p95 = scmp.eq.s32.totalorder %s17, 0
      %p96 = por %p94, %p95
      %p97 = scmp.le.s32.totalorder 1, %s11
      %p98 = scmp.lt.s32.totalorder %s11, 5
      %p99 = pnand %p97, %p98
      %p100 = pneg %p99
      // Predicated region
      $region9: #{a_call__.5} parent=5 // pred_check
        _
      $region10: #{a_call__.5} parent=5 // pred_check_branch
        %102 = sbr.rel (%p99) target = $region12
      $region11: #{a_call__.5} parent=5 // pred_region
        %s103 = ssub.s32 %s11, 1
      $region12: #{a_call__.5} parent=5 // pred_fallthru
        _
      %p104 = scmp.lt.s32.totalorder %s11, 4
      // Predicated region
      $region13: #{a_call__.5} parent=5 // pred_check
        %p105 = pneg %p104
      $region14: #{a_call__.5} parent=5 // pred_check_branch
        %107 = sbr.rel (%p105) target = $region16
      $region15: #{a_call__.5} parent=5 // pred_region
        // Predicated region
        $region17: #{a_call__.5} parent=15 // pred_check
          %p108 = pneg %p31
        $region18: #{a_call__.5} parent=15 // pred_check_branch
          %110 = sbr.rel (%p108) target = $region20
        $region19: #{a_call__.5} parent=15 // pred_region
          %s111 = smul.u32 8, %s11
          %p112 = scmp.lt.s32.totalorder %s111, 31
          %s113 = scalar_select %p112, %s111, 31
          %s114 = smul.addr %s113, 2
          %s115 = scalar_lea.vmem %s0, %s114
          %s116 = smul.u32 8, %s11
        $region20: #{a_call__.5} parent=15 // pred_fallthru
          _
        // Predicated region
        $region21: #{a_call__.5} parent=15 // pred_check
          %p117 = pneg %p57
        $region22: #{a_call__.5} parent=15 // pred_check_branch
          %119 = sbr.rel (%p117) target = $region24
        $region23: #{a_call__.5} parent=15 // pred_region
          %s120 = sand.u32 %s47, 1
          %s121 = scalar_lea.sflag [#allocation3], %s120
          %s122 = sand.u32 %s47, 1
          %s123 = smul.addr %s122, 2048
          %s124 = scalar_lea.vmem [#allocation2], %s123
          %s125 = smul.u32 8, %s11
          %s127 = ssub.s32 32768, 32768
          %128 = vsyncadd %s121, %s127
          %s129 = smul.addr %s125, 32
          %s130 = smul.addr %s129, 128
          %s131 = scalar_lea.hbm %s1, %s130
          %s132 = sshll.u32 %s124, 4
          %s133 = int_to_ptr.vmem [resolvable:$true] %s132
          %138 = dma.hbm_to_vmem [thread:$0]  %s131, 32768, %s133, %s121, 1024, 1024, 64
        $region24: #{a_call__.5} parent=15 // pred_fallthru
          _
      $region16: #{a_call__.5} parent=5 // pred_fallthru
        _
      %p139 = scmp.le.s32.totalorder 1, %s11
      %p140 = scmp.lt.s32.totalorder %s11, 5
      %p141 = pnand %p139, %p140
      %p142 = pneg %p141
      // Predicated region
      $region25: #{a_call__.5} parent=5 // pred_check
        _
      $region26: #{a_call__.5} parent=5 // pred_check_branch
        %144 = sbr.rel (%p141) target = $region28
      $region27: #{a_call__.5} parent=5 // pred_region
        %s145 = ssub.s32 %s11, 1
        %s146 = sand.u32 %s50, 1
        %s147 = scalar_lea.sflag [#allocation3], %s146
        %s148 = sand.u32 %s50, 1
        %s149 = smul.addr %s148, 2048
        %s150 = scalar_lea.vmem [#allocation2], %s149
        // Predicated region
        $region29: #{a_call__.5} parent=27 // pred_check
          %p151 = pneg %p63
        $region30: #{a_call__.5} parent=27 // pred_check_branch
          %153 = sbr.rel (%p151) target = $region32
        $region31: #{a_call__.5} parent=27 // pred_region
          %154 = dma.done %s147, 32768
        $region32: #{a_call__.5} parent=27 // pred_fallthru
          _
        %s155 = smul.u32 8, %s16
        %p156 = scmp.lt.s32.totalorder %s155, 31
        %s157 = scalar_select %p156, %s155, 31
        %s158 = smul.addr %s157, 2
        %s159 = scalar_lea.vmem %s0, %s158
        %p160 = pneg %p37
        %p161 = pneg %p34
        %s162 = sand.u32 %s50, 1
        %s163 = scalar_lea.sflag [#allocation3], %s162
        %s164 = sand.u32 %s50, 1
        %s165 = smul.addr %s164, 2048
        %s166 = scalar_lea.vmem [#allocation2], %s165
        %p167 = pneg %p63
        %p168 = pneg %p60
        %p169 = pneg %p89
        %p170 = pneg %p86
        %s171 = smul.u32 8, %s16
        %p172 = scmp.lt.s32.totalorder %s171, 31
        %s173 = scalar_select %p172, %s171, 31
        %s174 = smul.addr %s173, 8
        %s175 = smul.addr %s174, 2
        %s176 = scalar_lea.vmem %s2, %s175
        %s177 = smul.u32 8, %s16
        %p178 = scmp.lt.s32.totalorder %s177, 31
        %s179 = scalar_select %p178, %s177, 31
        %s180 = smul.addr %s179, 2
        %s181 = scalar_lea.vmem %s0, %s180
        %s182 = smul.u32 8, %s16
        %s183 = smul.u32 8, %s16
        %s184 = smul.u32 8, %s16
        %p185 = scmp.lt.s32.totalorder %s184, 31
        %s186 = scalar_select %p185, %s184, 31
        %s187 = smul.addr %s186, 8
        %s188 = smul.addr %s187, 2
        %s189 = scalar_lea.vmem %s2, %s188
        %s190 = smul.u32 8, %s16
        %v191 = vld [vmem:[%s181] sm:$0x3]
        %v192 = vld [vmem:[%s150] sm:$0xff]
        %v193 = vld [vmem:[%s150 + $0x8] sm:$0xff]
        %v194 = vld [vmem:[%s150 + $0x10] sm:$0xff]
        %v195 = vld [vmem:[%s150 + $0x18] sm:$0xff]
        %v196 = vld [vmem:[%s150 + $0x20] sm:$0xff]
        %v197 = vld [vmem:[%s150 + $0x28] sm:$0xff]
        %v198 = vld [vmem:[%s150 + $0x30] sm:$0xff]
        %v199 = vld [vmem:[%s150 + $0x38] sm:$0xff]
        %v200 = vld [vmem:[%s150 + $0x40] sm:$0xff]
        %v201 = vld [vmem:[%s150 + $0x48] sm:$0xff]
        %v202 = vld [vmem:[%s150 + $0x50] sm:$0xff]
        %v203 = vld [vmem:[%s150 + $0x58] sm:$0xff]
        %v204 = vld [vmem:[%s150 + $0x60] sm:$0xff]
        %v205 = vld [vmem:[%s150 + $0x68] sm:$0xff]
        %v206 = vld [vmem:[%s150 + $0x70] sm:$0xff]
        %v207 = vld [vmem:[%s150 + $0x78] sm:$0xff]
        %v208 = vld [vmem:[%s150 + $0x80] sm:$0xff]
        %v209 = vld [vmem:[%s150 + $0x88] sm:$0xff]
        %v210 = vld [vmem:[%s150 + $0x90] sm:$0xff]
        %v211 = vld [vmem:[%s150 + $0x98] sm:$0xff]
        %v212 = vld [vmem:[%s150 + $0xa0] sm:$0xff]
        %v213 = vld [vmem:[%s150 + $0xa8] sm:$0xff]
        %v214 = vld [vmem:[%s150 + $0xb0] sm:$0xff]
        %v215 = vld [vmem:[%s150 + $0xb8] sm:$0xff]
        %v216 = vld [vmem:[%s150 + $0xc0] sm:$0xff]
        %v217 = vld [vmem:[%s150 + $0xc8] sm:$0xff]
        %v218 = vld [vmem:[%s150 + $0xd0] sm:$0xff]
        %v219 = vld [vmem:[%s150 + $0xd8] sm:$0xff]
        %v220 = vld [vmem:[%s150 + $0xe0] sm:$0xff]
        %v221 = vld [vmem:[%s150 + $0xe8] sm:$0xff]
        %v222 = vld [vmem:[%s150 + $0xf0] sm:$0xff]
        %v223 = vld [vmem:[%s150 + $0xf8] sm:$0xff]
        %vm224 = vcmask 261120
        %v226 = vsel %vm224, %v191, 0
        %228 = vmatprep.subr.mxu0 0.0
        %229 = vmatpush1.msra.mxu0 0.0
        %230 = vmatprep.subr.mxu0 0.0
        %231 = vmatpush1.msra.mxu0 0.0
        %232 = vmatprep.subr.mxu0 0.0
        %233 = vmatpush1.msra.mxu0 0.0
        %234 = vmatprep.subr.mxu0 0.0
        %235 = vmatpush1.msra.mxu0 0.0
        %236 = vmatprep.subr.mxu0 0.0
        %237 = vmatpush1.msra.mxu0 0.0
        %238 = vmatprep.subr.mxu0 0.0
        %239 = vmatpush1.msra.mxu0 0.0
        %240 = vmatprep.subr.mxu0 0.0
        %241 = vmatpush1.msra.mxu0 0.0
        %242 = vmatprep.subr.mxu0 0.0
        %243 = vmatpush1.msra.mxu0 0.0
        %244 = vmatprep.subr.mxu0 0.0
        %245 = vmatpush1.msra.mxu0 0.0
        %246 = vmatprep.subr.mxu0 0.0
        %247 = vmatpush1.msra.mxu0 0.0
        %248 = vmatprep.subr.mxu0 0.0
        %249 = vmatpush1.msra.mxu0 0.0
        %250 = vmatprep.subr.mxu0 0.0
        %251 = vmatpush1.msra.mxu0 0.0
        %252 = vmatprep.subr.mxu0 %v217
        %253 = vmatpush1.msra.mxu0 %v216
        %254 = vmatprep.subr.mxu0 %v209
        %255 = vmatpush1.msra.mxu0 %v208
        %256 = vmatprep.subr.mxu0 %v201
        %257 = vmatpush1.msra.mxu0 %v200
        %258 = vmatprep.subr.mxu0 %v193
        %259 = vmatpush1.msra.mxu0 %v192
        %260 = vmatprep.subr.mxu0 0.0
        %261 = vmatpush2.msra.mxu0 0.0
        %262 = vmatprep.subr.mxu0 0.0
        %263 = vmatpush2.msra.mxu0 0.0
        %264 = vmatprep.subr.mxu0 0.0
        %265 = vmatpush2.msra.mxu0 0.0
        %266 = vmatprep.subr.mxu0 0.0
        %267 = vmatpush2.msra.mxu0 0.0
        %268 = vmatprep.subr.mxu0 0.0
        %269 = vmatpush2.msra.mxu0 0.0
        %270 = vmatprep.subr.mxu0 0.0
        %271 = vmatpush2.msra.mxu0 0.0
        %272 = vmatprep.subr.mxu0 0.0
        %273 = vmatpush2.msra.mxu0 0.0
        %274 = vmatprep.subr.mxu0 0.0
        %275 = vmatpush2.msra.mxu0 0.0
        %276 = vmatprep.subr.mxu0 0.0
        %277 = vmatpush2.msra.mxu0 0.0
        %278 = vmatprep.subr.mxu0 0.0
        %279 = vmatpush2.msra.mxu0 0.0
        %280 = vmatprep.subr.mxu0 0.0
        %281 = vmatpush2.msra.mxu0 0.0
        %282 = vmatprep.subr.mxu0 0.0
        %283 = vmatpush2.msra.mxu0 0.0
        %284 = vmatprep.subr.mxu0 0.0
        %285 = vmatpush2.msra.mxu0 0.0
        %286 = vmatprep.subr.mxu0 0.0
        %287 = vmatpush2.msra.mxu0 0.0
        %288 = vmatprep.subr.mxu0 0.0
        %289 = vmatpush2.msra.mxu0 0.0
        %290 = vmatprep.subr.mxu0 0.0
        %291 = vmatpush2.msra.mxu0 0.0
        %292 = vmatprep.mubr.f32.mxu0 0.0
        %293 = vmatmul.mubr.f32.gmra.mxu0 %v226
        %v294 = vpop.f32.mrf.mxu0
        %v295 = vadd.f32 0.0, %v294
        %v296 = vpop.f32.mrf.mxu0
        %v297 = vadd.f32 0.0, %v296
        %298 = vdwg.mxu0
        %299 = vmatprep.subr.mxu0 0.0
        %300 = vmatpush1.msra.mxu0 0.0
        %301 = vmatprep.subr.mxu0 0.0
        %302 = vmatpush1.msra.mxu0 0.0
        %303 = vmatprep.subr.mxu0 0.0
        %304 = vmatpush1.msra.mxu0 0.0
        %305 = vmatprep.subr.mxu0 0.0
        %306 = vmatpush1.msra.mxu0 0.0
        %307 = vmatprep.subr.mxu0 0.0
        %308 = vmatpush1.msra.mxu0 0.0
        %309 = vmatprep.subr.mxu0 0.0
        %310 = vmatpush1.msra.mxu0 0.0
        %311 = vmatprep.subr.mxu0 0.0
        %312 = vmatpush1.msra.mxu0 0.0
        %313 = vmatprep.subr.mxu0 0.0
        %314 = vmatpush1.msra.mxu0 0.0
        %315 = vmatprep.subr.mxu0 0.0
        %316 = vmatpush1.msra.mxu0 0.0
        %317 = vmatprep.subr.mxu0 0.0
        %318 = vmatpush1.msra.mxu0 0.0
        %319 = vmatprep.subr.mxu0 0.0
        %320 = vmatpush1.msra.mxu0 0.0
        %321 = vmatprep.subr.mxu0 0.0
        %322 = vmatpush1.msra.mxu0 0.0
        %323 = vmatprep.subr.mxu0 %v219
        %324 = vmatpush1.msra.mxu0 %v218
        %325 = vmatprep.subr.mxu0 %v211
        %326 = vmatpush1.msra.mxu0 %v210
        %327 = vmatprep.subr.mxu0 %v203
        %328 = vmatpush1.msra.mxu0 %v202
        %329 = vmatprep.subr.mxu0 %v195
        %330 = vmatpush1.msra.mxu0 %v194
        %331 = vmatprep.subr.mxu0 0.0
        %332 = vmatpush2.msra.mxu0 0.0
        %333 = vmatprep.subr.mxu0 0.0
        %334 = vmatpush2.msra.mxu0 0.0
        %335 = vmatprep.subr.mxu0 0.0
        %336 = vmatpush2.msra.mxu0 0.0
        %337 = vmatprep.subr.mxu0 0.0
        %338 = vmatpush2.msra.mxu0 0.0
        %339 = vmatprep.subr.mxu0 0.0
        %340 = vmatpush2.msra.mxu0 0.0
        %341 = vmatprep.subr.mxu0 0.0
        %342 = vmatpush2.msra.mxu0 0.0
        %343 = vmatprep.subr.mxu0 0.0
        %344 = vmatpush2.msra.mxu0 0.0
        %345 = vmatprep.subr.mxu0 0.0
        %346 = vmatpush2.msra.mxu0 0.0
        %347 = vmatprep.subr.mxu0 0.0
        %348 = vmatpush2.msra.mxu0 0.0
        %349 = vmatprep.subr.mxu0 0.0
        %350 = vmatpush2.msra.mxu0 0.0
        %351 = vmatprep.subr.mxu0 0.0
        %352 = vmatpush2.msra.mxu0 0.0
        %353 = vmatprep.subr.mxu0 0.0
        %354 = vmatpush2.msra.mxu0 0.0
        %355 = vmatprep.subr.mxu0 0.0
        %356 = vmatpush2.msra.mxu0 0.0
        %357 = vmatprep.subr.mxu0 0.0
        %358 = vmatpush2.msra.mxu0 0.0
        %359 = vmatprep.subr.mxu0 0.0
        %360 = vmatpush2.msra.mxu0 0.0
        %361 = vmatprep.subr.mxu0 0.0
        %362 = vmatpush2.msra.mxu0 0.0
        %363 = vmatprep.mubr.f32.mxu0 0.0
        %364 = vmatmul.mubr.f32.gmra.mxu0 %v226
        %v365 = vpop.f32.mrf.mxu0
        %v366 = vadd.f32 0.0, %v365
        %v367 = vpop.f32.mrf.mxu0
        %v368 = vadd.f32 0.0, %v367
        %369 = vdwg.mxu0
        %370 = vmatprep.subr.mxu0 0.0
        %371 = vmatpush1.msra.mxu0 0.0
        %372 = vmatprep.subr.mxu0 0.0
        %373 = vmatpush1.msra.mxu0 0.0
        %374 = vmatprep.subr.mxu0 0.0
        %375 = vmatpush1.msra.mxu0 0.0
        %376 = vmatprep.subr.mxu0 0.0
        %377 = vmatpush1.msra.mxu0 0.0
        %378 = vmatprep.subr.mxu0 0.0
        %379 = vmatpush1.msra.mxu0 0.0
        %380 = vmatprep.subr.mxu0 0.0
        %381 = vmatpush1.msra.mxu0 0.0
        %382 = vmatprep.subr.mxu0 0.0
        %383 = vmatpush1.msra.mxu0 0.0
        %384 = vmatprep.subr.mxu0 0.0
        %385 = vmatpush1.msra.mxu0 0.0
        %386 = vmatprep.subr.mxu0 0.0
        %387 = vmatpush1.msra.mxu0 0.0
        %388 = vmatprep.subr.mxu0 0.0
        %389 = vmatpush1.msra.mxu0 0.0
        %390 = vmatprep.subr.mxu0 0.0
        %391 = vmatpush1.msra.mxu0 0.0
        %392 = vmatprep.subr.mxu0 0.0
        %393 = vmatpush1.msra.mxu0 0.0
        %394 = vmatprep.subr.mxu0 %v221
        %395 = vmatpush1.msra.mxu0 %v220
        %396 = vmatprep.subr.mxu0 %v213
        %397 = vmatpush1.msra.mxu0 %v212
        %398 = vmatprep.subr.mxu0 %v205
        %399 = vmatpush1.msra.mxu0 %v204
        %400 = vmatprep.subr.mxu0 %v197
        %401 = vmatpush1.msra.mxu0 %v196
        %402 = vmatprep.subr.mxu0 0.0
        %403 = vmatpush2.msra.mxu0 0.0
        %404 = vmatprep.subr.mxu0 0.0
        %405 = vmatpush2.msra.mxu0 0.0
        %406 = vmatprep.subr.mxu0 0.0
        %407 = vmatpush2.msra.mxu0 0.0
        %408 = vmatprep.subr.mxu0 0.0
        %409 = vmatpush2.msra.mxu0 0.0
        %410 = vmatprep.subr.mxu0 0.0
        %411 = vmatpush2.msra.mxu0 0.0
        %412 = vmatprep.subr.mxu0 0.0
        %413 = vmatpush2.msra.mxu0 0.0
        %414 = vmatprep.subr.mxu0 0.0
        %415 = vmatpush2.msra.mxu0 0.0
        %416 = vmatprep.subr.mxu0 0.0
        %417 = vmatpush2.msra.mxu0 0.0
        %418 = vmatprep.subr.mxu0 0.0
        %419 = vmatpush2.msra.mxu0 0.0
        %420 = vmatprep.subr.mxu0 0.0
        %421 = vmatpush2.msra.mxu0 0.0
        %422 = vmatprep.subr.mxu0 0.0
        %423 = vmatpush2.msra.mxu0 0.0
        %424 = vmatprep.subr.mxu0 0.0
        %425 = vmatpush2.msra.mxu0 0.0
        %426 = vmatprep.subr.mxu0 0.0
        %427 = vmatpush2.msra.mxu0 0.0
        %428 = vmatprep.subr.mxu0 0.0
        %429 = vmatpush2.msra.mxu0 0.0
        %430 = vmatprep.subr.mxu0 0.0
        %431 = vmatpush2.msra.mxu0 0.0
        %432 = vmatprep.subr.mxu0 0.0
        %433 = vmatpush2.msra.mxu0 0.0
        %434 = vmatprep.mubr.f32.mxu0 0.0
        %435 = vmatmul.mubr.f32.gmra.mxu0 %v226
        %v436 = vpop.f32.mrf.mxu0
        %v437 = vadd.f32 0.0, %v436
        %v438 = vpop.f32.mrf.mxu0
        %v439 = vadd.f32 0.0, %v438
        %440 = vdwg.mxu0
        %441 = vmatprep.subr.mxu0 0.0
        %442 = vmatpush1.msra.mxu0 0.0
        %443 = vmatprep.subr.mxu0 0.0
        %444 = vmatpush1.msra.mxu0 0.0
        %445 = vmatprep.subr.mxu0 0.0
        %446 = vmatpush1.msra.mxu0 0.0
        %447 = vmatprep.subr.mxu0 0.0
        %448 = vmatpush1.msra.mxu0 0.0
        %449 = vmatprep.subr.mxu0 0.0
        %450 = vmatpush1.msra.mxu0 0.0
        %451 = vmatprep.subr.mxu0 0.0
        %452 = vmatpush1.msra.mxu0 0.0
        %453 = vmatprep.subr.mxu0 0.0
        %454 = vmatpush1.msra.mxu0 0.0
        %455 = vmatprep.subr.mxu0 0.0
        %456 = vmatpush1.msra.mxu0 0.0
        %457 = vmatprep.subr.mxu0 0.0
        %458 = vmatpush1.msra.mxu0 0.0
        %459 = vmatprep.subr.mxu0 0.0
        %460 = vmatpush1.msra.mxu0 0.0
        %461 = vmatprep.subr.mxu0 0.0
        %462 = vmatpush1.msra.mxu0 0.0
        %463 = vmatprep.subr.mxu0 0.0
        %464 = vmatpush1.msra.mxu0 0.0
        %465 = vmatprep.subr.mxu0 %v223
        %466 = vmatpush1.msra.mxu0 %v222
        %467 = vmatprep.subr.mxu0 %v215
        %468 = vmatpush1.msra.mxu0 %v214
        %469 = vmatprep.subr.mxu0 %v207
        %470 = vmatpush1.msra.mxu0 %v206
        %471 = vmatprep.subr.mxu0 %v199
        %472 = vmatpush1.msra.mxu0 %v198
        %473 = vmatprep.subr.mxu0 0.0
        %474 = vmatpush2.msra.mxu0 0.0
        %475 = vmatprep.subr.mxu0 0.0
        %476 = vmatpush2.msra.mxu0 0.0
        %477 = vmatprep.subr.mxu0 0.0
        %478 = vmatpush2.msra.mxu0 0.0
        %479 = vmatprep.subr.mxu0 0.0
        %480 = vmatpush2.msra.mxu0 0.0
        %481 = vmatprep.subr.mxu0 0.0
        %482 = vmatpush2.msra.mxu0 0.0
        %483 = vmatprep.subr.mxu0 0.0
        %484 = vmatpush2.msra.mxu0 0.0
        %485 = vmatprep.subr.mxu0 0.0
        %486 = vmatpush2.msra.mxu0 0.0
        %487 = vmatprep.subr.mxu0 0.0
        %488 = vmatpush2.msra.mxu0 0.0
        %489 = vmatprep.subr.mxu0 0.0
        %490 = vmatpush2.msra.mxu0 0.0
        %491 = vmatprep.subr.mxu0 0.0
        %492 = vmatpush2.msra.mxu0 0.0
        %493 = vmatprep.subr.mxu0 0.0
        %494 = vmatpush2.msra.mxu0 0.0
        %495 = vmatprep.subr.mxu0 0.0
        %496 = vmatpush2.msra.mxu0 0.0
        %497 = vmatprep.subr.mxu0 0.0
        %498 = vmatpush2.msra.mxu0 0.0
        %499 = vmatprep.subr.mxu0 0.0
        %500 = vmatpush2.msra.mxu0 0.0
        %501 = vmatprep.subr.mxu0 0.0
        %502 = vmatpush2.msra.mxu0 0.0
        %503 = vmatprep.subr.mxu0 0.0
        %504 = vmatpush2.msra.mxu0 0.0
        %505 = vmatprep.mubr.f32.mxu0 0.0
        %506 = vmatmul.mubr.f32.gmra.mxu0 %v226
        %v507 = vpop.f32.mrf.mxu0
        %v508 = vadd.f32 0.0, %v507
        %v509 = vpop.f32.mrf.mxu0
        %v510 = vadd.f32 0.0, %v509
        %511 = vdwg.mxu0
        %v520 = vcombine.low %v295, %v297
        %v521 = vcombine.low %v366, %v368
        %v523 = vunpack.c.l.s4 1983009808
        %v524 = vunpack.c.0.s8 %v523
        %v525 = vlaneseq
        %v526 = vshrl.u32 %v525, 7
        %v527 = vsub.s32 %v524, %v526
        %v528 = vrot.slane %v520, %v527
        %v530 = vunpack.c.l.s4 1983009808
        %v531 = vunpack.c.0.s8 %v530
        %v532 = vlaneseq
        %v533 = vshrl.u32 %v532, 7
        %v534 = vsub.s32 %v531, %v533
        %v535 = vrot.slane %v521, %v534
        %v536 = vcombine.low %v528, %v535
        %v537 = vcombine.low %v437, %v439
        %v538 = vcombine.low %v508, %v510
        %v540 = vunpack.c.l.s4 1983009808
        %v541 = vunpack.c.0.s8 %v540
        %v542 = vlaneseq
        %v543 = vshrl.u32 %v542, 7
        %v544 = vsub.s32 %v541, %v543
        %v545 = vrot.slane %v537, %v544
        %v547 = vunpack.c.l.s4 1983009808
        %v548 = vunpack.c.0.s8 %v547
        %v549 = vlaneseq
        %v550 = vshrl.u32 %v549, 7
        %v551 = vsub.s32 %v548, %v550
        %v552 = vrot.slane %v538, %v551
        %v553 = vcombine.low %v545, %v552
        %556 = vst [vmem:[%s189] sm:$0xff] %v536
        %557 = vst [vmem:[%s189 + $0x8] sm:$0xff] %v553
        %s558 = scalar_lea.vmem %s181, 2
        %v559 = vld [vmem:[%s558] sm:$0x3]
        %s560 = scalar_lea.vmem %s150, 256 [#allocation2]
        %v561 = vld [vmem:[%s560] sm:$0xff]
        %v562 = vld [vmem:[%s560 + $0x8] sm:$0xff]
        %v563 = vld [vmem:[%s560 + $0x10] sm:$0xff]
        %v564 = vld [vmem:[%s560 + $0x18] sm:$0xff]
        %v565 = vld [vmem:[%s560 + $0x20] sm:$0xff]
        %v566 = vld [vmem:[%s560 + $0x28] sm:$0xff]
        %v567 = vld [vmem:[%s560 + $0x30] sm:$0xff]
        %v568 = vld [vmem:[%s560 + $0x38] sm:$0xff]
        %v569 = vld [vmem:[%s560 + $0x40] sm:$0xff]
        %v570 = vld [vmem:[%s560 + $0x48] sm:$0xff]
        %v571 = vld [vmem:[%s560 + $0x50] sm:$0xff]
        %v572 = vld [vmem:[%s560 + $0x58] sm:$0xff]
        %v573 = vld [vmem:[%s560 + $0x60] sm:$0xff]
        %v574 = vld [vmem:[%s560 + $0x68] sm:$0xff]
        %v575 = vld [vmem:[%s560 + $0x70] sm:$0xff]
        %v576 = vld [vmem:[%s560 + $0x78] sm:$0xff]
        %v577 = vld [vmem:[%s560 + $0x80] sm:$0xff]
        %v578 = vld [vmem:[%s560 + $0x88] sm:$0xff]
        %v579 = vld [vmem:[%s560 + $0x90] sm:$0xff]
        %v580 = vld [vmem:[%s560 + $0x98] sm:$0xff]
        %v581 = vld [vmem:[%s560 + $0xa0] sm:$0xff]
        %v582 = vld [vmem:[%s560 + $0xa8] sm:$0xff]
        %v583 = vld [vmem:[%s560 + $0xb0] sm:$0xff]
        %v584 = vld [vmem:[%s560 + $0xb8] sm:$0xff]
        %v585 = vld [vmem:[%s560 + $0xc0] sm:$0xff]
        %v586 = vld [vmem:[%s560 + $0xc8] sm:$0xff]
        %v587 = vld [vmem:[%s560 + $0xd0] sm:$0xff]
        %v588 = vld [vmem:[%s560 + $0xd8] sm:$0xff]
        %v589 = vld [vmem:[%s560 + $0xe0] sm:$0xff]
        %v590 = vld [vmem:[%s560 + $0xe8] sm:$0xff]
        %v591 = vld [vmem:[%s560 + $0xf0] sm:$0xff]
        %v592 = vld [vmem:[%s560 + $0xf8] sm:$0xff]
        %v594 = vsel %vm224, %v559, 0
        %596 = vmatprep.subr.mxu0 0.0
        %597 = vmatpush1.msra.mxu0 0.0
        %598 = vmatprep.subr.mxu0 0.0
        %599 = vmatpush1.msra.mxu0 0.0
        %600 = vmatprep.subr.mxu0 0.0
        %601 = vmatpush1.msra.mxu0 0.0
        %602 = vmatprep.subr.mxu0 0.0
        %603 = vmatpush1.msra.mxu0 0.0
        %604 = vmatprep.subr.mxu0 0.0
        %605 = vmatpush1.msra.mxu0 0.0
        %606 = vmatprep.subr.mxu0 0.0
        %607 = vmatpush1.msra.mxu0 0.0
        %608 = vmatprep.subr.mxu0 0.0
        %609 = vmatpush1.msra.mxu0 0.0
        %610 = vmatprep.subr.mxu0 0.0
        %611 = vmatpush1.msra.mxu0 0.0
        %612 = vmatprep.subr.mxu0 0.0
        %613 = vmatpush1.msra.mxu0 0.0
        %614 = vmatprep.subr.mxu0 0.0
        %615 = vmatpush1.msra.mxu0 0.0
        %616 = vmatprep.subr.mxu0 0.0
        %617 = vmatpush1.msra.mxu0 0.0
        %618 = vmatprep.subr.mxu0 0.0
        %619 = vmatpush1.msra.mxu0 0.0
        %620 = vmatprep.subr.mxu0 %v586
        %621 = vmatpush1.msra.mxu0 %v585
        %622 = vmatprep.subr.mxu0 %v578
        %623 = vmatpush1.msra.mxu0 %v577
        %624 = vmatprep.subr.mxu0 %v570
        %625 = vmatpush1.msra.mxu0 %v569
        %626 = vmatprep.subr.mxu0 %v562
        %627 = vmatpush1.msra.mxu0 %v561
        %628 = vmatprep.subr.mxu0 0.0
        %629 = vmatpush2.msra.mxu0 0.0
        %630 = vmatprep.subr.mxu0 0.0
        %631 = vmatpush2.msra.mxu0 0.0
        %632 = vmatprep.subr.mxu0 0.0
        %633 = vmatpush2.msra.mxu0 0.0
        %634 = vmatprep.subr.mxu0 0.0
        %635 = vmatpush2.msra.mxu0 0.0
        %636 = vmatprep.subr.mxu0 0.0
        %637 = vmatpush2.msra.mxu0 0.0
        %638 = vmatprep.subr.mxu0 0.0
        %639 = vmatpush2.msra.mxu0 0.0
        %640 = vmatprep.subr.mxu0 0.0
        %641 = vmatpush2.msra.mxu0 0.0
        %642 = vmatprep.subr.mxu0 0.0
        %643 = vmatpush2.msra.mxu0 0.0
        %644 = vmatprep.subr.mxu0 0.0
        %645 = vmatpush2.msra.mxu0 0.0
        %646 = vmatprep.subr.mxu0 0.0
        %647 = vmatpush2.msra.mxu0 0.0
        %648 = vmatprep.subr.mxu0 0.0
        %649 = vmatpush2.msra.mxu0 0.0
        %650 = vmatprep.subr.mxu0 0.0
        %651 = vmatpush2.msra.mxu0 0.0
        %652 = vmatprep.subr.mxu0 0.0
        %653 = vmatpush2.msra.mxu0 0.0
        %654 = vmatprep.subr.mxu0 0.0
        %655 = vmatpush2.msra.mxu0 0.0
        %656 = vmatprep.subr.mxu0 0.0
        %657 = vmatpush2.msra.mxu0 0.0
        %658 = vmatprep.subr.mxu0 0.0
        %659 = vmatpush2.msra.mxu0 0.0
        %660 = vmatprep.mubr.f32.mxu0 0.0
        %661 = vmatmul.mubr.f32.gmra.mxu0 %v594
        %v662 = vpop.f32.mrf.mxu0
        %v663 = vadd.f32 0.0, %v662
        %v664 = vpop.f32.mrf.mxu0
        %v665 = vadd.f32 0.0, %v664
        %666 = vdwg.mxu0
        %667 = vmatprep.subr.mxu0 0.0
        %668 = vmatpush1.msra.mxu0 0.0
        %669 = vmatprep.subr.mxu0 0.0
        %670 = vmatpush1.msra.mxu0 0.0
        %671 = vmatprep.subr.mxu0 0.0
        %672 = vmatpush1.msra.mxu0 0.0
        %673 = vmatprep.subr.mxu0 0.0
        %674 = vmatpush1.msra.mxu0 0.0
        %675 = vmatprep.subr.mxu0 0.0
        %676 = vmatpush1.msra.mxu0 0.0
        %677 = vmatprep.subr.mxu0 0.0
        %678 = vmatpush1.msra.mxu0 0.0
        %679 = vmatprep.subr.mxu0 0.0
        %680 = vmatpush1.msra.mxu0 0.0
        %681 = vmatprep.subr.mxu0 0.0
        %682 = vmatpush1.msra.mxu0 0.0
        %683 = vmatprep.subr.mxu0 0.0
        %684 = vmatpush1.msra.mxu0 0.0
        %685 = vmatprep.subr.mxu0 0.0
        %686 = vmatpush1.msra.mxu0 0.0
        %687 = vmatprep.subr.mxu0 0.0
        %688 = vmatpush1.msra.mxu0 0.0
        %689 = vmatprep.subr.mxu0 0.0
        %690 = vmatpush1.msra.mxu0 0.0
        %691 = vmatprep.subr.mxu0 %v588
        %692 = vmatpush1.msra.mxu0 %v587
        %693 = vmatprep.subr.mxu0 %v580
        %694 = vmatpush1.msra.mxu0 %v579
        %695 = vmatprep.subr.mxu0 %v572
        %696 = vmatpush1.msra.mxu0 %v571
        %697 = vmatprep.subr.mxu0 %v564
        %698 = vmatpush1.msra.mxu0 %v563
        %699 = vmatprep.subr.mxu0 0.0
        %700 = vmatpush2.msra.mxu0 0.0
        %701 = vmatprep.subr.mxu0 0.0
        %702 = vmatpush2.msra.mxu0 0.0
        %703 = vmatprep.subr.mxu0 0.0
        %704 = vmatpush2.msra.mxu0 0.0
        %705 = vmatprep.subr.mxu0 0.0
        %706 = vmatpush2.msra.mxu0 0.0
        %707 = vmatprep.subr.mxu0 0.0
        %708 = vmatpush2.msra.mxu0 0.0
        %709 = vmatprep.subr.mxu0 0.0
        %710 = vmatpush2.msra.mxu0 0.0
        %711 = vmatprep.subr.mxu0 0.0
        %712 = vmatpush2.msra.mxu0 0.0
        %713 = vmatprep.subr.mxu0 0.0
        %714 = vmatpush2.msra.mxu0 0.0
        %715 = vmatprep.subr.mxu0 0.0
        %716 = vmatpush2.msra.mxu0 0.0
        %717 = vmatprep.subr.mxu0 0.0
        %718 = vmatpush2.msra.mxu0 0.0
        %719 = vmatprep.subr.mxu0 0.0
        %720 = vmatpush2.msra.mxu0 0.0
        %721 = vmatprep.subr.mxu0 0.0
        %722 = vmatpush2.msra.mxu0 0.0
        %723 = vmatprep.subr.mxu0 0.0
        %724 = vmatpush2.msra.mxu0 0.0
        %725 = vmatprep.subr.mxu0 0.0
        %726 = vmatpush2.msra.mxu0 0.0
        %727 = vmatprep.subr.mxu0 0.0
        %728 = vmatpush2.msra.mxu0 0.0
        %729 = vmatprep.subr.mxu0 0.0
        %730 = vmatpush2.msra.mxu0 0.0
        %731 = vmatprep.mubr.f32.mxu0 0.0
        %732 = vmatmul.mubr.f32.gmra.mxu0 %v594
        %v733 = vpop.f32.mrf.mxu0
        %v734 = vadd.f32 0.0, %v733
        %v735 = vpop.f32.mrf.mxu0
        %v736 = vadd.f32 0.0, %v735
        %737 = vdwg.mxu0
        %738 = vmatprep.subr.mxu0 0.0
        %739 = vmatpush1.msra.mxu0 0.0
        %740 = vmatprep.subr.mxu0 0.0
        %741 = vmatpush1.msra.mxu0 0.0
        %742 = vmatprep.subr.mxu0 0.0
        %743 = vmatpush1.msra.mxu0 0.0
        %744 = vmatprep.subr.mxu0 0.0
        %745 = vmatpush1.msra.mxu0 0.0
        %746 = vmatprep.subr.mxu0 0.0
        %747 = vmatpush1.msra.mxu0 0.0
        %748 = vmatprep.subr.mxu0 0.0
        %749 = vmatpush1.msra.mxu0 0.0
        %750 = vmatprep.subr.mxu0 0.0
        %751 = vmatpush1.msra.mxu0 0.0
        %752 = vmatprep.subr.mxu0 0.0
        %753 = vmatpush1.msra.mxu0 0.0
        %754 = vmatprep.subr.mxu0 0.0
        %755 = vmatpush1.msra.mxu0 0.0
        %756 = vmatprep.subr.mxu0 0.0
        %757 = vmatpush1.msra.mxu0 0.0
        %758 = vmatprep.subr.mxu0 0.0
        %759 = vmatpush1.msra.mxu0 0.0
        %760 = vmatprep.subr.mxu0 0.0
        %761 = vmatpush1.msra.mxu0 0.0
        %762 = vmatprep.subr.mxu0 %v590
        %763 = vmatpush1.msra.mxu0 %v589
        %764 = vmatprep.subr.mxu0 %v582
        %765 = vmatpush1.msra.mxu0 %v581
        %766 = vmatprep.subr.mxu0 %v574
        %767 = vmatpush1.msra.mxu0 %v573
        %768 = vmatprep.subr.mxu0 %v566
        %769 = vmatpush1.msra.mxu0 %v565
        %770 = vmatprep.subr.mxu0 0.0
        %771 = vmatpush2.msra.mxu0 0.0
        %772 = vmatprep.subr.mxu0 0.0
        %773 = vmatpush2.msra.mxu0 0.0
        %774 = vmatprep.subr.mxu0 0.0
        %775 = vmatpush2.msra.mxu0 0.0
        %776 = vmatprep.subr.mxu0 0.0
        %777 = vmatpush2.msra.mxu0 0.0
        %778 = vmatprep.subr.mxu0 0.0
        %779 = vmatpush2.msra.mxu0 0.0
        %780 = vmatprep.subr.mxu0 0.0
        %781 = vmatpush2.msra.mxu0 0.0
        %782 = vmatprep.subr.mxu0 0.0
        %783 = vmatpush2.msra.mxu0 0.0
        %784 = vmatprep.subr.mxu0 0.0
        %785 = vmatpush2.msra.mxu0 0.0
        %786 = vmatprep.subr.mxu0 0.0
        %787 = vmatpush2.msra.mxu0 0.0
        %788 = vmatprep.subr.mxu0 0.0
        %789 = vmatpush2.msra.mxu0 0.0
        %790 = vmatprep.subr.mxu0 0.0
        %791 = vmatpush2.msra.mxu0 0.0
        %792 = vmatprep.subr.mxu0 0.0
        %793 = vmatpush2.msra.mxu0 0.0
        %794 = vmatprep.subr.mxu0 0.0
        %795 = vmatpush2.msra.mxu0 0.0
        %796 = vmatprep.subr.mxu0 0.0
        %797 = vmatpush2.msra.mxu0 0.0
        %798 = vmatprep.subr.mxu0 0.0
        %799 = vmatpush2.msra.mxu0 0.0
        %800 = vmatprep.subr.mxu0 0.0
        %801 = vmatpush2.msra.mxu0 0.0
        %802 = vmatprep.mubr.f32.mxu0 0.0
        %803 = vmatmul.mubr.f32.gmra.mxu0 %v594
        %v804 = vpop.f32.mrf.mxu0
        %v805 = vadd.f32 0.0, %v804
        %v806 = vpop.f32.mrf.mxu0
        %v807 = vadd.f32 0.0, %v806
        %808 = vdwg.mxu0
        %809 = vmatprep.subr.mxu0 0.0
        %810 = vmatpush1.msra.mxu0 0.0
        %811 = vmatprep.subr.mxu0 0.0
        %812 = vmatpush1.msra.mxu0 0.0
        %813 = vmatprep.subr.mxu0 0.0
        %814 = vmatpush1.msra.mxu0 0.0
        %815 = vmatprep.subr.mxu0 0.0
        %816 = vmatpush1.msra.mxu0 0.0
        %817 = vmatprep.subr.mxu0 0.0
        %818 = vmatpush1.msra.mxu0 0.0
        %819 = vmatprep.subr.mxu0 0.0
        %820 = vmatpush1.msra.mxu0 0.0
        %821 = vmatprep.subr.mxu0 0.0
        %822 = vmatpush1.msra.mxu0 0.0
        %823 = vmatprep.subr.mxu0 0.0
        %824 = vmatpush1.msra.mxu0 0.0
        %825 = vmatprep.subr.mxu0 0.0
        %826 = vmatpush1.msra.mxu0 0.0
        %827 = vmatprep.subr.mxu0 0.0
        %828 = vmatpush1.msra.mxu0 0.0
        %829 = vmatprep.subr.mxu0 0.0
        %830 = vmatpush1.msra.mxu0 0.0
        %831 = vmatprep.subr.mxu0 0.0
        %832 = vmatpush1.msra.mxu0 0.0
        %833 = vmatprep.subr.mxu0 %v592
        %834 = vmatpush1.msra.mxu0 %v591
        %835 = vmatprep.subr.mxu0 %v584
        %836 = vmatpush1.msra.mxu0 %v583
        %837 = vmatprep.subr.mxu0 %v576
        %838 = vmatpush1.msra.mxu0 %v575
        %839 = vmatprep.subr.mxu0 %v568
        %840 = vmatpush1.msra.mxu0 %v567
        %841 = vmatprep.subr.mxu0 0.0
        %842 = vmatpush2.msra.mxu0 0.0
        %843 = vmatprep.subr.mxu0 0.0
        %844 = vmatpush2.msra.mxu0 0.0
        %845 = vmatprep.subr.mxu0 0.0
        %846 = vmatpush2.msra.mxu0 0.0
        %847 = vmatprep.subr.mxu0 0.0
        %848 = vmatpush2.msra.mxu0 0.0
        %849 = vmatprep.subr.mxu0 0.0
        %850 = vmatpush2.msra.mxu0 0.0
        %851 = vmatprep.subr.mxu0 0.0
        %852 = vmatpush2.msra.mxu0 0.0
        %853 = vmatprep.subr.mxu0 0.0
        %854 = vmatpush2.msra.mxu0 0.0
        %855 = vmatprep.subr.mxu0 0.0
        %856 = vmatpush2.msra.mxu0 0.0
        %857 = vmatprep.subr.mxu0 0.0
        %858 = vmatpush2.msra.mxu0 0.0
        %859 = vmatprep.subr.mxu0 0.0
        %860 = vmatpush2.msra.mxu0 0.0
        %861 = vmatprep.subr.mxu0 0.0
        %862 = vmatpush2.msra.mxu0 0.0
        %863 = vmatprep.subr.mxu0 0.0
        %864 = vmatpush2.msra.mxu0 0.0
        %865 = vmatprep.subr.mxu0 0.0
        %866 = vmatpush2.msra.mxu0 0.0
        %867 = vmatprep.subr.mxu0 0.0
        %868 = vmatpush2.msra.mxu0 0.0
        %869 = vmatprep.subr.mxu0 0.0
        %870 = vmatpush2.msra.mxu0 0.0
        %871 = vmatprep.subr.mxu0 0.0
        %872 = vmatpush2.msra.mxu0 0.0
        %873 = vmatprep.mubr.f32.mxu0 0.0
        %874 = vmatmul.mubr.f32.gmra.mxu0 %v594
        %v875 = vpop.f32.mrf.mxu0
        %v876 = vadd.f32 0.0, %v875
        %v877 = vpop.f32.mrf.mxu0
        %v878 = vadd.f32 0.0, %v877
        %879 = vdwg.mxu0
        %v888 = vcombine.low %v663, %v665
        %v889 = vcombine.low %v734, %v736
        %v891 = vunpack.c.l.s4 1983009808
        %v892 = vunpack.c.0.s8 %v891
        %v893 = vlaneseq
        %v894 = vshrl.u32 %v893, 7
        %v895 = vsub.s32 %v892, %v894
        %v896 = vrot.slane %v888, %v895
        %v898 = vunpack.c.l.s4 1983009808
        %v899 = vunpack.c.0.s8 %v898
        %v900 = vlaneseq
        %v901 = vshrl.u32 %v900, 7
        %v902 = vsub.s32 %v899, %v901
        %v903 = vrot.slane %v889, %v902
        %v904 = vcombine.low %v896, %v903
        %v905 = vcombine.low %v805, %v807
        %v906 = vcombine.low %v876, %v878
        %v908 = vunpack.c.l.s4 1983009808
        %v909 = vunpack.c.0.s8 %v908
        %v910 = vlaneseq
        %v911 = vshrl.u32 %v910, 7
        %v912 = vsub.s32 %v909, %v911
        %v913 = vrot.slane %v905, %v912
        %v915 = vunpack.c.l.s4 1983009808
        %v916 = vunpack.c.0.s8 %v915
        %v917 = vlaneseq
        %v918 = vshrl.u32 %v917, 7
        %v919 = vsub.s32 %v916, %v918
        %v920 = vrot.slane %v906, %v919
        %v921 = vcombine.low %v913, %v920
        %s924 = scalar_lea.vmem %s189, 16
        %925 = vst [vmem:[%s924] sm:$0xff] %v904
        %926 = vst [vmem:[%s924 + $0x8] sm:$0xff] %v921
        %s927 = scalar_lea.vmem %s181, 4
        %v928 = vld [vmem:[%s927] sm:$0x3]
        %s929 = scalar_lea.vmem %s150, 512 [#allocation2]
        %v930 = vld [vmem:[%s929] sm:$0xff]
        %v931 = vld [vmem:[%s929 + $0x8] sm:$0xff]
        %v932 = vld [vmem:[%s929 + $0x10] sm:$0xff]
        %v933 = vld [vmem:[%s929 + $0x18] sm:$0xff]
        %v934 = vld [vmem:[%s929 + $0x20] sm:$0xff]
        %v935 = vld [vmem:[%s929 + $0x28] sm:$0xff]
        %v936 = vld [vmem:[%s929 + $0x30] sm:$0xff]
        %v937 = vld [vmem:[%s929 + $0x38] sm:$0xff]
        %v938 = vld [vmem:[%s929 + $0x40] sm:$0xff]
        %v939 = vld [vmem:[%s929 + $0x48] sm:$0xff]
        %v940 = vld [vmem:[%s929 + $0x50] sm:$0xff]
        %v941 = vld [vmem:[%s929 + $0x58] sm:$0xff]
        %v942 = vld [vmem:[%s929 + $0x60] sm:$0xff]
        %v943 = vld [vmem:[%s929 + $0x68] sm:$0xff]
        %v944 = vld [vmem:[%s929 + $0x70] sm:$0xff]
        %v945 = vld [vmem:[%s929 + $0x78] sm:$0xff]
        %v946 = vld [vmem:[%s929 + $0x80] sm:$0xff]
        %v947 = vld [vmem:[%s929 + $0x88] sm:$0xff]
        %v948 = vld [vmem:[%s929 + $0x90] sm:$0xff]
        %v949 = vld [vmem:[%s929 + $0x98] sm:$0xff]
        %v950 = vld [vmem:[%s929 + $0xa0] sm:$0xff]
        %v951 = vld [vmem:[%s929 + $0xa8] sm:$0xff]
        %v952 = vld [vmem:[%s929 + $0xb0] sm:$0xff]
        %v953 = vld [vmem:[%s929 + $0xb8] sm:$0xff]
        %v954 = vld [vmem:[%s929 + $0xc0] sm:$0xff]
        %v955 = vld [vmem:[%s929 + $0xc8] sm:$0xff]
        %v956 = vld [vmem:[%s929 + $0xd0] sm:$0xff]
        %v957 = vld [vmem:[%s929 + $0xd8] sm:$0xff]
        %v958 = vld [vmem:[%s929 + $0xe0] sm:$0xff]
        %v959 = vld [vmem:[%s929 + $0xe8] sm:$0xff]
        %v960 = vld [vmem:[%s929 + $0xf0] sm:$0xff]
        %v961 = vld [vmem:[%s929 + $0xf8] sm:$0xff]
        %v963 = vsel %vm224, %v928, 0
        %965 = vmatprep.subr.mxu0 0.0
        %966 = vmatpush1.msra.mxu0 0.0
        %967 = vmatprep.subr.mxu0 0.0
        %968 = vmatpush1.msra.mxu0 0.0
        %969 = vmatprep.subr.mxu0 0.0
        %970 = vmatpush1.msra.mxu0 0.0
        %971 = vmatprep.subr.mxu0 0.0
        %972 = vmatpush1.msra.mxu0 0.0
        %973 = vmatprep.subr.mxu0 0.0
        %974 = vmatpush1.msra.mxu0 0.0
        %975 = vmatprep.subr.mxu0 0.0
        %976 = vmatpush1.msra.mxu0 0.0
        %977 = vmatprep.subr.mxu0 0.0
        %978 = vmatpush1.msra.mxu0 0.0
        %979 = vmatprep.subr.mxu0 0.0
        %980 = vmatpush1.msra.mxu0 0.0
        %981 = vmatprep.subr.mxu0 0.0
        %982 = vmatpush1.msra.mxu0 0.0
        %983 = vmatprep.subr.mxu0 0.0
        %984 = vmatpush1.msra.mxu0 0.0
        %985 = vmatprep.subr.mxu0 0.0
        %986 = vmatpush1.msra.mxu0 0.0
        %987 = vmatprep.subr.mxu0 0.0
        %988 = vmatpush1.msra.mxu0 0.0
        %989 = vmatprep.subr.mxu0 %v955
        %990 = vmatpush1.msra.mxu0 %v954
        %991 = vmatprep.subr.mxu0 %v947
        %992 = vmatpush1.msra.mxu0 %v946
        %993 = vmatprep.subr.mxu0 %v939
        %994 = vmatpush1.msra.mxu0 %v938
        %995 = vmatprep.subr.mxu0 %v931
        %996 = vmatpush1.msra.mxu0 %v930
        %997 = vmatprep.subr.mxu0 0.0
        %998 = vmatpush2.msra.mxu0 0.0
        %999 = vmatprep.subr.mxu0 0.0
        %1000 = vmatpush2.msra.mxu0 0.0
        %1001 = vmatprep.subr.mxu0 0.0
        %1002 = vmatpush2.msra.mxu0 0.0
        %1003 = vmatprep.subr.mxu0 0.0
        %1004 = vmatpush2.msra.mxu0 0.0
        %1005 = vmatprep.subr.mxu0 0.0
        %1006 = vmatpush2.msra.mxu0 0.0
        %1007 = vmatprep.subr.mxu0 0.0
        %1008 = vmatpush2.msra.mxu0 0.0
        %1009 = vmatprep.subr.mxu0 0.0
        %1010 = vmatpush2.msra.mxu0 0.0
        %1011 = vmatprep.subr.mxu0 0.0
        %1012 = vmatpush2.msra.mxu0 0.0
        %1013 = vmatprep.subr.mxu0 0.0
        %1014 = vmatpush2.msra.mxu0 0.0
        %1015 = vmatprep.subr.mxu0 0.0
        %1016 = vmatpush2.msra.mxu0 0.0
        %1017 = vmatprep.subr.mxu0 0.0
        %1018 = vmatpush2.msra.mxu0 0.0
        %1019 = vmatprep.subr.mxu0 0.0
        %1020 = vmatpush2.msra.mxu0 0.0
        %1021 = vmatprep.subr.mxu0 0.0
        %1022 = vmatpush2.msra.mxu0 0.0
        %1023 = vmatprep.subr.mxu0 0.0
        %1024 = vmatpush2.msra.mxu0 0.0
        %1025 = vmatprep.subr.mxu0 0.0
        %1026 = vmatpush2.msra.mxu0 0.0
        %1027 = vmatprep.subr.mxu0 0.0
        %1028 = vmatpush2.msra.mxu0 0.0
        %1029 = vmatprep.mubr.f32.mxu0 0.0
        %1030 = vmatmul.mubr.f32.gmra.mxu0 %v963
        %v1031 = vpop.f32.mrf.mxu0
        %v1032 = vadd.f32 0.0, %v1031
        %v1033 = vpop.f32.mrf.mxu0
        %v1034 = vadd.f32 0.0, %v1033
        %1035 = vdwg.mxu0
        %1036 = vmatprep.subr.mxu0 0.0
        %1037 = vmatpush1.msra.mxu0 0.0
        %1038 = vmatprep.subr.mxu0 0.0
        %1039 = vmatpush1.msra.mxu0 0.0
        %1040 = vmatprep.subr.mxu0 0.0
        %1041 = vmatpush1.msra.mxu0 0.0
        %1042 = vmatprep.subr.mxu0 0.0
        %1043 = vmatpush1.msra.mxu0 0.0
        %1044 = vmatprep.subr.mxu0 0.0
        %1045 = vmatpush1.msra.mxu0 0.0
        %1046 = vmatprep.subr.mxu0 0.0
        %1047 = vmatpush1.msra.mxu0 0.0
        %1048 = vmatprep.subr.mxu0 0.0
        %1049 = vmatpush1.msra.mxu0 0.0
        %1050 = vmatprep.subr.mxu0 0.0
        %1051 = vmatpush1.msra.mxu0 0.0
        %1052 = vmatprep.subr.mxu0 0.0
        %1053 = vmatpush1.msra.mxu0 0.0
        %1054 = vmatprep.subr.mxu0 0.0
        %1055 = vmatpush1.msra.mxu0 0.0
        %1056 = vmatprep.subr.mxu0 0.0
        %1057 = vmatpush1.msra.mxu0 0.0
        %1058 = vmatprep.subr.mxu0 0.0
        %1059 = vmatpush1.msra.mxu0 0.0
        %1060 = vmatprep.subr.mxu0 %v957
        %1061 = vmatpush1.msra.mxu0 %v956
        %1062 = vmatprep.subr.mxu0 %v949
        %1063 = vmatpush1.msra.mxu0 %v948
        %1064 = vmatprep.subr.mxu0 %v941
        %1065 = vmatpush1.msra.mxu0 %v940
        %1066 = vmatprep.subr.mxu0 %v933
        %1067 = vmatpush1.msra.mxu0 %v932
        %1068 = vmatprep.subr.mxu0 0.0
        %1069 = vmatpush2.msra.mxu0 0.0
        %1070 = vmatprep.subr.mxu0 0.0
        %1071 = vmatpush2.msra.mxu0 0.0
        %1072 = vmatprep.subr.mxu0 0.0
        %1073 = vmatpush2.msra.mxu0 0.0
        %1074 = vmatprep.subr.mxu0 0.0
        %1075 = vmatpush2.msra.mxu0 0.0
        %1076 = vmatprep.subr.mxu0 0.0
        %1077 = vmatpush2.msra.mxu0 0.0
        %1078 = vmatprep.subr.mxu0 0.0
        %1079 = vmatpush2.msra.mxu0 0.0
        %1080 = vmatprep.subr.mxu0 0.0
        %1081 = vmatpush2.msra.mxu0 0.0
        %1082 = vmatprep.subr.mxu0 0.0
        %1083 = vmatpush2.msra.mxu0 0.0
        %1084 = vmatprep.subr.mxu0 0.0
        %1085 = vmatpush2.msra.mxu0 0.0
        %1086 = vmatprep.subr.mxu0 0.0
        %1087 = vmatpush2.msra.mxu0 0.0
        %1088 = vmatprep.subr.mxu0 0.0
        %1089 = vmatpush2.msra.mxu0 0.0
        %1090 = vmatprep.subr.mxu0 0.0
        %1091 = vmatpush2.msra.mxu0 0.0
        %1092 = vmatprep.subr.mxu0 0.0
        %1093 = vmatpush2.msra.mxu0 0.0
        %1094 = vmatprep.subr.mxu0 0.0
        %1095 = vmatpush2.msra.mxu0 0.0
        %1096 = vmatprep.subr.mxu0 0.0
        %1097 = vmatpush2.msra.mxu0 0.0
        %1098 = vmatprep.subr.mxu0 0.0
        %1099 = vmatpush2.msra.mxu0 0.0
        %1100 = vmatprep.mubr.f32.mxu0 0.0
        %1101 = vmatmul.mubr.f32.gmra.mxu0 %v963
        %v1102 = vpop.f32.mrf.mxu0
        %v1103 = vadd.f32 0.0, %v1102
        %v1104 = vpop.f32.mrf.mxu0
        %v1105 = vadd.f32 0.0, %v1104
        %1106 = vdwg.mxu0
        %1107 = vmatprep.subr.mxu0 0.0
        %1108 = vmatpush1.msra.mxu0 0.0
        %1109 = vmatprep.subr.mxu0 0.0
        %1110 = vmatpush1.msra.mxu0 0.0
        %1111 = vmatprep.subr.mxu0 0.0
        %1112 = vmatpush1.msra.mxu0 0.0
        %1113 = vmatprep.subr.mxu0 0.0
        %1114 = vmatpush1.msra.mxu0 0.0
        %1115 = vmatprep.subr.mxu0 0.0
        %1116 = vmatpush1.msra.mxu0 0.0
        %1117 = vmatprep.subr.mxu0 0.0
        %1118 = vmatpush1.msra.mxu0 0.0
        %1119 = vmatprep.subr.mxu0 0.0
        %1120 = vmatpush1.msra.mxu0 0.0
        %1121 = vmatprep.subr.mxu0 0.0
        %1122 = vmatpush1.msra.mxu0 0.0
        %1123 = vmatprep.subr.mxu0 0.0
        %1124 = vmatpush1.msra.mxu0 0.0
        %1125 = vmatprep.subr.mxu0 0.0
        %1126 = vmatpush1.msra.mxu0 0.0
        %1127 = vmatprep.subr.mxu0 0.0
        %1128 = vmatpush1.msra.mxu0 0.0
        %1129 = vmatprep.subr.mxu0 0.0
        %1130 = vmatpush1.msra.mxu0 0.0
        %1131 = vmatprep.subr.mxu0 %v959
        %1132 = vmatpush1.msra.mxu0 %v958
        %1133 = vmatprep.subr.mxu0 %v951
        %1134 = vmatpush1.msra.mxu0 %v950
        %1135 = vmatprep.subr.mxu0 %v943
        %1136 = vmatpush1.msra.mxu0 %v942
        %1137 = vmatprep.subr.mxu0 %v935
        %1138 = vmatpush1.msra.mxu0 %v934
        %1139 = vmatprep.subr.mxu0 0.0
        %1140 = vmatpush2.msra.mxu0 0.0
        %1141 = vmatprep.subr.mxu0 0.0
        %1142 = vmatpush2.msra.mxu0 0.0
        %1143 = vmatprep.subr.mxu0 0.0
        %1144 = vmatpush2.msra.mxu0 0.0
        %1145 = vmatprep.subr.mxu0 0.0
        %1146 = vmatpush2.msra.mxu0 0.0
        %1147 = vmatprep.subr.mxu0 0.0
        %1148 = vmatpush2.msra.mxu0 0.0
        %1149 = vmatprep.subr.mxu0 0.0
        %1150 = vmatpush2.msra.mxu0 0.0
        %1151 = vmatprep.subr.mxu0 0.0
        %1152 = vmatpush2.msra.mxu0 0.0
        %1153 = vmatprep.subr.mxu0 0.0
        %1154 = vmatpush2.msra.mxu0 0.0
        %1155 = vmatprep.subr.mxu0 0.0
        %1156 = vmatpush2.msra.mxu0 0.0
        %1157 = vmatprep.subr.mxu0 0.0
        %1158 = vmatpush2.msra.mxu0 0.0
        %1159 = vmatprep.subr.mxu0 0.0
        %1160 = vmatpush2.msra.mxu0 0.0
        %1161 = vmatprep.subr.mxu0 0.0
        %1162 = vmatpush2.msra.mxu0 0.0
        %1163 = vmatprep.subr.mxu0 0.0
        %1164 = vmatpush2.msra.mxu0 0.0
        %1165 = vmatprep.subr.mxu0 0.0
        %1166 = vmatpush2.msra.mxu0 0.0
        %1167 = vmatprep.subr.mxu0 0.0
        %1168 = vmatpush2.msra.mxu0 0.0
        %1169 = vmatprep.subr.mxu0 0.0
        %1170 = vmatpush2.msra.mxu0 0.0
        %1171 = vmatprep.mubr.f32.mxu0 0.0
        %1172 = vmatmul.mubr.f32.gmra.mxu0 %v963
        %v1173 = vpop.f32.mrf.mxu0
        %v1174 = vadd.f32 0.0, %v1173
        %v1175 = vpop.f32.mrf.mxu0
        %v1176 = vadd.f32 0.0, %v1175
        %1177 = vdwg.mxu0
        %1178 = vmatprep.subr.mxu0 0.0
        %1179 = vmatpush1.msra.mxu0 0.0
        %1180 = vmatprep.subr.mxu0 0.0
        %1181 = vmatpush1.msra.mxu0 0.0
        %1182 = vmatprep.subr.mxu0 0.0
        %1183 = vmatpush1.msra.mxu0 0.0
        %1184 = vmatprep.subr.mxu0 0.0
        %1185 = vmatpush1.msra.mxu0 0.0
        %1186 = vmatprep.subr.mxu0 0.0
        %1187 = vmatpush1.msra.mxu0 0.0
        %1188 = vmatprep.subr.mxu0 0.0
        %1189 = vmatpush1.msra.mxu0 0.0
        %1190 = vmatprep.subr.mxu0 0.0
        %1191 = vmatpush1.msra.mxu0 0.0
        %1192 = vmatprep.subr.mxu0 0.0
        %1193 = vmatpush1.msra.mxu0 0.0
        %1194 = vmatprep.subr.mxu0 0.0
        %1195 = vmatpush1.msra.mxu0 0.0
        %1196 = vmatprep.subr.mxu0 0.0
        %1197 = vmatpush1.msra.mxu0 0.0
        %1198 = vmatprep.subr.mxu0 0.0
        %1199 = vmatpush1.msra.mxu0 0.0
        %1200 = vmatprep.subr.mxu0 0.0
        %1201 = vmatpush1.msra.mxu0 0.0
        %1202 = vmatprep.subr.mxu0 %v961
        %1203 = vmatpush1.msra.mxu0 %v960
        %1204 = vmatprep.subr.mxu0 %v953
        %1205 = vmatpush1.msra.mxu0 %v952
        %1206 = vmatprep.subr.mxu0 %v945
        %1207 = vmatpush1.msra.mxu0 %v944
        %1208 = vmatprep.subr.mxu0 %v937
        %1209 = vmatpush1.msra.mxu0 %v936
        %1210 = vmatprep.subr.mxu0 0.0
        %1211 = vmatpush2.msra.mxu0 0.0
        %1212 = vmatprep.subr.mxu0 0.0
        %1213 = vmatpush2.msra.mxu0 0.0
        %1214 = vmatprep.subr.mxu0 0.0
        %1215 = vmatpush2.msra.mxu0 0.0
        %1216 = vmatprep.subr.mxu0 0.0
        %1217 = vmatpush2.msra.mxu0 0.0
        %1218 = vmatprep.subr.mxu0 0.0
        %1219 = vmatpush2.msra.mxu0 0.0
        %1220 = vmatprep.subr.mxu0 0.0
        %1221 = vmatpush2.msra.mxu0 0.0
        %1222 = vmatprep.subr.mxu0 0.0
        %1223 = vmatpush2.msra.mxu0 0.0
        %1224 = vmatprep.subr.mxu0 0.0
        %1225 = vmatpush2.msra.mxu0 0.0
        %1226 = vmatprep.subr.mxu0 0.0
        %1227 = vmatpush2.msra.mxu0 0.0
        %1228 = vmatprep.subr.mxu0 0.0
        %1229 = vmatpush2.msra.mxu0 0.0
        %1230 = vmatprep.subr.mxu0 0.0
        %1231 = vmatpush2.msra.mxu0 0.0
        %1232 = vmatprep.subr.mxu0 0.0
        %1233 = vmatpush2.msra.mxu0 0.0
        %1234 = vmatprep.subr.mxu0 0.0
        %1235 = vmatpush2.msra.mxu0 0.0
        %1236 = vmatprep.subr.mxu0 0.0
        %1237 = vmatpush2.msra.mxu0 0.0
        %1238 = vmatprep.subr.mxu0 0.0
        %1239 = vmatpush2.msra.mxu0 0.0
        %1240 = vmatprep.subr.mxu0 0.0
        %1241 = vmatpush2.msra.mxu0 0.0
        %1242 = vmatprep.mubr.f32.mxu0 0.0
        %1243 = vmatmul.mubr.f32.gmra.mxu0 %v963
        %v1244 = vpop.f32.mrf.mxu0
        %v1245 = vadd.f32 0.0, %v1244
        %v1246 = vpop.f32.mrf.mxu0
        %v1247 = vadd.f32 0.0, %v1246
        %1248 = vdwg.mxu0
        %v1257 = vcombine.low %v1032, %v1034
        %v1258 = vcombine.low %v1103, %v1105
        %v1260 = vunpack.c.l.s4 1983009808
        %v1261 = vunpack.c.0.s8 %v1260
        %v1262 = vlaneseq
        %v1263 = vshrl.u32 %v1262, 7
        %v1264 = vsub.s32 %v1261, %v1263
        %v1265 = vrot.slane %v1257, %v1264
        %v1267 = vunpack.c.l.s4 1983009808
        %v1268 = vunpack.c.0.s8 %v1267
        %v1269 = vlaneseq
        %v1270 = vshrl.u32 %v1269, 7
        %v1271 = vsub.s32 %v1268, %v1270
        %v1272 = vrot.slane %v1258, %v1271
        %v1273 = vcombine.low %v1265, %v1272
        %v1274 = vcombine.low %v1174, %v1176
        %v1275 = vcombine.low %v1245, %v1247
        %v1277 = vunpack.c.l.s4 1983009808
        %v1278 = vunpack.c.0.s8 %v1277
        %v1279 = vlaneseq
        %v1280 = vshrl.u32 %v1279, 7
        %v1281 = vsub.s32 %v1278, %v1280
        %v1282 = vrot.slane %v1274, %v1281
        %v1284 = vunpack.c.l.s4 1983009808
        %v1285 = vunpack.c.0.s8 %v1284
        %v1286 = vlaneseq
        %v1287 = vshrl.u32 %v1286, 7
        %v1288 = vsub.s32 %v1285, %v1287
        %v1289 = vrot.slane %v1275, %v1288
        %v1290 = vcombine.low %v1282, %v1289
        %s1293 = scalar_lea.vmem %s189, 32
        %1294 = vst [vmem:[%s1293] sm:$0xff] %v1273
        %1295 = vst [vmem:[%s1293 + $0x8] sm:$0xff] %v1290
        %s1296 = scalar_lea.vmem %s181, 6
        %v1297 = vld [vmem:[%s1296] sm:$0x3]
        %s1298 = scalar_lea.vmem %s150, 768 [#allocation2]
        %v1299 = vld [vmem:[%s1298] sm:$0xff]
        %v1300 = vld [vmem:[%s1298 + $0x8] sm:$0xff]
        %v1301 = vld [vmem:[%s1298 + $0x10] sm:$0xff]
        %v1302 = vld [vmem:[%s1298 + $0x18] sm:$0xff]
        %v1303 = vld [vmem:[%s1298 + $0x20] sm:$0xff]
        %v1304 = vld [vmem:[%s1298 + $0x28] sm:$0xff]
        %v1305 = vld [vmem:[%s1298 + $0x30] sm:$0xff]
        %v1306 = vld [vmem:[%s1298 + $0x38] sm:$0xff]
        %v1307 = vld [vmem:[%s1298 + $0x40] sm:$0xff]
        %v1308 = vld [vmem:[%s1298 + $0x48] sm:$0xff]
        %v1309 = vld [vmem:[%s1298 + $0x50] sm:$0xff]
        %v1310 = vld [vmem:[%s1298 + $0x58] sm:$0xff]
        %v1311 = vld [vmem:[%s1298 + $0x60] sm:$0xff]
        %v1312 = vld [vmem:[%s1298 + $0x68] sm:$0xff]
        %v1313 = vld [vmem:[%s1298 + $0x70] sm:$0xff]
        %v1314 = vld [vmem:[%s1298 + $0x78] sm:$0xff]
        %v1315 = vld [vmem:[%s1298 + $0x80] sm:$0xff]
        %v1316 = vld [vmem:[%s1298 + $0x88] sm:$0xff]
        %v1317 = vld [vmem:[%s1298 + $0x90] sm:$0xff]
        %v1318 = vld [vmem:[%s1298 + $0x98] sm:$0xff]
        %v1319 = vld [vmem:[%s1298 + $0xa0] sm:$0xff]
        %v1320 = vld [vmem:[%s1298 + $0xa8] sm:$0xff]
        %v1321 = vld [vmem:[%s1298 + $0xb0] sm:$0xff]
        %v1322 = vld [vmem:[%s1298 + $0xb8] sm:$0xff]
        %v1323 = vld [vmem:[%s1298 + $0xc0] sm:$0xff]
        %v1324 = vld [vmem:[%s1298 + $0xc8] sm:$0xff]
        %v1325 = vld [vmem:[%s1298 + $0xd0] sm:$0xff]
        %v1326 = vld [vmem:[%s1298 + $0xd8] sm:$0xff]
        %v1327 = vld [vmem:[%s1298 + $0xe0] sm:$0xff]
        %v1328 = vld [vmem:[%s1298 + $0xe8] sm:$0xff]
        %v1329 = vld [vmem:[%s1298 + $0xf0] sm:$0xff]
        %v1330 = vld [vmem:[%s1298 + $0xf8] sm:$0xff]
        %v1332 = vsel %vm224, %v1297, 0
        %1334 = vmatprep.subr.mxu0 0.0
        %1335 = vmatpush1.msra.mxu0 0.0
        %1336 = vmatprep.subr.mxu0 0.0
        %1337 = vmatpush1.msra.mxu0 0.0
        %1338 = vmatprep.subr.mxu0 0.0
        %1339 = vmatpush1.msra.mxu0 0.0
        %1340 = vmatprep.subr.mxu0 0.0
        %1341 = vmatpush1.msra.mxu0 0.0
        %1342 = vmatprep.subr.mxu0 0.0
        %1343 = vmatpush1.msra.mxu0 0.0
        %1344 = vmatprep.subr.mxu0 0.0
        %1345 = vmatpush1.msra.mxu0 0.0
        %1346 = vmatprep.subr.mxu0 0.0
        %1347 = vmatpush1.msra.mxu0 0.0
        %1348 = vmatprep.subr.mxu0 0.0
        %1349 = vmatpush1.msra.mxu0 0.0
        %1350 = vmatprep.subr.mxu0 0.0
        %1351 = vmatpush1.msra.mxu0 0.0
        %1352 = vmatprep.subr.mxu0 0.0
        %1353 = vmatpush1.msra.mxu0 0.0
        %1354 = vmatprep.subr.mxu0 0.0
        %1355 = vmatpush1.msra.mxu0 0.0
        %1356 = vmatprep.subr.mxu0 0.0
        %1357 = vmatpush1.msra.mxu0 0.0
        %1358 = vmatprep.subr.mxu0 %v1324
        %1359 = vmatpush1.msra.mxu0 %v1323
        %1360 = vmatprep.subr.mxu0 %v1316
        %1361 = vmatpush1.msra.mxu0 %v1315
        %1362 = vmatprep.subr.mxu0 %v1308
        %1363 = vmatpush1.msra.mxu0 %v1307
        %1364 = vmatprep.subr.mxu0 %v1300
        %1365 = vmatpush1.msra.mxu0 %v1299
        %1366 = vmatprep.subr.mxu0 0.0
        %1367 = vmatpush2.msra.mxu0 0.0
        %1368 = vmatprep.subr.mxu0 0.0
        %1369 = vmatpush2.msra.mxu0 0.0
        %1370 = vmatprep.subr.mxu0 0.0
        %1371 = vmatpush2.msra.mxu0 0.0
        %1372 = vmatprep.subr.mxu0 0.0
        %1373 = vmatpush2.msra.mxu0 0.0
        %1374 = vmatprep.subr.mxu0 0.0
        %1375 = vmatpush2.msra.mxu0 0.0
        %1376 = vmatprep.subr.mxu0 0.0
        %1377 = vmatpush2.msra.mxu0 0.0
        %1378 = vmatprep.subr.mxu0 0.0
        %1379 = vmatpush2.msra.mxu0 0.0
        %1380 = vmatprep.subr.mxu0 0.0
        %1381 = vmatpush2.msra.mxu0 0.0
        %1382 = vmatprep.subr.mxu0 0.0
        %1383 = vmatpush2.msra.mxu0 0.0
        %1384 = vmatprep.subr.mxu0 0.0
        %1385 = vmatpush2.msra.mxu0 0.0
        %1386 = vmatprep.subr.mxu0 0.0
        %1387 = vmatpush2.msra.mxu0 0.0
        %1388 = vmatprep.subr.mxu0 0.0
        %1389 = vmatpush2.msra.mxu0 0.0
        %1390 = vmatprep.subr.mxu0 0.0
        %1391 = vmatpush2.msra.mxu0 0.0
        %1392 = vmatprep.subr.mxu0 0.0
        %1393 = vmatpush2.msra.mxu0 0.0
        %1394 = vmatprep.subr.mxu0 0.0
        %1395 = vmatpush2.msra.mxu0 0.0
        %1396 = vmatprep.subr.mxu0 0.0
        %1397 = vmatpush2.msra.mxu0 0.0
        %1398 = vmatprep.mubr.f32.mxu0 0.0
        %1399 = vmatmul.mubr.f32.gmra.mxu0 %v1332
        %v1400 = vpop.f32.mrf.mxu0
        %v1401 = vadd.f32 0.0, %v1400
        %v1402 = vpop.f32.mrf.mxu0
        %v1403 = vadd.f32 0.0, %v1402
        %1404 = vdwg.mxu0
        %1405 = vmatprep.subr.mxu0 0.0
        %1406 = vmatpush1.msra.mxu0 0.0
        %1407 = vmatprep.subr.mxu0 0.0
        %1408 = vmatpush1.msra.mxu0 0.0
        %1409 = vmatprep.subr.mxu0 0.0
        %1410 = vmatpush1.msra.mxu0 0.0
        %1411 = vmatprep.subr.mxu0 0.0
        %1412 = vmatpush1.msra.mxu0 0.0
        %1413 = vmatprep.subr.mxu0 0.0
        %1414 = vmatpush1.msra.mxu0 0.0
        %1415 = vmatprep.subr.mxu0 0.0
        %1416 = vmatpush1.msra.mxu0 0.0
        %1417 = vmatprep.subr.mxu0 0.0
        %1418 = vmatpush1.msra.mxu0 0.0
        %1419 = vmatprep.subr.mxu0 0.0
        %1420 = vmatpush1.msra.mxu0 0.0
        %1421 = vmatprep.subr.mxu0 0.0
        %1422 = vmatpush1.msra.mxu0 0.0
        %1423 = vmatprep.subr.mxu0 0.0
        %1424 = vmatpush1.msra.mxu0 0.0
        %1425 = vmatprep.subr.mxu0 0.0
        %1426 = vmatpush1.msra.mxu0 0.0
        %1427 = vmatprep.subr.mxu0 0.0
        %1428 = vmatpush1.msra.mxu0 0.0
        %1429 = vmatprep.subr.mxu0 %v1326
        %1430 = vmatpush1.msra.mxu0 %v1325
        %1431 = vmatprep.subr.mxu0 %v1318
        %1432 = vmatpush1.msra.mxu0 %v1317
        %1433 = vmatprep.subr.mxu0 %v1310
        %1434 = vmatpush1.msra.mxu0 %v1309
        %1435 = vmatprep.subr.mxu0 %v1302
        %1436 = vmatpush1.msra.mxu0 %v1301
        %1437 = vmatprep.subr.mxu0 0.0
        %1438 = vmatpush2.msra.mxu0 0.0
        %1439 = vmatprep.subr.mxu0 0.0
        %1440 = vmatpush2.msra.mxu0 0.0
        %1441 = vmatprep.subr.mxu0 0.0
        %1442 = vmatpush2.msra.mxu0 0.0
        %1443 = vmatprep.subr.mxu0 0.0
        %1444 = vmatpush2.msra.mxu0 0.0
        %1445 = vmatprep.subr.mxu0 0.0
        %1446 = vmatpush2.msra.mxu0 0.0
        %1447 = vmatprep.subr.mxu0 0.0
        %1448 = vmatpush2.msra.mxu0 0.0
        %1449 = vmatprep.subr.mxu0 0.0
        %1450 = vmatpush2.msra.mxu0 0.0
        %1451 = vmatprep.subr.mxu0 0.0
        %1452 = vmatpush2.msra.mxu0 0.0
        %1453 = vmatprep.subr.mxu0 0.0
        %1454 = vmatpush2.msra.mxu0 0.0
        %1455 = vmatprep.subr.mxu0 0.0
        %1456 = vmatpush2.msra.mxu0 0.0
        %1457 = vmatprep.subr.mxu0 0.0
        %1458 = vmatpush2.msra.mxu0 0.0
        %1459 = vmatprep.subr.mxu0 0.0
        %1460 = vmatpush2.msra.mxu0 0.0
        %1461 = vmatprep.subr.mxu0 0.0
        %1462 = vmatpush2.msra.mxu0 0.0
        %1463 = vmatprep.subr.mxu0 0.0
        %1464 = vmatpush2.msra.mxu0 0.0
        %1465 = vmatprep.subr.mxu0 0.0
        %1466 = vmatpush2.msra.mxu0 0.0
        %1467 = vmatprep.subr.mxu0 0.0
        %1468 = vmatpush2.msra.mxu0 0.0
        %1469 = vmatprep.mubr.f32.mxu0 0.0
        %1470 = vmatmul.mubr.f32.gmra.mxu0 %v1332
        %v1471 = vpop.f32.mrf.mxu0
        %v1472 = vadd.f32 0.0, %v1471
        %v1473 = vpop.f32.mrf.mxu0
        %v1474 = vadd.f32 0.0, %v1473
        %1475 = vdwg.mxu0
        %1476 = vmatprep.subr.mxu0 0.0
        %1477 = vmatpush1.msra.mxu0 0.0
        %1478 = vmatprep.subr.mxu0 0.0
        %1479 = vmatpush1.msra.mxu0 0.0
        %1480 = vmatprep.subr.mxu0 0.0
        %1481 = vmatpush1.msra.mxu0 0.0
        %1482 = vmatprep.subr.mxu0 0.0
        %1483 = vmatpush1.msra.mxu0 0.0
        %1484 = vmatprep.subr.mxu0 0.0
        %1485 = vmatpush1.msra.mxu0 0.0
        %1486 = vmatprep.subr.mxu0 0.0
        %1487 = vmatpush1.msra.mxu0 0.0
        %1488 = vmatprep.subr.mxu0 0.0
        %1489 = vmatpush1.msra.mxu0 0.0
        %1490 = vmatprep.subr.mxu0 0.0
        %1491 = vmatpush1.msra.mxu0 0.0
        %1492 = vmatprep.subr.mxu0 0.0
        %1493 = vmatpush1.msra.mxu0 0.0
        %1494 = vmatprep.subr.mxu0 0.0
        %1495 = vmatpush1.msra.mxu0 0.0
        %1496 = vmatprep.subr.mxu0 0.0
        %1497 = vmatpush1.msra.mxu0 0.0
        %1498 = vmatprep.subr.mxu0 0.0
        %1499 = vmatpush1.msra.mxu0 0.0
        %1500 = vmatprep.subr.mxu0 %v1328
        %1501 = vmatpush1.msra.mxu0 %v1327
        %1502 = vmatprep.subr.mxu0 %v1320
        %1503 = vmatpush1.msra.mxu0 %v1319
        %1504 = vmatprep.subr.mxu0 %v1312
        %1505 = vmatpush1.msra.mxu0 %v1311
        %1506 = vmatprep.subr.mxu0 %v1304
        %1507 = vmatpush1.msra.mxu0 %v1303
        %1508 = vmatprep.subr.mxu0 0.0
        %1509 = vmatpush2.msra.mxu0 0.0
        %1510 = vmatprep.subr.mxu0 0.0
        %1511 = vmatpush2.msra.mxu0 0.0
        %1512 = vmatprep.subr.mxu0 0.0
        %1513 = vmatpush2.msra.mxu0 0.0
        %1514 = vmatprep.subr.mxu0 0.0
        %1515 = vmatpush2.msra.mxu0 0.0
        %1516 = vmatprep.subr.mxu0 0.0
        %1517 = vmatpush2.msra.mxu0 0.0
        %1518 = vmatprep.subr.mxu0 0.0
        %1519 = vmatpush2.msra.mxu0 0.0
        %1520 = vmatprep.subr.mxu0 0.0
        %1521 = vmatpush2.msra.mxu0 0.0
        %1522 = vmatprep.subr.mxu0 0.0
        %1523 = vmatpush2.msra.mxu0 0.0
        %1524 = vmatprep.subr.mxu0 0.0
        %1525 = vmatpush2.msra.mxu0 0.0
        %1526 = vmatprep.subr.mxu0 0.0
        %1527 = vmatpush2.msra.mxu0 0.0
        %1528 = vmatprep.subr.mxu0 0.0
        %1529 = vmatpush2.msra.mxu0 0.0
        %1530 = vmatprep.subr.mxu0 0.0
        %1531 = vmatpush2.msra.mxu0 0.0
        %1532 = vmatprep.subr.mxu0 0.0
        %1533 = vmatpush2.msra.mxu0 0.0
        %1534 = vmatprep.subr.mxu0 0.0
        %1535 = vmatpush2.msra.mxu0 0.0
        %1536 = vmatprep.subr.mxu0 0.0
        %1537 = vmatpush2.msra.mxu0 0.0
        %1538 = vmatprep.subr.mxu0 0.0
        %1539 = vmatpush2.msra.mxu0 0.0
        %1540 = vmatprep.mubr.f32.mxu0 0.0
        %1541 = vmatmul.mubr.f32.gmra.mxu0 %v1332
        %v1542 = vpop.f32.mrf.mxu0
        %v1543 = vadd.f32 0.0, %v1542
        %v1544 = vpop.f32.mrf.mxu0
        %v1545 = vadd.f32 0.0, %v1544
        %1546 = vdwg.mxu0
        %1547 = vmatprep.subr.mxu0 0.0
        %1548 = vmatpush1.msra.mxu0 0.0
        %1549 = vmatprep.subr.mxu0 0.0
        %1550 = vmatpush1.msra.mxu0 0.0
        %1551 = vmatprep.subr.mxu0 0.0
        %1552 = vmatpush1.msra.mxu0 0.0
        %1553 = vmatprep.subr.mxu0 0.0
        %1554 = vmatpush1.msra.mxu0 0.0
        %1555 = vmatprep.subr.mxu0 0.0
        %1556 = vmatpush1.msra.mxu0 0.0
        %1557 = vmatprep.subr.mxu0 0.0
        %1558 = vmatpush1.msra.mxu0 0.0
        %1559 = vmatprep.subr.mxu0 0.0
        %1560 = vmatpush1.msra.mxu0 0.0
        %1561 = vmatprep.subr.mxu0 0.0
        %1562 = vmatpush1.msra.mxu0 0.0
        %1563 = vmatprep.subr.mxu0 0.0
        %1564 = vmatpush1.msra.mxu0 0.0
        %1565 = vmatprep.subr.mxu0 0.0
        %1566 = vmatpush1.msra.mxu0 0.0
        %1567 = vmatprep.subr.mxu0 0.0
        %1568 = vmatpush1.msra.mxu0 0.0
        %1569 = vmatprep.subr.mxu0 0.0
        %1570 = vmatpush1.msra.mxu0 0.0
        %1571 = vmatprep.subr.mxu0 %v1330
        %1572 = vmatpush1.msra.mxu0 %v1329
        %1573 = vmatprep.subr.mxu0 %v1322
        %1574 = vmatpush1.msra.mxu0 %v1321
        %1575 = vmatprep.subr.mxu0 %v1314
        %1576 = vmatpush1.msra.mxu0 %v1313
        %1577 = vmatprep.subr.mxu0 %v1306
        %1578 = vmatpush1.msra.mxu0 %v1305
        %1579 = vmatprep.subr.mxu0 0.0
        %1580 = vmatpush2.msra.mxu0 0.0
        %1581 = vmatprep.subr.mxu0 0.0
        %1582 = vmatpush2.msra.mxu0 0.0
        %1583 = vmatprep.subr.mxu0 0.0
        %1584 = vmatpush2.msra.mxu0 0.0
        %1585 = vmatprep.subr.mxu0 0.0
        %1586 = vmatpush2.msra.mxu0 0.0
        %1587 = vmatprep.subr.mxu0 0.0
        %1588 = vmatpush2.msra.mxu0 0.0
        %1589 = vmatprep.subr.mxu0 0.0
        %1590 = vmatpush2.msra.mxu0 0.0
        %1591 = vmatprep.subr.mxu0 0.0
        %1592 = vmatpush2.msra.mxu0 0.0
        %1593 = vmatprep.subr.mxu0 0.0
        %1594 = vmatpush2.msra.mxu0 0.0
        %1595 = vmatprep.subr.mxu0 0.0
        %1596 = vmatpush2.msra.mxu0 0.0
        %1597 = vmatprep.subr.mxu0 0.0
        %1598 = vmatpush2.msra.mxu0 0.0
        %1599 = vmatprep.subr.mxu0 0.0
        %1600 = vmatpush2.msra.mxu0 0.0
        %1601 = vmatprep.subr.mxu0 0.0
        %1602 = vmatpush2.msra.mxu0 0.0
        %1603 = vmatprep.subr.mxu0 0.0
        %1604 = vmatpush2.msra.mxu0 0.0
        %1605 = vmatprep.subr.mxu0 0.0
        %1606 = vmatpush2.msra.mxu0 0.0
        %1607 = vmatprep.subr.mxu0 0.0
        %1608 = vmatpush2.msra.mxu0 0.0
        %1609 = vmatprep.subr.mxu0 0.0
        %1610 = vmatpush2.msra.mxu0 0.0
        %1611 = vmatprep.mubr.f32.mxu0 0.0
        %1612 = vmatmul.mubr.f32.gmra.mxu0 %v1332
        %v1613 = vpop.f32.mrf.mxu0
        %v1614 = vadd.f32 0.0, %v1613
        %v1615 = vpop.f32.mrf.mxu0
        %v1616 = vadd.f32 0.0, %v1615
        %1617 = vdwg.mxu0
        %v1626 = vcombine.low %v1401, %v1403
        %v1627 = vcombine.low %v1472, %v1474
        %v1629 = vunpack.c.l.s4 1983009808
        %v1630 = vunpack.c.0.s8 %v1629
        %v1631 = vlaneseq
        %v1632 = vshrl.u32 %v1631, 7
        %v1633 = vsub.s32 %v1630, %v1632
        %v1634 = vrot.slane %v1626, %v1633
        %v1636 = vunpack.c.l.s4 1983009808
        %v1637 = vunpack.c.0.s8 %v1636
        %v1638 = vlaneseq
        %v1639 = vshrl.u32 %v1638, 7
        %v1640 = vsub.s32 %v1637, %v1639
        %v1641 = vrot.slane %v1627, %v1640
        %v1642 = vcombine.low %v1634, %v1641
        %v1643 = vcombine.low %v1543, %v1545
        %v1644 = vcombine.low %v1614, %v1616
        %v1646 = vunpack.c.l.s4 1983009808
        %v1647 = vunpack.c.0.s8 %v1646
        %v1648 = vlaneseq
        %v1649 = vshrl.u32 %v1648, 7
        %v1650 = vsub.s32 %v1647, %v1649
        %v1651 = vrot.slane %v1643, %v1650
        %v1653 = vunpack.c.l.s4 1983009808
        %v1654 = vunpack.c.0.s8 %v1653
        %v1655 = vlaneseq
        %v1656 = vshrl.u32 %v1655, 7
        %v1657 = vsub.s32 %v1654, %v1656
        %v1658 = vrot.slane %v1644, %v1657
        %v1659 = vcombine.low %v1651, %v1658
        %s1662 = scalar_lea.vmem %s189, 48
        %1663 = vst [vmem:[%s1662] sm:$0xff] %v1642
        %1664 = vst [vmem:[%s1662 + $0x8] sm:$0xff] %v1659
        %s1665 = scalar_lea.vmem %s181, 8
        %v1666 = vld [vmem:[%s1665] sm:$0x3]
        %s1667 = scalar_lea.vmem %s150, 1024 [#allocation2]
        %v1668 = vld [vmem:[%s1667] sm:$0xff]
        %v1669 = vld [vmem:[%s1667 + $0x8] sm:$0xff]
        %v1670 = vld [vmem:[%s1667 + $0x10] sm:$0xff]
        %v1671 = vld [vmem:[%s1667 + $0x18] sm:$0xff]
        %v1672 = vld [vmem:[%s1667 + $0x20] sm:$0xff]
        %v1673 = vld [vmem:[%s1667 + $0x28] sm:$0xff]
        %v1674 = vld [vmem:[%s1667 + $0x30] sm:$0xff]
        %v1675 = vld [vmem:[%s1667 + $0x38] sm:$0xff]
        %v1676 = vld [vmem:[%s1667 + $0x40] sm:$0xff]
        %v1677 = vld [vmem:[%s1667 + $0x48] sm:$0xff]
        %v1678 = vld [vmem:[%s1667 + $0x50] sm:$0xff]
        %v1679 = vld [vmem:[%s1667 + $0x58] sm:$0xff]
        %v1680 = vld [vmem:[%s1667 + $0x60] sm:$0xff]
        %v1681 = vld [vmem:[%s1667 + $0x68] sm:$0xff]
        %v1682 = vld [vmem:[%s1667 + $0x70] sm:$0xff]
        %v1683 = vld [vmem:[%s1667 + $0x78] sm:$0xff]
        %v1684 = vld [vmem:[%s1667 + $0x80] sm:$0xff]
        %v1685 = vld [vmem:[%s1667 + $0x88] sm:$0xff]
        %v1686 = vld [vmem:[%s1667 + $0x90] sm:$0xff]
        %v1687 = vld [vmem:[%s1667 + $0x98] sm:$0xff]
        %v1688 = vld [vmem:[%s1667 + $0xa0] sm:$0xff]
        %v1689 = vld [vmem:[%s1667 + $0xa8] sm:$0xff]
        %v1690 = vld [vmem:[%s1667 + $0xb0] sm:$0xff]
        %v1691 = vld [vmem:[%s1667 + $0xb8] sm:$0xff]
        %v1692 = vld [vmem:[%s1667 + $0xc0] sm:$0xff]
        %v1693 = vld [vmem:[%s1667 + $0xc8] sm:$0xff]
        %v1694 = vld [vmem:[%s1667 + $0xd0] sm:$0xff]
        %v1695 = vld [vmem:[%s1667 + $0xd8] sm:$0xff]
        %v1696 = vld [vmem:[%s1667 + $0xe0] sm:$0xff]
        %v1697 = vld [vmem:[%s1667 + $0xe8] sm:$0xff]
        %v1698 = vld [vmem:[%s1667 + $0xf0] sm:$0xff]
        %v1699 = vld [vmem:[%s1667 + $0xf8] sm:$0xff]
        %v1701 = vsel %vm224, %v1666, 0
        %1703 = vmatprep.subr.mxu0 0.0
        %1704 = vmatpush1.msra.mxu0 0.0
        %1705 = vmatprep.subr.mxu0 0.0
        %1706 = vmatpush1.msra.mxu0 0.0
        %1707 = vmatprep.subr.mxu0 0.0
        %1708 = vmatpush1.msra.mxu0 0.0
        %1709 = vmatprep.subr.mxu0 0.0
        %1710 = vmatpush1.msra.mxu0 0.0
        %1711 = vmatprep.subr.mxu0 0.0
        %1712 = vmatpush1.msra.mxu0 0.0
        %1713 = vmatprep.subr.mxu0 0.0
        %1714 = vmatpush1.msra.mxu0 0.0
        %1715 = vmatprep.subr.mxu0 0.0
        %1716 = vmatpush1.msra.mxu0 0.0
        %1717 = vmatprep.subr.mxu0 0.0
        %1718 = vmatpush1.msra.mxu0 0.0
        %1719 = vmatprep.subr.mxu0 0.0
        %1720 = vmatpush1.msra.mxu0 0.0
        %1721 = vmatprep.subr.mxu0 0.0
        %1722 = vmatpush1.msra.mxu0 0.0
        %1723 = vmatprep.subr.mxu0 0.0
        %1724 = vmatpush1.msra.mxu0 0.0
        %1725 = vmatprep.subr.mxu0 0.0
        %1726 = vmatpush1.msra.mxu0 0.0
        %1727 = vmatprep.subr.mxu0 %v1693
        %1728 = vmatpush1.msra.mxu0 %v1692
        %1729 = vmatprep.subr.mxu0 %v1685
        %1730 = vmatpush1.msra.mxu0 %v1684
        %1731 = vmatprep.subr.mxu0 %v1677
        %1732 = vmatpush1.msra.mxu0 %v1676
        %1733 = vmatprep.subr.mxu0 %v1669
        %1734 = vmatpush1.msra.mxu0 %v1668
        %1735 = vmatprep.subr.mxu0 0.0
        %1736 = vmatpush2.msra.mxu0 0.0
        %1737 = vmatprep.subr.mxu0 0.0
        %1738 = vmatpush2.msra.mxu0 0.0
        %1739 = vmatprep.subr.mxu0 0.0
        %1740 = vmatpush2.msra.mxu0 0.0
        %1741 = vmatprep.subr.mxu0 0.0
        %1742 = vmatpush2.msra.mxu0 0.0
        %1743 = vmatprep.subr.mxu0 0.0
        %1744 = vmatpush2.msra.mxu0 0.0
        %1745 = vmatprep.subr.mxu0 0.0
        %1746 = vmatpush2.msra.mxu0 0.0
        %1747 = vmatprep.subr.mxu0 0.0
        %1748 = vmatpush2.msra.mxu0 0.0
        %1749 = vmatprep.subr.mxu0 0.0
        %1750 = vmatpush2.msra.mxu0 0.0
        %1751 = vmatprep.subr.mxu0 0.0
        %1752 = vmatpush2.msra.mxu0 0.0
        %1753 = vmatprep.subr.mxu0 0.0
        %1754 = vmatpush2.msra.mxu0 0.0
        %1755 = vmatprep.subr.mxu0 0.0
        %1756 = vmatpush2.msra.mxu0 0.0
        %1757 = vmatprep.subr.mxu0 0.0
        %1758 = vmatpush2.msra.mxu0 0.0
        %1759 = vmatprep.subr.mxu0 0.0
        %1760 = vmatpush2.msra.mxu0 0.0
        %1761 = vmatprep.subr.mxu0 0.0
        %1762 = vmatpush2.msra.mxu0 0.0
        %1763 = vmatprep.subr.mxu0 0.0
        %1764 = vmatpush2.msra.mxu0 0.0
        %1765 = vmatprep.subr.mxu0 0.0
        %1766 = vmatpush2.msra.mxu0 0.0
        %1767 = vmatprep.mubr.f32.mxu0 0.0
        %1768 = vmatmul.mubr.f32.gmra.mxu0 %v1701
        %v1769 = vpop.f32.mrf.mxu0
        %v1770 = vadd.f32 0.0, %v1769
        %v1771 = vpop.f32.mrf.mxu0
        %v1772 = vadd.f32 0.0, %v1771
        %1773 = vdwg.mxu0
        %1774 = vmatprep.subr.mxu0 0.0
        %1775 = vmatpush1.msra.mxu0 0.0
        %1776 = vmatprep.subr.mxu0 0.0
        %1777 = vmatpush1.msra.mxu0 0.0
        %1778 = vmatprep.subr.mxu0 0.0
        %1779 = vmatpush1.msra.mxu0 0.0
        %1780 = vmatprep.subr.mxu0 0.0
        %1781 = vmatpush1.msra.mxu0 0.0
        %1782 = vmatprep.subr.mxu0 0.0
        %1783 = vmatpush1.msra.mxu0 0.0
        %1784 = vmatprep.subr.mxu0 0.0
        %1785 = vmatpush1.msra.mxu0 0.0
        %1786 = vmatprep.subr.mxu0 0.0
        %1787 = vmatpush1.msra.mxu0 0.0
        %1788 = vmatprep.subr.mxu0 0.0
        %1789 = vmatpush1.msra.mxu0 0.0
        %1790 = vmatprep.subr.mxu0 0.0
        %1791 = vmatpush1.msra.mxu0 0.0
        %1792 = vmatprep.subr.mxu0 0.0
        %1793 = vmatpush1.msra.mxu0 0.0
        %1794 = vmatprep.subr.mxu0 0.0
        %1795 = vmatpush1.msra.mxu0 0.0
        %1796 = vmatprep.subr.mxu0 0.0
        %1797 = vmatpush1.msra.mxu0 0.0
        %1798 = vmatprep.subr.mxu0 %v1695
        %1799 = vmatpush1.msra.mxu0 %v1694
        %1800 = vmatprep.subr.mxu0 %v1687
        %1801 = vmatpush1.msra.mxu0 %v1686
        %1802 = vmatprep.subr.mxu0 %v1679
        %1803 = vmatpush1.msra.mxu0 %v1678
        %1804 = vmatprep.subr.mxu0 %v1671
        %1805 = vmatpush1.msra.mxu0 %v1670
        %1806 = vmatprep.subr.mxu0 0.0
        %1807 = vmatpush2.msra.mxu0 0.0
        %1808 = vmatprep.subr.mxu0 0.0
        %1809 = vmatpush2.msra.mxu0 0.0
        %1810 = vmatprep.subr.mxu0 0.0
        %1811 = vmatpush2.msra.mxu0 0.0
        %1812 = vmatprep.subr.mxu0 0.0
        %1813 = vmatpush2.msra.mxu0 0.0
        %1814 = vmatprep.subr.mxu0 0.0
        %1815 = vmatpush2.msra.mxu0 0.0
        %1816 = vmatprep.subr.mxu0 0.0
        %1817 = vmatpush2.msra.mxu0 0.0
        %1818 = vmatprep.subr.mxu0 0.0
        %1819 = vmatpush2.msra.mxu0 0.0
        %1820 = vmatprep.subr.mxu0 0.0
        %1821 = vmatpush2.msra.mxu0 0.0
        %1822 = vmatprep.subr.mxu0 0.0
        %1823 = vmatpush2.msra.mxu0 0.0
        %1824 = vmatprep.subr.mxu0 0.0
        %1825 = vmatpush2.msra.mxu0 0.0
        %1826 = vmatprep.subr.mxu0 0.0
        %1827 = vmatpush2.msra.mxu0 0.0
        %1828 = vmatprep.subr.mxu0 0.0
        %1829 = vmatpush2.msra.mxu0 0.0
        %1830 = vmatprep.subr.mxu0 0.0
        %1831 = vmatpush2.msra.mxu0 0.0
        %1832 = vmatprep.subr.mxu0 0.0
        %1833 = vmatpush2.msra.mxu0 0.0
        %1834 = vmatprep.subr.mxu0 0.0
        %1835 = vmatpush2.msra.mxu0 0.0
        %1836 = vmatprep.subr.mxu0 0.0
        %1837 = vmatpush2.msra.mxu0 0.0
        %1838 = vmatprep.mubr.f32.mxu0 0.0
        %1839 = vmatmul.mubr.f32.gmra.mxu0 %v1701
        %v1840 = vpop.f32.mrf.mxu0
        %v1841 = vadd.f32 0.0, %v1840
        %v1842 = vpop.f32.mrf.mxu0
        %v1843 = vadd.f32 0.0, %v1842
        %1844 = vdwg.mxu0
        %1845 = vmatprep.subr.mxu0 0.0
        %1846 = vmatpush1.msra.mxu0 0.0
        %1847 = vmatprep.subr.mxu0 0.0
        %1848 = vmatpush1.msra.mxu0 0.0
        %1849 = vmatprep.subr.mxu0 0.0
        %1850 = vmatpush1.msra.mxu0 0.0
        %1851 = vmatprep.subr.mxu0 0.0
        %1852 = vmatpush1.msra.mxu0 0.0
        %1853 = vmatprep.subr.mxu0 0.0
        %1854 = vmatpush1.msra.mxu0 0.0
        %1855 = vmatprep.subr.mxu0 0.0
        %1856 = vmatpush1.msra.mxu0 0.0
        %1857 = vmatprep.subr.mxu0 0.0
        %1858 = vmatpush1.msra.mxu0 0.0
        %1859 = vmatprep.subr.mxu0 0.0
        %1860 = vmatpush1.msra.mxu0 0.0
        %1861 = vmatprep.subr.mxu0 0.0
        %1862 = vmatpush1.msra.mxu0 0.0
        %1863 = vmatprep.subr.mxu0 0.0
        %1864 = vmatpush1.msra.mxu0 0.0
        %1865 = vmatprep.subr.mxu0 0.0
        %1866 = vmatpush1.msra.mxu0 0.0
        %1867 = vmatprep.subr.mxu0 0.0
        %1868 = vmatpush1.msra.mxu0 0.0
        %1869 = vmatprep.subr.mxu0 %v1697
        %1870 = vmatpush1.msra.mxu0 %v1696
        %1871 = vmatprep.subr.mxu0 %v1689
        %1872 = vmatpush1.msra.mxu0 %v1688
        %1873 = vmatprep.subr.mxu0 %v1681
        %1874 = vmatpush1.msra.mxu0 %v1680
        %1875 = vmatprep.subr.mxu0 %v1673
        %1876 = vmatpush1.msra.mxu0 %v1672
        %1877 = vmatprep.subr.mxu0 0.0
        %1878 = vmatpush2.msra.mxu0 0.0
        %1879 = vmatprep.subr.mxu0 0.0
        %1880 = vmatpush2.msra.mxu0 0.0
        %1881 = vmatprep.subr.mxu0 0.0
        %1882 = vmatpush2.msra.mxu0 0.0
        %1883 = vmatprep.subr.mxu0 0.0
        %1884 = vmatpush2.msra.mxu0 0.0
        %1885 = vmatprep.subr.mxu0 0.0
        %1886 = vmatpush2.msra.mxu0 0.0
        %1887 = vmatprep.subr.mxu0 0.0
        %1888 = vmatpush2.msra.mxu0 0.0
        %1889 = vmatprep.subr.mxu0 0.0
        %1890 = vmatpush2.msra.mxu0 0.0
        %1891 = vmatprep.subr.mxu0 0.0
        %1892 = vmatpush2.msra.mxu0 0.0
        %1893 = vmatprep.subr.mxu0 0.0
        %1894 = vmatpush2.msra.mxu0 0.0
        %1895 = vmatprep.subr.mxu0 0.0
        %1896 = vmatpush2.msra.mxu0 0.0
        %1897 = vmatprep.subr.mxu0 0.0
        %1898 = vmatpush2.msra.mxu0 0.0
        %1899 = vmatprep.subr.mxu0 0.0
        %1900 = vmatpush2.msra.mxu0 0.0
        %1901 = vmatprep.subr.mxu0 0.0
        %1902 = vmatpush2.msra.mxu0 0.0
        %1903 = vmatprep.subr.mxu0 0.0
        %1904 = vmatpush2.msra.mxu0 0.0
        %1905 = vmatprep.subr.mxu0 0.0
        %1906 = vmatpush2.msra.mxu0 0.0
        %1907 = vmatprep.subr.mxu0 0.0
        %1908 = vmatpush2.msra.mxu0 0.0
        %1909 = vmatprep.mubr.f32.mxu0 0.0
        %1910 = vmatmul.mubr.f32.gmra.mxu0 %v1701
        %v1911 = vpop.f32.mrf.mxu0
        %v1912 = vadd.f32 0.0, %v1911
        %v1913 = vpop.f32.mrf.mxu0
        %v1914 = vadd.f32 0.0, %v1913
        %1915 = vdwg.mxu0
        %1916 = vmatprep.subr.mxu0 0.0
        %1917 = vmatpush1.msra.mxu0 0.0
        %1918 = vmatprep.subr.mxu0 0.0
        %1919 = vmatpush1.msra.mxu0 0.0
        %1920 = vmatprep.subr.mxu0 0.0
        %1921 = vmatpush1.msra.mxu0 0.0
        %1922 = vmatprep.subr.mxu0 0.0
        %1923 = vmatpush1.msra.mxu0 0.0
        %1924 = vmatprep.subr.mxu0 0.0
        %1925 = vmatpush1.msra.mxu0 0.0
        %1926 = vmatprep.subr.mxu0 0.0
        %1927 = vmatpush1.msra.mxu0 0.0
        %1928 = vmatprep.subr.mxu0 0.0
        %1929 = vmatpush1.msra.mxu0 0.0
        %1930 = vmatprep.subr.mxu0 0.0
        %1931 = vmatpush1.msra.mxu0 0.0
        %1932 = vmatprep.subr.mxu0 0.0
        %1933 = vmatpush1.msra.mxu0 0.0
        %1934 = vmatprep.subr.mxu0 0.0
        %1935 = vmatpush1.msra.mxu0 0.0
        %1936 = vmatprep.subr.mxu0 0.0
        %1937 = vmatpush1.msra.mxu0 0.0
        %1938 = vmatprep.subr.mxu0 0.0
        %1939 = vmatpush1.msra.mxu0 0.0
        %1940 = vmatprep.subr.mxu0 %v1699
        %1941 = vmatpush1.msra.mxu0 %v1698
        %1942 = vmatprep.subr.mxu0 %v1691
        %1943 = vmatpush1.msra.mxu0 %v1690
        %1944 = vmatprep.subr.mxu0 %v1683
        %1945 = vmatpush1.msra.mxu0 %v1682
        %1946 = vmatprep.subr.mxu0 %v1675
        %1947 = vmatpush1.msra.mxu0 %v1674
        %1948 = vmatprep.subr.mxu0 0.0
        %1949 = vmatpush2.msra.mxu0 0.0
        %1950 = vmatprep.subr.mxu0 0.0
        %1951 = vmatpush2.msra.mxu0 0.0
        %1952 = vmatprep.subr.mxu0 0.0
        %1953 = vmatpush2.msra.mxu0 0.0
        %1954 = vmatprep.subr.mxu0 0.0
        %1955 = vmatpush2.msra.mxu0 0.0
        %1956 = vmatprep.subr.mxu0 0.0
        %1957 = vmatpush2.msra.mxu0 0.0
        %1958 = vmatprep.subr.mxu0 0.0
        %1959 = vmatpush2.msra.mxu0 0.0
        %1960 = vmatprep.subr.mxu0 0.0
        %1961 = vmatpush2.msra.mxu0 0.0
        %1962 = vmatprep.subr.mxu0 0.0
        %1963 = vmatpush2.msra.mxu0 0.0
        %1964 = vmatprep.subr.mxu0 0.0
        %1965 = vmatpush2.msra.mxu0 0.0
        %1966 = vmatprep.subr.mxu0 0.0
        %1967 = vmatpush2.msra.mxu0 0.0
        %1968 = vmatprep.subr.mxu0 0.0
        %1969 = vmatpush2.msra.mxu0 0.0
        %1970 = vmatprep.subr.mxu0 0.0
        %1971 = vmatpush2.msra.mxu0 0.0
        %1972 = vmatprep.subr.mxu0 0.0
        %1973 = vmatpush2.msra.mxu0 0.0
        %1974 = vmatprep.subr.mxu0 0.0
        %1975 = vmatpush2.msra.mxu0 0.0
        %1976 = vmatprep.subr.mxu0 0.0
        %1977 = vmatpush2.msra.mxu0 0.0
        %1978 = vmatprep.subr.mxu0 0.0
        %1979 = vmatpush2.msra.mxu0 0.0
        %1980 = vmatprep.mubr.f32.mxu0 0.0
        %1981 = vmatmul.mubr.f32.gmra.mxu0 %v1701
        %v1982 = vpop.f32.mrf.mxu0
        %v1983 = vadd.f32 0.0, %v1982
        %v1984 = vpop.f32.mrf.mxu0
        %v1985 = vadd.f32 0.0, %v1984
        %1986 = vdwg.mxu0
        %v1995 = vcombine.low %v1770, %v1772
        %v1996 = vcombine.low %v1841, %v1843
        %v1998 = vunpack.c.l.s4 1983009808
        %v1999 = vunpack.c.0.s8 %v1998
        %v2000 = vlaneseq
        %v2001 = vshrl.u32 %v2000, 7
        %v2002 = vsub.s32 %v1999, %v2001
        %v2003 = vrot.slane %v1995, %v2002
        %v2005 = vunpack.c.l.s4 1983009808
        %v2006 = vunpack.c.0.s8 %v2005
        %v2007 = vlaneseq
        %v2008 = vshrl.u32 %v2007, 7
        %v2009 = vsub.s32 %v2006, %v2008
        %v2010 = vrot.slane %v1996, %v2009
        %v2011 = vcombine.low %v2003, %v2010
        %v2012 = vcombine.low %v1912, %v1914
        %v2013 = vcombine.low %v1983, %v1985
        %v2015 = vunpack.c.l.s4 1983009808
        %v2016 = vunpack.c.0.s8 %v2015
        %v2017 = vlaneseq
        %v2018 = vshrl.u32 %v2017, 7
        %v2019 = vsub.s32 %v2016, %v2018
        %v2020 = vrot.slane %v2012, %v2019
        %v2022 = vunpack.c.l.s4 1983009808
        %v2023 = vunpack.c.0.s8 %v2022
        %v2024 = vlaneseq
        %v2025 = vshrl.u32 %v2024, 7
        %v2026 = vsub.s32 %v2023, %v2025
        %v2027 = vrot.slane %v2013, %v2026
        %v2028 = vcombine.low %v2020, %v2027
        %s2031 = scalar_lea.vmem %s189, 64
        %2032 = vst [vmem:[%s2031] sm:$0xff] %v2011
        %2033 = vst [vmem:[%s2031 + $0x8] sm:$0xff] %v2028
        %s2034 = scalar_lea.vmem %s181, 10
        %v2035 = vld [vmem:[%s2034] sm:$0x3]
        %s2036 = scalar_lea.vmem %s150, 1280 [#allocation2]
        %v2037 = vld [vmem:[%s2036] sm:$0xff]
        %v2038 = vld [vmem:[%s2036 + $0x8] sm:$0xff]
        %v2039 = vld [vmem:[%s2036 + $0x10] sm:$0xff]
        %v2040 = vld [vmem:[%s2036 + $0x18] sm:$0xff]
        %v2041 = vld [vmem:[%s2036 + $0x20] sm:$0xff]
        %v2042 = vld [vmem:[%s2036 + $0x28] sm:$0xff]
        %v2043 = vld [vmem:[%s2036 + $0x30] sm:$0xff]
        %v2044 = vld [vmem:[%s2036 + $0x38] sm:$0xff]
        %v2045 = vld [vmem:[%s2036 + $0x40] sm:$0xff]
        %v2046 = vld [vmem:[%s2036 + $0x48] sm:$0xff]
        %v2047 = vld [vmem:[%s2036 + $0x50] sm:$0xff]
        %v2048 = vld [vmem:[%s2036 + $0x58] sm:$0xff]
        %v2049 = vld [vmem:[%s2036 + $0x60] sm:$0xff]
        %v2050 = vld [vmem:[%s2036 + $0x68] sm:$0xff]
        %v2051 = vld [vmem:[%s2036 + $0x70] sm:$0xff]
        %v2052 = vld [vmem:[%s2036 + $0x78] sm:$0xff]
        %v2053 = vld [vmem:[%s2036 + $0x80] sm:$0xff]
        %v2054 = vld [vmem:[%s2036 + $0x88] sm:$0xff]
        %v2055 = vld [vmem:[%s2036 + $0x90] sm:$0xff]
        %v2056 = vld [vmem:[%s2036 + $0x98] sm:$0xff]
        %v2057 = vld [vmem:[%s2036 + $0xa0] sm:$0xff]
        %v2058 = vld [vmem:[%s2036 + $0xa8] sm:$0xff]
        %v2059 = vld [vmem:[%s2036 + $0xb0] sm:$0xff]
        %v2060 = vld [vmem:[%s2036 + $0xb8] sm:$0xff]
        %v2061 = vld [vmem:[%s2036 + $0xc0] sm:$0xff]
        %v2062 = vld [vmem:[%s2036 + $0xc8] sm:$0xff]
        %v2063 = vld [vmem:[%s2036 + $0xd0] sm:$0xff]
        %v2064 = vld [vmem:[%s2036 + $0xd8] sm:$0xff]
        %v2065 = vld [vmem:[%s2036 + $0xe0] sm:$0xff]
        %v2066 = vld [vmem:[%s2036 + $0xe8] sm:$0xff]
        %v2067 = vld [vmem:[%s2036 + $0xf0] sm:$0xff]
        %v2068 = vld [vmem:[%s2036 + $0xf8] sm:$0xff]
        %v2070 = vsel %vm224, %v2035, 0
        %2072 = vmatprep.subr.mxu0 0.0
        %2073 = vmatpush1.msra.mxu0 0.0
        %2074 = vmatprep.subr.mxu0 0.0
        %2075 = vmatpush1.msra.mxu0 0.0
        %2076 = vmatprep.subr.mxu0 0.0
        %2077 = vmatpush1.msra.mxu0 0.0
        %2078 = vmatprep.subr.mxu0 0.0
        %2079 = vmatpush1.msra.mxu0 0.0
        %2080 = vmatprep.subr.mxu0 0.0
        %2081 = vmatpush1.msra.mxu0 0.0
        %2082 = vmatprep.subr.mxu0 0.0
        %2083 = vmatpush1.msra.mxu0 0.0
        %2084 = vmatprep.subr.mxu0 0.0
        %2085 = vmatpush1.msra.mxu0 0.0
        %2086 = vmatprep.subr.mxu0 0.0
        %2087 = vmatpush1.msra.mxu0 0.0
        %2088 = vmatprep.subr.mxu0 0.0
        %2089 = vmatpush1.msra.mxu0 0.0
        %2090 = vmatprep.subr.mxu0 0.0
        %2091 = vmatpush1.msra.mxu0 0.0
        %2092 = vmatprep.subr.mxu0 0.0
        %2093 = vmatpush1.msra.mxu0 0.0
        %2094 = vmatprep.subr.mxu0 0.0
        %2095 = vmatpush1.msra.mxu0 0.0
        %2096 = vmatprep.subr.mxu0 %v2062
        %2097 = vmatpush1.msra.mxu0 %v2061
        %2098 = vmatprep.subr.mxu0 %v2054
        %2099 = vmatpush1.msra.mxu0 %v2053
        %2100 = vmatprep.subr.mxu0 %v2046
        %2101 = vmatpush1.msra.mxu0 %v2045
        %2102 = vmatprep.subr.mxu0 %v2038
        %2103 = vmatpush1.msra.mxu0 %v2037
        %2104 = vmatprep.subr.mxu0 0.0
        %2105 = vmatpush2.msra.mxu0 0.0
        %2106 = vmatprep.subr.mxu0 0.0
        %2107 = vmatpush2.msra.mxu0 0.0
        %2108 = vmatprep.subr.mxu0 0.0
        %2109 = vmatpush2.msra.mxu0 0.0
        %2110 = vmatprep.subr.mxu0 0.0
        %2111 = vmatpush2.msra.mxu0 0.0
        %2112 = vmatprep.subr.mxu0 0.0
        %2113 = vmatpush2.msra.mxu0 0.0
        %2114 = vmatprep.subr.mxu0 0.0
        %2115 = vmatpush2.msra.mxu0 0.0
        %2116 = vmatprep.subr.mxu0 0.0
        %2117 = vmatpush2.msra.mxu0 0.0
        %2118 = vmatprep.subr.mxu0 0.0
        %2119 = vmatpush2.msra.mxu0 0.0
        %2120 = vmatprep.subr.mxu0 0.0
        %2121 = vmatpush2.msra.mxu0 0.0
        %2122 = vmatprep.subr.mxu0 0.0
        %2123 = vmatpush2.msra.mxu0 0.0
        %2124 = vmatprep.subr.mxu0 0.0
        %2125 = vmatpush2.msra.mxu0 0.0
        %2126 = vmatprep.subr.mxu0 0.0
        %2127 = vmatpush2.msra.mxu0 0.0
        %2128 = vmatprep.subr.mxu0 0.0
        %2129 = vmatpush2.msra.mxu0 0.0
        %2130 = vmatprep.subr.mxu0 0.0
        %2131 = vmatpush2.msra.mxu0 0.0
        %2132 = vmatprep.subr.mxu0 0.0
        %2133 = vmatpush2.msra.mxu0 0.0
        %2134 = vmatprep.subr.mxu0 0.0
        %2135 = vmatpush2.msra.mxu0 0.0
        %2136 = vmatprep.mubr.f32.mxu0 0.0
        %2137 = vmatmul.mubr.f32.gmra.mxu0 %v2070
        %v2138 = vpop.f32.mrf.mxu0
        %v2139 = vadd.f32 0.0, %v2138
        %v2140 = vpop.f32.mrf.mxu0
        %v2141 = vadd.f32 0.0, %v2140
        %2142 = vdwg.mxu0
        %2143 = vmatprep.subr.mxu0 0.0
        %2144 = vmatpush1.msra.mxu0 0.0
        %2145 = vmatprep.subr.mxu0 0.0
        %2146 = vmatpush1.msra.mxu0 0.0
        %2147 = vmatprep.subr.mxu0 0.0
        %2148 = vmatpush1.msra.mxu0 0.0
        %2149 = vmatprep.subr.mxu0 0.0
        %2150 = vmatpush1.msra.mxu0 0.0
        %2151 = vmatprep.subr.mxu0 0.0
        %2152 = vmatpush1.msra.mxu0 0.0
        %2153 = vmatprep.subr.mxu0 0.0
        %2154 = vmatpush1.msra.mxu0 0.0
        %2155 = vmatprep.subr.mxu0 0.0
        %2156 = vmatpush1.msra.mxu0 0.0
        %2157 = vmatprep.subr.mxu0 0.0
        %2158 = vmatpush1.msra.mxu0 0.0
        %2159 = vmatprep.subr.mxu0 0.0
        %2160 = vmatpush1.msra.mxu0 0.0
        %2161 = vmatprep.subr.mxu0 0.0
        %2162 = vmatpush1.msra.mxu0 0.0
        %2163 = vmatprep.subr.mxu0 0.0
        %2164 = vmatpush1.msra.mxu0 0.0
        %2165 = vmatprep.subr.mxu0 0.0
        %2166 = vmatpush1.msra.mxu0 0.0
        %2167 = vmatprep.subr.mxu0 %v2064
        %2168 = vmatpush1.msra.mxu0 %v2063
        %2169 = vmatprep.subr.mxu0 %v2056
        %2170 = vmatpush1.msra.mxu0 %v2055
        %2171 = vmatprep.subr.mxu0 %v2048
        %2172 = vmatpush1.msra.mxu0 %v2047
        %2173 = vmatprep.subr.mxu0 %v2040
        %2174 = vmatpush1.msra.mxu0 %v2039
        %2175 = vmatprep.subr.mxu0 0.0
        %2176 = vmatpush2.msra.mxu0 0.0
        %2177 = vmatprep.subr.mxu0 0.0
        %2178 = vmatpush2.msra.mxu0 0.0
        %2179 = vmatprep.subr.mxu0 0.0
        %2180 = vmatpush2.msra.mxu0 0.0
        %2181 = vmatprep.subr.mxu0 0.0
        %2182 = vmatpush2.msra.mxu0 0.0
        %2183 = vmatprep.subr.mxu0 0.0
        %2184 = vmatpush2.msra.mxu0 0.0
        %2185 = vmatprep.subr.mxu0 0.0
        %2186 = vmatpush2.msra.mxu0 0.0
        %2187 = vmatprep.subr.mxu0 0.0
        %2188 = vmatpush2.msra.mxu0 0.0
        %2189 = vmatprep.subr.mxu0 0.0
        %2190 = vmatpush2.msra.mxu0 0.0
        %2191 = vmatprep.subr.mxu0 0.0
        %2192 = vmatpush2.msra.mxu0 0.0
        %2193 = vmatprep.subr.mxu0 0.0
        %2194 = vmatpush2.msra.mxu0 0.0
        %2195 = vmatprep.subr.mxu0 0.0
        %2196 = vmatpush2.msra.mxu0 0.0
        %2197 = vmatprep.subr.mxu0 0.0
        %2198 = vmatpush2.msra.mxu0 0.0
        %2199 = vmatprep.subr.mxu0 0.0
        %2200 = vmatpush2.msra.mxu0 0.0
        %2201 = vmatprep.subr.mxu0 0.0
        %2202 = vmatpush2.msra.mxu0 0.0
        %2203 = vmatprep.subr.mxu0 0.0
        %2204 = vmatpush2.msra.mxu0 0.0
        %2205 = vmatprep.subr.mxu0 0.0
        %2206 = vmatpush2.msra.mxu0 0.0
        %2207 = vmatprep.mubr.f32.mxu0 0.0
        %2208 = vmatmul.mubr.f32.gmra.mxu0 %v2070
        %v2209 = vpop.f32.mrf.mxu0
        %v2210 = vadd.f32 0.0, %v2209
        %v2211 = vpop.f32.mrf.mxu0
        %v2212 = vadd.f32 0.0, %v2211
        %2213 = vdwg.mxu0
        %2214 = vmatprep.subr.mxu0 0.0
        %2215 = vmatpush1.msra.mxu0 0.0
        %2216 = vmatprep.subr.mxu0 0.0
        %2217 = vmatpush1.msra.mxu0 0.0
        %2218 = vmatprep.subr.mxu0 0.0
        %2219 = vmatpush1.msra.mxu0 0.0
        %2220 = vmatprep.subr.mxu0 0.0
        %2221 = vmatpush1.msra.mxu0 0.0
        %2222 = vmatprep.subr.mxu0 0.0
        %2223 = vmatpush1.msra.mxu0 0.0
        %2224 = vmatprep.subr.mxu0 0.0
        %2225 = vmatpush1.msra.mxu0 0.0
        %2226 = vmatprep.subr.mxu0 0.0
        %2227 = vmatpush1.msra.mxu0 0.0
        %2228 = vmatprep.subr.mxu0 0.0
        %2229 = vmatpush1.msra.mxu0 0.0
        %2230 = vmatprep.subr.mxu0 0.0
        %2231 = vmatpush1.msra.mxu0 0.0
        %2232 = vmatprep.subr.mxu0 0.0
        %2233 = vmatpush1.msra.mxu0 0.0
        %2234 = vmatprep.subr.mxu0 0.0
        %2235 = vmatpush1.msra.mxu0 0.0
        %2236 = vmatprep.subr.mxu0 0.0
        %2237 = vmatpush1.msra.mxu0 0.0
        %2238 = vmatprep.subr.mxu0 %v2066
        %2239 = vmatpush1.msra.mxu0 %v2065
        %2240 = vmatprep.subr.mxu0 %v2058
        %2241 = vmatpush1.msra.mxu0 %v2057
        %2242 = vmatprep.subr.mxu0 %v2050
        %2243 = vmatpush1.msra.mxu0 %v2049
        %2244 = vmatprep.subr.mxu0 %v2042
        %2245 = vmatpush1.msra.mxu0 %v2041
        %2246 = vmatprep.subr.mxu0 0.0
        %2247 = vmatpush2.msra.mxu0 0.0
        %2248 = vmatprep.subr.mxu0 0.0
        %2249 = vmatpush2.msra.mxu0 0.0
        %2250 = vmatprep.subr.mxu0 0.0
        %2251 = vmatpush2.msra.mxu0 0.0
        %2252 = vmatprep.subr.mxu0 0.0
        %2253 = vmatpush2.msra.mxu0 0.0
        %2254 = vmatprep.subr.mxu0 0.0
        %2255 = vmatpush2.msra.mxu0 0.0
        %2256 = vmatprep.subr.mxu0 0.0
        %2257 = vmatpush2.msra.mxu0 0.0
        %2258 = vmatprep.subr.mxu0 0.0
        %2259 = vmatpush2.msra.mxu0 0.0
        %2260 = vmatprep.subr.mxu0 0.0
        %2261 = vmatpush2.msra.mxu0 0.0
        %2262 = vmatprep.subr.mxu0 0.0
        %2263 = vmatpush2.msra.mxu0 0.0
        %2264 = vmatprep.subr.mxu0 0.0
        %2265 = vmatpush2.msra.mxu0 0.0
        %2266 = vmatprep.subr.mxu0 0.0
        %2267 = vmatpush2.msra.mxu0 0.0
        %2268 = vmatprep.subr.mxu0 0.0
        %2269 = vmatpush2.msra.mxu0 0.0
        %2270 = vmatprep.subr.mxu0 0.0
        %2271 = vmatpush2.msra.mxu0 0.0
        %2272 = vmatprep.subr.mxu0 0.0
        %2273 = vmatpush2.msra.mxu0 0.0
        %2274 = vmatprep.subr.mxu0 0.0
        %2275 = vmatpush2.msra.mxu0 0.0
        %2276 = vmatprep.subr.mxu0 0.0
        %2277 = vmatpush2.msra.mxu0 0.0
        %2278 = vmatprep.mubr.f32.mxu0 0.0
        %2279 = vmatmul.mubr.f32.gmra.mxu0 %v2070
        %v2280 = vpop.f32.mrf.mxu0
        %v2281 = vadd.f32 0.0, %v2280
        %v2282 = vpop.f32.mrf.mxu0
        %v2283 = vadd.f32 0.0, %v2282
        %2284 = vdwg.mxu0
        %2285 = vmatprep.subr.mxu0 0.0
        %2286 = vmatpush1.msra.mxu0 0.0
        %2287 = vmatprep.subr.mxu0 0.0
        %2288 = vmatpush1.msra.mxu0 0.0
        %2289 = vmatprep.subr.mxu0 0.0
        %2290 = vmatpush1.msra.mxu0 0.0
        %2291 = vmatprep.subr.mxu0 0.0
        %2292 = vmatpush1.msra.mxu0 0.0
        %2293 = vmatprep.subr.mxu0 0.0
        %2294 = vmatpush1.msra.mxu0 0.0
        %2295 = vmatprep.subr.mxu0 0.0
        %2296 = vmatpush1.msra.mxu0 0.0
        %2297 = vmatprep.subr.mxu0 0.0
        %2298 = vmatpush1.msra.mxu0 0.0
        %2299 = vmatprep.subr.mxu0 0.0
        %2300 = vmatpush1.msra.mxu0 0.0
        %2301 = vmatprep.subr.mxu0 0.0
        %2302 = vmatpush1.msra.mxu0 0.0
        %2303 = vmatprep.subr.mxu0 0.0
        %2304 = vmatpush1.msra.mxu0 0.0
        %2305 = vmatprep.subr.mxu0 0.0
        %2306 = vmatpush1.msra.mxu0 0.0
        %2307 = vmatprep.subr.mxu0 0.0
        %2308 = vmatpush1.msra.mxu0 0.0
        %2309 = vmatprep.subr.mxu0 %v2068
        %2310 = vmatpush1.msra.mxu0 %v2067
        %2311 = vmatprep.subr.mxu0 %v2060
        %2312 = vmatpush1.msra.mxu0 %v2059
        %2313 = vmatprep.subr.mxu0 %v2052
        %2314 = vmatpush1.msra.mxu0 %v2051
        %2315 = vmatprep.subr.mxu0 %v2044
        %2316 = vmatpush1.msra.mxu0 %v2043
        %2317 = vmatprep.subr.mxu0 0.0
        %2318 = vmatpush2.msra.mxu0 0.0
        %2319 = vmatprep.subr.mxu0 0.0
        %2320 = vmatpush2.msra.mxu0 0.0
        %2321 = vmatprep.subr.mxu0 0.0
        %2322 = vmatpush2.msra.mxu0 0.0
        %2323 = vmatprep.subr.mxu0 0.0
        %2324 = vmatpush2.msra.mxu0 0.0
        %2325 = vmatprep.subr.mxu0 0.0
        %2326 = vmatpush2.msra.mxu0 0.0
        %2327 = vmatprep.subr.mxu0 0.0
        %2328 = vmatpush2.msra.mxu0 0.0
        %2329 = vmatprep.subr.mxu0 0.0
        %2330 = vmatpush2.msra.mxu0 0.0
        %2331 = vmatprep.subr.mxu0 0.0
        %2332 = vmatpush2.msra.mxu0 0.0
        %2333 = vmatprep.subr.mxu0 0.0
        %2334 = vmatpush2.msra.mxu0 0.0
        %2335 = vmatprep.subr.mxu0 0.0
        %2336 = vmatpush2.msra.mxu0 0.0
        %2337 = vmatprep.subr.mxu0 0.0
        %2338 = vmatpush2.msra.mxu0 0.0
        %2339 = vmatprep.subr.mxu0 0.0
        %2340 = vmatpush2.msra.mxu0 0.0
        %2341 = vmatprep.subr.mxu0 0.0
        %2342 = vmatpush2.msra.mxu0 0.0
        %2343 = vmatprep.subr.mxu0 0.0
        %2344 = vmatpush2.msra.mxu0 0.0
        %2345 = vmatprep.subr.mxu0 0.0
        %2346 = vmatpush2.msra.mxu0 0.0
        %2347 = vmatprep.subr.mxu0 0.0
        %2348 = vmatpush2.msra.mxu0 0.0
        %2349 = vmatprep.mubr.f32.mxu0 0.0
        %2350 = vmatmul.mubr.f32.gmra.mxu0 %v2070
        %v2351 = vpop.f32.mrf.mxu0
        %v2352 = vadd.f32 0.0, %v2351
        %v2353 = vpop.f32.mrf.mxu0
        %v2354 = vadd.f32 0.0, %v2353
        %2355 = vdwg.mxu0
        %v2364 = vcombine.low %v2139, %v2141
        %v2365 = vcombine.low %v2210, %v2212
        %v2367 = vunpack.c.l.s4 1983009808
        %v2368 = vunpack.c.0.s8 %v2367
        %v2369 = vlaneseq
        %v2370 = vshrl.u32 %v2369, 7
        %v2371 = vsub.s32 %v2368, %v2370
        %v2372 = vrot.slane %v2364, %v2371
        %v2374 = vunpack.c.l.s4 1983009808
        %v2375 = vunpack.c.0.s8 %v2374
        %v2376 = vlaneseq
        %v2377 = vshrl.u32 %v2376, 7
        %v2378 = vsub.s32 %v2375, %v2377
        %v2379 = vrot.slane %v2365, %v2378
        %v2380 = vcombine.low %v2372, %v2379
        %v2381 = vcombine.low %v2281, %v2283
        %v2382 = vcombine.low %v2352, %v2354
        %v2384 = vunpack.c.l.s4 1983009808
        %v2385 = vunpack.c.0.s8 %v2384
        %v2386 = vlaneseq
        %v2387 = vshrl.u32 %v2386, 7
        %v2388 = vsub.s32 %v2385, %v2387
        %v2389 = vrot.slane %v2381, %v2388
        %v2391 = vunpack.c.l.s4 1983009808
        %v2392 = vunpack.c.0.s8 %v2391
        %v2393 = vlaneseq
        %v2394 = vshrl.u32 %v2393, 7
        %v2395 = vsub.s32 %v2392, %v2394
        %v2396 = vrot.slane %v2382, %v2395
        %v2397 = vcombine.low %v2389, %v2396
        %s2400 = scalar_lea.vmem %s189, 80
        %2401 = vst [vmem:[%s2400] sm:$0xff] %v2380
        %2402 = vst [vmem:[%s2400 + $0x8] sm:$0xff] %v2397
        %s2403 = scalar_lea.vmem %s181, 12
        %v2404 = vld [vmem:[%s2403] sm:$0x3]
        %s2405 = scalar_lea.vmem %s150, 1536 [#allocation2]
        %v2406 = vld [vmem:[%s2405] sm:$0xff]
        %v2407 = vld [vmem:[%s2405 + $0x8] sm:$0xff]
        %v2408 = vld [vmem:[%s2405 + $0x10] sm:$0xff]
        %v2409 = vld [vmem:[%s2405 + $0x18] sm:$0xff]
        %v2410 = vld [vmem:[%s2405 + $0x20] sm:$0xff]
        %v2411 = vld [vmem:[%s2405 + $0x28] sm:$0xff]
        %v2412 = vld [vmem:[%s2405 + $0x30] sm:$0xff]
        %v2413 = vld [vmem:[%s2405 + $0x38] sm:$0xff]
        %v2414 = vld [vmem:[%s2405 + $0x40] sm:$0xff]
        %v2415 = vld [vmem:[%s2405 + $0x48] sm:$0xff]
        %v2416 = vld [vmem:[%s2405 + $0x50] sm:$0xff]
        %v2417 = vld [vmem:[%s2405 + $0x58] sm:$0xff]
        %v2418 = vld [vmem:[%s2405 + $0x60] sm:$0xff]
        %v2419 = vld [vmem:[%s2405 + $0x68] sm:$0xff]
        %v2420 = vld [vmem:[%s2405 + $0x70] sm:$0xff]
        %v2421 = vld [vmem:[%s2405 + $0x78] sm:$0xff]
        %v2422 = vld [vmem:[%s2405 + $0x80] sm:$0xff]
        %v2423 = vld [vmem:[%s2405 + $0x88] sm:$0xff]
        %v2424 = vld [vmem:[%s2405 + $0x90] sm:$0xff]
        %v2425 = vld [vmem:[%s2405 + $0x98] sm:$0xff]
        %v2426 = vld [vmem:[%s2405 + $0xa0] sm:$0xff]
        %v2427 = vld [vmem:[%s2405 + $0xa8] sm:$0xff]
        %v2428 = vld [vmem:[%s2405 + $0xb0] sm:$0xff]
        %v2429 = vld [vmem:[%s2405 + $0xb8] sm:$0xff]
        %v2430 = vld [vmem:[%s2405 + $0xc0] sm:$0xff]
        %v2431 = vld [vmem:[%s2405 + $0xc8] sm:$0xff]
        %v2432 = vld [vmem:[%s2405 + $0xd0] sm:$0xff]
        %v2433 = vld [vmem:[%s2405 + $0xd8] sm:$0xff]
        %v2434 = vld [vmem:[%s2405 + $0xe0] sm:$0xff]
        %v2435 = vld [vmem:[%s2405 + $0xe8] sm:$0xff]
        %v2436 = vld [vmem:[%s2405 + $0xf0] sm:$0xff]
        %v2437 = vld [vmem:[%s2405 + $0xf8] sm:$0xff]
        %v2439 = vsel %vm224, %v2404, 0
        %2441 = vmatprep.subr.mxu0 0.0
        %2442 = vmatpush1.msra.mxu0 0.0
        %2443 = vmatprep.subr.mxu0 0.0
        %2444 = vmatpush1.msra.mxu0 0.0
        %2445 = vmatprep.subr.mxu0 0.0
        %2446 = vmatpush1.msra.mxu0 0.0
        %2447 = vmatprep.subr.mxu0 0.0
        %2448 = vmatpush1.msra.mxu0 0.0
        %2449 = vmatprep.subr.mxu0 0.0
        %2450 = vmatpush1.msra.mxu0 0.0
        %2451 = vmatprep.subr.mxu0 0.0
        %2452 = vmatpush1.msra.mxu0 0.0
        %2453 = vmatprep.subr.mxu0 0.0
        %2454 = vmatpush1.msra.mxu0 0.0
        %2455 = vmatprep.subr.mxu0 0.0
        %2456 = vmatpush1.msra.mxu0 0.0
        %2457 = vmatprep.subr.mxu0 0.0
        %2458 = vmatpush1.msra.mxu0 0.0
        %2459 = vmatprep.subr.mxu0 0.0
        %2460 = vmatpush1.msra.mxu0 0.0
        %2461 = vmatprep.subr.mxu0 0.0
        %2462 = vmatpush1.msra.mxu0 0.0
        %2463 = vmatprep.subr.mxu0 0.0
        %2464 = vmatpush1.msra.mxu0 0.0
        %2465 = vmatprep.subr.mxu0 %v2431
        %2466 = vmatpush1.msra.mxu0 %v2430
        %2467 = vmatprep.subr.mxu0 %v2423
        %2468 = vmatpush1.msra.mxu0 %v2422
        %2469 = vmatprep.subr.mxu0 %v2415
        %2470 = vmatpush1.msra.mxu0 %v2414
        %2471 = vmatprep.subr.mxu0 %v2407
        %2472 = vmatpush1.msra.mxu0 %v2406
        %2473 = vmatprep.subr.mxu0 0.0
        %2474 = vmatpush2.msra.mxu0 0.0
        %2475 = vmatprep.subr.mxu0 0.0
        %2476 = vmatpush2.msra.mxu0 0.0
        %2477 = vmatprep.subr.mxu0 0.0
        %2478 = vmatpush2.msra.mxu0 0.0
        %2479 = vmatprep.subr.mxu0 0.0
        %2480 = vmatpush2.msra.mxu0 0.0
        %2481 = vmatprep.subr.mxu0 0.0
        %2482 = vmatpush2.msra.mxu0 0.0
        %2483 = vmatprep.subr.mxu0 0.0
        %2484 = vmatpush2.msra.mxu0 0.0
        %2485 = vmatprep.subr.mxu0 0.0
        %2486 = vmatpush2.msra.mxu0 0.0
        %2487 = vmatprep.subr.mxu0 0.0
        %2488 = vmatpush2.msra.mxu0 0.0
        %2489 = vmatprep.subr.mxu0 0.0
        %2490 = vmatpush2.msra.mxu0 0.0
        %2491 = vmatprep.subr.mxu0 0.0
        %2492 = vmatpush2.msra.mxu0 0.0
        %2493 = vmatprep.subr.mxu0 0.0
        %2494 = vmatpush2.msra.mxu0 0.0
        %2495 = vmatprep.subr.mxu0 0.0
        %2496 = vmatpush2.msra.mxu0 0.0
        %2497 = vmatprep.subr.mxu0 0.0
        %2498 = vmatpush2.msra.mxu0 0.0
        %2499 = vmatprep.subr.mxu0 0.0
        %2500 = vmatpush2.msra.mxu0 0.0
        %2501 = vmatprep.subr.mxu0 0.0
        %2502 = vmatpush2.msra.mxu0 0.0
        %2503 = vmatprep.subr.mxu0 0.0
        %2504 = vmatpush2.msra.mxu0 0.0
        %2505 = vmatprep.mubr.f32.mxu0 0.0
        %2506 = vmatmul.mubr.f32.gmra.mxu0 %v2439
        %v2507 = vpop.f32.mrf.mxu0
        %v2508 = vadd.f32 0.0, %v2507
        %v2509 = vpop.f32.mrf.mxu0
        %v2510 = vadd.f32 0.0, %v2509
        %2511 = vdwg.mxu0
        %2512 = vmatprep.subr.mxu0 0.0
        %2513 = vmatpush1.msra.mxu0 0.0
        %2514 = vmatprep.subr.mxu0 0.0
        %2515 = vmatpush1.msra.mxu0 0.0
        %2516 = vmatprep.subr.mxu0 0.0
        %2517 = vmatpush1.msra.mxu0 0.0
        %2518 = vmatprep.subr.mxu0 0.0
        %2519 = vmatpush1.msra.mxu0 0.0
        %2520 = vmatprep.subr.mxu0 0.0
        %2521 = vmatpush1.msra.mxu0 0.0
        %2522 = vmatprep.subr.mxu0 0.0
        %2523 = vmatpush1.msra.mxu0 0.0
        %2524 = vmatprep.subr.mxu0 0.0
        %2525 = vmatpush1.msra.mxu0 0.0
        %2526 = vmatprep.subr.mxu0 0.0
        %2527 = vmatpush1.msra.mxu0 0.0
        %2528 = vmatprep.subr.mxu0 0.0
        %2529 = vmatpush1.msra.mxu0 0.0
        %2530 = vmatprep.subr.mxu0 0.0
        %2531 = vmatpush1.msra.mxu0 0.0
        %2532 = vmatprep.subr.mxu0 0.0
        %2533 = vmatpush1.msra.mxu0 0.0
        %2534 = vmatprep.subr.mxu0 0.0
        %2535 = vmatpush1.msra.mxu0 0.0
        %2536 = vmatprep.subr.mxu0 %v2433
        %2537 = vmatpush1.msra.mxu0 %v2432
        %2538 = vmatprep.subr.mxu0 %v2425
        %2539 = vmatpush1.msra.mxu0 %v2424
        %2540 = vmatprep.subr.mxu0 %v2417
        %2541 = vmatpush1.msra.mxu0 %v2416
        %2542 = vmatprep.subr.mxu0 %v2409
        %2543 = vmatpush1.msra.mxu0 %v2408
        %2544 = vmatprep.subr.mxu0 0.0
        %2545 = vmatpush2.msra.mxu0 0.0
        %2546 = vmatprep.subr.mxu0 0.0
        %2547 = vmatpush2.msra.mxu0 0.0
        %2548 = vmatprep.subr.mxu0 0.0
        %2549 = vmatpush2.msra.mxu0 0.0
        %2550 = vmatprep.subr.mxu0 0.0
        %2551 = vmatpush2.msra.mxu0 0.0
        %2552 = vmatprep.subr.mxu0 0.0
        %2553 = vmatpush2.msra.mxu0 0.0
        %2554 = vmatprep.subr.mxu0 0.0
        %2555 = vmatpush2.msra.mxu0 0.0
        %2556 = vmatprep.subr.mxu0 0.0
        %2557 = vmatpush2.msra.mxu0 0.0
        %2558 = vmatprep.subr.mxu0 0.0
        %2559 = vmatpush2.msra.mxu0 0.0
        %2560 = vmatprep.subr.mxu0 0.0
        %2561 = vmatpush2.msra.mxu0 0.0
        %2562 = vmatprep.subr.mxu0 0.0
        %2563 = vmatpush2.msra.mxu0 0.0
        %2564 = vmatprep.subr.mxu0 0.0
        %2565 = vmatpush2.msra.mxu0 0.0
        %2566 = vmatprep.subr.mxu0 0.0
        %2567 = vmatpush2.msra.mxu0 0.0
        %2568 = vmatprep.subr.mxu0 0.0
        %2569 = vmatpush2.msra.mxu0 0.0
        %2570 = vmatprep.subr.mxu0 0.0
        %2571 = vmatpush2.msra.mxu0 0.0
        %2572 = vmatprep.subr.mxu0 0.0
        %2573 = vmatpush2.msra.mxu0 0.0
        %2574 = vmatprep.subr.mxu0 0.0
        %2575 = vmatpush2.msra.mxu0 0.0
        %2576 = vmatprep.mubr.f32.mxu0 0.0
        %2577 = vmatmul.mubr.f32.gmra.mxu0 %v2439
        %v2578 = vpop.f32.mrf.mxu0
        %v2579 = vadd.f32 0.0, %v2578
        %v2580 = vpop.f32.mrf.mxu0
        %v2581 = vadd.f32 0.0, %v2580
        %2582 = vdwg.mxu0
        %2583 = vmatprep.subr.mxu0 0.0
        %2584 = vmatpush1.msra.mxu0 0.0
        %2585 = vmatprep.subr.mxu0 0.0
        %2586 = vmatpush1.msra.mxu0 0.0
        %2587 = vmatprep.subr.mxu0 0.0
        %2588 = vmatpush1.msra.mxu0 0.0
        %2589 = vmatprep.subr.mxu0 0.0
        %2590 = vmatpush1.msra.mxu0 0.0
        %2591 = vmatprep.subr.mxu0 0.0
        %2592 = vmatpush1.msra.mxu0 0.0
        %2593 = vmatprep.subr.mxu0 0.0
        %2594 = vmatpush1.msra.mxu0 0.0
        %2595 = vmatprep.subr.mxu0 0.0
        %2596 = vmatpush1.msra.mxu0 0.0
        %2597 = vmatprep.subr.mxu0 0.0
        %2598 = vmatpush1.msra.mxu0 0.0
        %2599 = vmatprep.subr.mxu0 0.0
        %2600 = vmatpush1.msra.mxu0 0.0
        %2601 = vmatprep.subr.mxu0 0.0
        %2602 = vmatpush1.msra.mxu0 0.0
        %2603 = vmatprep.subr.mxu0 0.0
        %2604 = vmatpush1.msra.mxu0 0.0
        %2605 = vmatprep.subr.mxu0 0.0
        %2606 = vmatpush1.msra.mxu0 0.0
        %2607 = vmatprep.subr.mxu0 %v2435
        %2608 = vmatpush1.msra.mxu0 %v2434
        %2609 = vmatprep.subr.mxu0 %v2427
        %2610 = vmatpush1.msra.mxu0 %v2426
        %2611 = vmatprep.subr.mxu0 %v2419
        %2612 = vmatpush1.msra.mxu0 %v2418
        %2613 = vmatprep.subr.mxu0 %v2411
        %2614 = vmatpush1.msra.mxu0 %v2410
        %2615 = vmatprep.subr.mxu0 0.0
        %2616 = vmatpush2.msra.mxu0 0.0
        %2617 = vmatprep.subr.mxu0 0.0
        %2618 = vmatpush2.msra.mxu0 0.0
        %2619 = vmatprep.subr.mxu0 0.0
        %2620 = vmatpush2.msra.mxu0 0.0
        %2621 = vmatprep.subr.mxu0 0.0
        %2622 = vmatpush2.msra.mxu0 0.0
        %2623 = vmatprep.subr.mxu0 0.0
        %2624 = vmatpush2.msra.mxu0 0.0
        %2625 = vmatprep.subr.mxu0 0.0
        %2626 = vmatpush2.msra.mxu0 0.0
        %2627 = vmatprep.subr.mxu0 0.0
        %2628 = vmatpush2.msra.mxu0 0.0
        %2629 = vmatprep.subr.mxu0 0.0
        %2630 = vmatpush2.msra.mxu0 0.0
        %2631 = vmatprep.subr.mxu0 0.0
        %2632 = vmatpush2.msra.mxu0 0.0
        %2633 = vmatprep.subr.mxu0 0.0
        %2634 = vmatpush2.msra.mxu0 0.0
        %2635 = vmatprep.subr.mxu0 0.0
        %2636 = vmatpush2.msra.mxu0 0.0
        %2637 = vmatprep.subr.mxu0 0.0
        %2638 = vmatpush2.msra.mxu0 0.0
        %2639 = vmatprep.subr.mxu0 0.0
        %2640 = vmatpush2.msra.mxu0 0.0
        %2641 = vmatprep.subr.mxu0 0.0
        %2642 = vmatpush2.msra.mxu0 0.0
        %2643 = vmatprep.subr.mxu0 0.0
        %2644 = vmatpush2.msra.mxu0 0.0
        %2645 = vmatprep.subr.mxu0 0.0
        %2646 = vmatpush2.msra.mxu0 0.0
        %2647 = vmatprep.mubr.f32.mxu0 0.0
        %2648 = vmatmul.mubr.f32.gmra.mxu0 %v2439
        %v2649 = vpop.f32.mrf.mxu0
        %v2650 = vadd.f32 0.0, %v2649
        %v2651 = vpop.f32.mrf.mxu0
        %v2652 = vadd.f32 0.0, %v2651
        %2653 = vdwg.mxu0
        %2654 = vmatprep.subr.mxu0 0.0
        %2655 = vmatpush1.msra.mxu0 0.0
        %2656 = vmatprep.subr.mxu0 0.0
        %2657 = vmatpush1.msra.mxu0 0.0
        %2658 = vmatprep.subr.mxu0 0.0
        %2659 = vmatpush1.msra.mxu0 0.0
        %2660 = vmatprep.subr.mxu0 0.0
        %2661 = vmatpush1.msra.mxu0 0.0
        %2662 = vmatprep.subr.mxu0 0.0
        %2663 = vmatpush1.msra.mxu0 0.0
        %2664 = vmatprep.subr.mxu0 0.0
        %2665 = vmatpush1.msra.mxu0 0.0
        %2666 = vmatprep.subr.mxu0 0.0
        %2667 = vmatpush1.msra.mxu0 0.0
        %2668 = vmatprep.subr.mxu0 0.0
        %2669 = vmatpush1.msra.mxu0 0.0
        %2670 = vmatprep.subr.mxu0 0.0
        %2671 = vmatpush1.msra.mxu0 0.0
        %2672 = vmatprep.subr.mxu0 0.0
        %2673 = vmatpush1.msra.mxu0 0.0
        %2674 = vmatprep.subr.mxu0 0.0
        %2675 = vmatpush1.msra.mxu0 0.0
        %2676 = vmatprep.subr.mxu0 0.0
        %2677 = vmatpush1.msra.mxu0 0.0
        %2678 = vmatprep.subr.mxu0 %v2437
        %2679 = vmatpush1.msra.mxu0 %v2436
        %2680 = vmatprep.subr.mxu0 %v2429
        %2681 = vmatpush1.msra.mxu0 %v2428
        %2682 = vmatprep.subr.mxu0 %v2421
        %2683 = vmatpush1.msra.mxu0 %v2420
        %2684 = vmatprep.subr.mxu0 %v2413
        %2685 = vmatpush1.msra.mxu0 %v2412
        %2686 = vmatprep.subr.mxu0 0.0
        %2687 = vmatpush2.msra.mxu0 0.0
        %2688 = vmatprep.subr.mxu0 0.0
        %2689 = vmatpush2.msra.mxu0 0.0
        %2690 = vmatprep.subr.mxu0 0.0
        %2691 = vmatpush2.msra.mxu0 0.0
        %2692 = vmatprep.subr.mxu0 0.0
        %2693 = vmatpush2.msra.mxu0 0.0
        %2694 = vmatprep.subr.mxu0 0.0
        %2695 = vmatpush2.msra.mxu0 0.0
        %2696 = vmatprep.subr.mxu0 0.0
        %2697 = vmatpush2.msra.mxu0 0.0
        %2698 = vmatprep.subr.mxu0 0.0
        %2699 = vmatpush2.msra.mxu0 0.0
        %2700 = vmatprep.subr.mxu0 0.0
        %2701 = vmatpush2.msra.mxu0 0.0
        %2702 = vmatprep.subr.mxu0 0.0
        %2703 = vmatpush2.msra.mxu0 0.0
        %2704 = vmatprep.subr.mxu0 0.0
        %2705 = vmatpush2.msra.mxu0 0.0
        %2706 = vmatprep.subr.mxu0 0.0
        %2707 = vmatpush2.msra.mxu0 0.0
        %2708 = vmatprep.subr.mxu0 0.0
        %2709 = vmatpush2.msra.mxu0 0.0
        %2710 = vmatprep.subr.mxu0 0.0
        %2711 = vmatpush2.msra.mxu0 0.0
        %2712 = vmatprep.subr.mxu0 0.0
        %2713 = vmatpush2.msra.mxu0 0.0
        %2714 = vmatprep.subr.mxu0 0.0
        %2715 = vmatpush2.msra.mxu0 0.0
        %2716 = vmatprep.subr.mxu0 0.0
        %2717 = vmatpush2.msra.mxu0 0.0
        %2718 = vmatprep.mubr.f32.mxu0 0.0
        %2719 = vmatmul.mubr.f32.gmra.mxu0 %v2439
        %v2720 = vpop.f32.mrf.mxu0
        %v2721 = vadd.f32 0.0, %v2720
        %v2722 = vpop.f32.mrf.mxu0
        %v2723 = vadd.f32 0.0, %v2722
        %2724 = vdwg.mxu0
        %v2733 = vcombine.low %v2508, %v2510
        %v2734 = vcombine.low %v2579, %v2581
        %v2736 = vunpack.c.l.s4 1983009808
        %v2737 = vunpack.c.0.s8 %v2736
        %v2738 = vlaneseq
        %v2739 = vshrl.u32 %v2738, 7
        %v2740 = vsub.s32 %v2737, %v2739
        %v2741 = vrot.slane %v2733, %v2740
        %v2743 = vunpack.c.l.s4 1983009808
        %v2744 = vunpack.c.0.s8 %v2743
        %v2745 = vlaneseq
        %v2746 = vshrl.u32 %v2745, 7
        %v2747 = vsub.s32 %v2744, %v2746
        %v2748 = vrot.slane %v2734, %v2747
        %v2749 = vcombine.low %v2741, %v2748
        %v2750 = vcombine.low %v2650, %v2652
        %v2751 = vcombine.low %v2721, %v2723
        %v2753 = vunpack.c.l.s4 1983009808
        %v2754 = vunpack.c.0.s8 %v2753
        %v2755 = vlaneseq
        %v2756 = vshrl.u32 %v2755, 7
        %v2757 = vsub.s32 %v2754, %v2756
        %v2758 = vrot.slane %v2750, %v2757
        %v2760 = vunpack.c.l.s4 1983009808
        %v2761 = vunpack.c.0.s8 %v2760
        %v2762 = vlaneseq
        %v2763 = vshrl.u32 %v2762, 7
        %v2764 = vsub.s32 %v2761, %v2763
        %v2765 = vrot.slane %v2751, %v2764
        %v2766 = vcombine.low %v2758, %v2765
        %s2769 = scalar_lea.vmem %s189, 96
        %2770 = vst [vmem:[%s2769] sm:$0xff] %v2749
        %2771 = vst [vmem:[%s2769 + $0x8] sm:$0xff] %v2766
        %s2772 = scalar_lea.vmem %s181, 14
        %v2773 = vld [vmem:[%s2772] sm:$0x3]
        %s2774 = scalar_lea.vmem %s150, 1792 [#allocation2]
        %v2775 = vld [vmem:[%s2774] sm:$0xff]
        %v2776 = vld [vmem:[%s2774 + $0x8] sm:$0xff]
        %v2777 = vld [vmem:[%s2774 + $0x10] sm:$0xff]
        %v2778 = vld [vmem:[%s2774 + $0x18] sm:$0xff]
        %v2779 = vld [vmem:[%s2774 + $0x20] sm:$0xff]
        %v2780 = vld [vmem:[%s2774 + $0x28] sm:$0xff]
        %v2781 = vld [vmem:[%s2774 + $0x30] sm:$0xff]
        %v2782 = vld [vmem:[%s2774 + $0x38] sm:$0xff]
        %v2783 = vld [vmem:[%s2774 + $0x40] sm:$0xff]
        %v2784 = vld [vmem:[%s2774 + $0x48] sm:$0xff]
        %v2785 = vld [vmem:[%s2774 + $0x50] sm:$0xff]
        %v2786 = vld [vmem:[%s2774 + $0x58] sm:$0xff]
        %v2787 = vld [vmem:[%s2774 + $0x60] sm:$0xff]
        %v2788 = vld [vmem:[%s2774 + $0x68] sm:$0xff]
        %v2789 = vld [vmem:[%s2774 + $0x70] sm:$0xff]
        %v2790 = vld [vmem:[%s2774 + $0x78] sm:$0xff]
        %v2791 = vld [vmem:[%s2774 + $0x80] sm:$0xff]
        %v2792 = vld [vmem:[%s2774 + $0x88] sm:$0xff]
        %v2793 = vld [vmem:[%s2774 + $0x90] sm:$0xff]
        %v2794 = vld [vmem:[%s2774 + $0x98] sm:$0xff]
        %v2795 = vld [vmem:[%s2774 + $0xa0] sm:$0xff]
        %v2796 = vld [vmem:[%s2774 + $0xa8] sm:$0xff]
        %v2797 = vld [vmem:[%s2774 + $0xb0] sm:$0xff]
        %v2798 = vld [vmem:[%s2774 + $0xb8] sm:$0xff]
        %v2799 = vld [vmem:[%s2774 + $0xc0] sm:$0xff]
        %v2800 = vld [vmem:[%s2774 + $0xc8] sm:$0xff]
        %v2801 = vld [vmem:[%s2774 + $0xd0] sm:$0xff]
        %v2802 = vld [vmem:[%s2774 + $0xd8] sm:$0xff]
        %v2803 = vld [vmem:[%s2774 + $0xe0] sm:$0xff]
        %v2804 = vld [vmem:[%s2774 + $0xe8] sm:$0xff]
        %v2805 = vld [vmem:[%s2774 + $0xf0] sm:$0xff]
        %v2806 = vld [vmem:[%s2774 + $0xf8] sm:$0xff]
        %v2808 = vsel %vm224, %v2773, 0
        %2810 = vmatprep.subr.mxu0 0.0
        %2811 = vmatpush1.msra.mxu0 0.0
        %2812 = vmatprep.subr.mxu0 0.0
        %2813 = vmatpush1.msra.mxu0 0.0
        %2814 = vmatprep.subr.mxu0 0.0
        %2815 = vmatpush1.msra.mxu0 0.0
        %2816 = vmatprep.subr.mxu0 0.0
        %2817 = vmatpush1.msra.mxu0 0.0
        %2818 = vmatprep.subr.mxu0 0.0
        %2819 = vmatpush1.msra.mxu0 0.0
        %2820 = vmatprep.subr.mxu0 0.0
        %2821 = vmatpush1.msra.mxu0 0.0
        %2822 = vmatprep.subr.mxu0 0.0
        %2823 = vmatpush1.msra.mxu0 0.0
        %2824 = vmatprep.subr.mxu0 0.0
        %2825 = vmatpush1.msra.mxu0 0.0
        %2826 = vmatprep.subr.mxu0 0.0
        %2827 = vmatpush1.msra.mxu0 0.0
        %2828 = vmatprep.subr.mxu0 0.0
        %2829 = vmatpush1.msra.mxu0 0.0
        %2830 = vmatprep.subr.mxu0 0.0
        %2831 = vmatpush1.msra.mxu0 0.0
        %2832 = vmatprep.subr.mxu0 0.0
        %2833 = vmatpush1.msra.mxu0 0.0
        %2834 = vmatprep.subr.mxu0 %v2800
        %2835 = vmatpush1.msra.mxu0 %v2799
        %2836 = vmatprep.subr.mxu0 %v2792
        %2837 = vmatpush1.msra.mxu0 %v2791
        %2838 = vmatprep.subr.mxu0 %v2784
        %2839 = vmatpush1.msra.mxu0 %v2783
        %2840 = vmatprep.subr.mxu0 %v2776
        %2841 = vmatpush1.msra.mxu0 %v2775
        %2842 = vmatprep.subr.mxu0 0.0
        %2843 = vmatpush2.msra.mxu0 0.0
        %2844 = vmatprep.subr.mxu0 0.0
        %2845 = vmatpush2.msra.mxu0 0.0
        %2846 = vmatprep.subr.mxu0 0.0
        %2847 = vmatpush2.msra.mxu0 0.0
        %2848 = vmatprep.subr.mxu0 0.0
        %2849 = vmatpush2.msra.mxu0 0.0
        %2850 = vmatprep.subr.mxu0 0.0
        %2851 = vmatpush2.msra.mxu0 0.0
        %2852 = vmatprep.subr.mxu0 0.0
        %2853 = vmatpush2.msra.mxu0 0.0
        %2854 = vmatprep.subr.mxu0 0.0
        %2855 = vmatpush2.msra.mxu0 0.0
        %2856 = vmatprep.subr.mxu0 0.0
        %2857 = vmatpush2.msra.mxu0 0.0
        %2858 = vmatprep.subr.mxu0 0.0
        %2859 = vmatpush2.msra.mxu0 0.0
        %2860 = vmatprep.subr.mxu0 0.0
        %2861 = vmatpush2.msra.mxu0 0.0
        %2862 = vmatprep.subr.mxu0 0.0
        %2863 = vmatpush2.msra.mxu0 0.0
        %2864 = vmatprep.subr.mxu0 0.0
        %2865 = vmatpush2.msra.mxu0 0.0
        %2866 = vmatprep.subr.mxu0 0.0
        %2867 = vmatpush2.msra.mxu0 0.0
        %2868 = vmatprep.subr.mxu0 0.0
        %2869 = vmatpush2.msra.mxu0 0.0
        %2870 = vmatprep.subr.mxu0 0.0
        %2871 = vmatpush2.msra.mxu0 0.0
        %2872 = vmatprep.subr.mxu0 0.0
        %2873 = vmatpush2.msra.mxu0 0.0
        %2874 = vmatprep.mubr.f32.mxu0 0.0
        %2875 = vmatmul.mubr.f32.gmra.mxu0 %v2808
        %v2876 = vpop.f32.mrf.mxu0
        %v2877 = vadd.f32 0.0, %v2876
        %v2878 = vpop.f32.mrf.mxu0
        %v2879 = vadd.f32 0.0, %v2878
        %2880 = vdwg.mxu0
        %2881 = vmatprep.subr.mxu0 0.0
        %2882 = vmatpush1.msra.mxu0 0.0
        %2883 = vmatprep.subr.mxu0 0.0
        %2884 = vmatpush1.msra.mxu0 0.0
        %2885 = vmatprep.subr.mxu0 0.0
        %2886 = vmatpush1.msra.mxu0 0.0
        %2887 = vmatprep.subr.mxu0 0.0
        %2888 = vmatpush1.msra.mxu0 0.0
        %2889 = vmatprep.subr.mxu0 0.0
        %2890 = vmatpush1.msra.mxu0 0.0
        %2891 = vmatprep.subr.mxu0 0.0
        %2892 = vmatpush1.msra.mxu0 0.0
        %2893 = vmatprep.subr.mxu0 0.0
        %2894 = vmatpush1.msra.mxu0 0.0
        %2895 = vmatprep.subr.mxu0 0.0
        %2896 = vmatpush1.msra.mxu0 0.0
        %2897 = vmatprep.subr.mxu0 0.0
        %2898 = vmatpush1.msra.mxu0 0.0
        %2899 = vmatprep.subr.mxu0 0.0
        %2900 = vmatpush1.msra.mxu0 0.0
        %2901 = vmatprep.subr.mxu0 0.0
        %2902 = vmatpush1.msra.mxu0 0.0
        %2903 = vmatprep.subr.mxu0 0.0
        %2904 = vmatpush1.msra.mxu0 0.0
        %2905 = vmatprep.subr.mxu0 %v2802
        %2906 = vmatpush1.msra.mxu0 %v2801
        %2907 = vmatprep.subr.mxu0 %v2794
        %2908 = vmatpush1.msra.mxu0 %v2793
        %2909 = vmatprep.subr.mxu0 %v2786
        %2910 = vmatpush1.msra.mxu0 %v2785
        %2911 = vmatprep.subr.mxu0 %v2778
        %2912 = vmatpush1.msra.mxu0 %v2777
        %2913 = vmatprep.subr.mxu0 0.0
        %2914 = vmatpush2.msra.mxu0 0.0
        %2915 = vmatprep.subr.mxu0 0.0
        %2916 = vmatpush2.msra.mxu0 0.0
        %2917 = vmatprep.subr.mxu0 0.0
        %2918 = vmatpush2.msra.mxu0 0.0
        %2919 = vmatprep.subr.mxu0 0.0
        %2920 = vmatpush2.msra.mxu0 0.0
        %2921 = vmatprep.subr.mxu0 0.0
        %2922 = vmatpush2.msra.mxu0 0.0
        %2923 = vmatprep.subr.mxu0 0.0
        %2924 = vmatpush2.msra.mxu0 0.0
        %2925 = vmatprep.subr.mxu0 0.0
        %2926 = vmatpush2.msra.mxu0 0.0
        %2927 = vmatprep.subr.mxu0 0.0
        %2928 = vmatpush2.msra.mxu0 0.0
        %2929 = vmatprep.subr.mxu0 0.0
        %2930 = vmatpush2.msra.mxu0 0.0
        %2931 = vmatprep.subr.mxu0 0.0
        %2932 = vmatpush2.msra.mxu0 0.0
        %2933 = vmatprep.subr.mxu0 0.0
        %2934 = vmatpush2.msra.mxu0 0.0
        %2935 = vmatprep.subr.mxu0 0.0
        %2936 = vmatpush2.msra.mxu0 0.0
        %2937 = vmatprep.subr.mxu0 0.0
        %2938 = vmatpush2.msra.mxu0 0.0
        %2939 = vmatprep.subr.mxu0 0.0
        %2940 = vmatpush2.msra.mxu0 0.0
        %2941 = vmatprep.subr.mxu0 0.0
        %2942 = vmatpush2.msra.mxu0 0.0
        %2943 = vmatprep.subr.mxu0 0.0
        %2944 = vmatpush2.msra.mxu0 0.0
        %2945 = vmatprep.mubr.f32.mxu0 0.0
        %2946 = vmatmul.mubr.f32.gmra.mxu0 %v2808
        %v2947 = vpop.f32.mrf.mxu0
        %v2948 = vadd.f32 0.0, %v2947
        %v2949 = vpop.f32.mrf.mxu0
        %v2950 = vadd.f32 0.0, %v2949
        %2951 = vdwg.mxu0
        %2952 = vmatprep.subr.mxu0 0.0
        %2953 = vmatpush1.msra.mxu0 0.0
        %2954 = vmatprep.subr.mxu0 0.0
        %2955 = vmatpush1.msra.mxu0 0.0
        %2956 = vmatprep.subr.mxu0 0.0
        %2957 = vmatpush1.msra.mxu0 0.0
        %2958 = vmatprep.subr.mxu0 0.0
        %2959 = vmatpush1.msra.mxu0 0.0
        %2960 = vmatprep.subr.mxu0 0.0
        %2961 = vmatpush1.msra.mxu0 0.0
        %2962 = vmatprep.subr.mxu0 0.0
        %2963 = vmatpush1.msra.mxu0 0.0
        %2964 = vmatprep.subr.mxu0 0.0
        %2965 = vmatpush1.msra.mxu0 0.0
        %2966 = vmatprep.subr.mxu0 0.0
        %2967 = vmatpush1.msra.mxu0 0.0
        %2968 = vmatprep.subr.mxu0 0.0
        %2969 = vmatpush1.msra.mxu0 0.0
        %2970 = vmatprep.subr.mxu0 0.0
        %2971 = vmatpush1.msra.mxu0 0.0
        %2972 = vmatprep.subr.mxu0 0.0
        %2973 = vmatpush1.msra.mxu0 0.0
        %2974 = vmatprep.subr.mxu0 0.0
        %2975 = vmatpush1.msra.mxu0 0.0
        %2976 = vmatprep.subr.mxu0 %v2804
        %2977 = vmatpush1.msra.mxu0 %v2803
        %2978 = vmatprep.subr.mxu0 %v2796
        %2979 = vmatpush1.msra.mxu0 %v2795
        %2980 = vmatprep.subr.mxu0 %v2788
        %2981 = vmatpush1.msra.mxu0 %v2787
        %2982 = vmatprep.subr.mxu0 %v2780
        %2983 = vmatpush1.msra.mxu0 %v2779
        %2984 = vmatprep.subr.mxu0 0.0
        %2985 = vmatpush2.msra.mxu0 0.0
        %2986 = vmatprep.subr.mxu0 0.0
        %2987 = vmatpush2.msra.mxu0 0.0
        %2988 = vmatprep.subr.mxu0 0.0
        %2989 = vmatpush2.msra.mxu0 0.0
        %2990 = vmatprep.subr.mxu0 0.0
        %2991 = vmatpush2.msra.mxu0 0.0
        %2992 = vmatprep.subr.mxu0 0.0
        %2993 = vmatpush2.msra.mxu0 0.0
        %2994 = vmatprep.subr.mxu0 0.0
        %2995 = vmatpush2.msra.mxu0 0.0
        %2996 = vmatprep.subr.mxu0 0.0
        %2997 = vmatpush2.msra.mxu0 0.0
        %2998 = vmatprep.subr.mxu0 0.0
        %2999 = vmatpush2.msra.mxu0 0.0
        %3000 = vmatprep.subr.mxu0 0.0
        %3001 = vmatpush2.msra.mxu0 0.0
        %3002 = vmatprep.subr.mxu0 0.0
        %3003 = vmatpush2.msra.mxu0 0.0
        %3004 = vmatprep.subr.mxu0 0.0
        %3005 = vmatpush2.msra.mxu0 0.0
        %3006 = vmatprep.subr.mxu0 0.0
        %3007 = vmatpush2.msra.mxu0 0.0
        %3008 = vmatprep.subr.mxu0 0.0
        %3009 = vmatpush2.msra.mxu0 0.0
        %3010 = vmatprep.subr.mxu0 0.0
        %3011 = vmatpush2.msra.mxu0 0.0
        %3012 = vmatprep.subr.mxu0 0.0
        %3013 = vmatpush2.msra.mxu0 0.0
        %3014 = vmatprep.subr.mxu0 0.0
        %3015 = vmatpush2.msra.mxu0 0.0
        %3016 = vmatprep.mubr.f32.mxu0 0.0
        %3017 = vmatmul.mubr.f32.gmra.mxu0 %v2808
        %v3018 = vpop.f32.mrf.mxu0
        %v3019 = vadd.f32 0.0, %v3018
        %v3020 = vpop.f32.mrf.mxu0
        %v3021 = vadd.f32 0.0, %v3020
        %3022 = vdwg.mxu0
        %3023 = vmatprep.subr.mxu0 0.0
        %3024 = vmatpush1.msra.mxu0 0.0
        %3025 = vmatprep.subr.mxu0 0.0
        %3026 = vmatpush1.msra.mxu0 0.0
        %3027 = vmatprep.subr.mxu0 0.0
        %3028 = vmatpush1.msra.mxu0 0.0
        %3029 = vmatprep.subr.mxu0 0.0
        %3030 = vmatpush1.msra.mxu0 0.0
        %3031 = vmatprep.subr.mxu0 0.0
        %3032 = vmatpush1.msra.mxu0 0.0
        %3033 = vmatprep.subr.mxu0 0.0
        %3034 = vmatpush1.msra.mxu0 0.0
        %3035 = vmatprep.subr.mxu0 0.0
        %3036 = vmatpush1.msra.mxu0 0.0
        %3037 = vmatprep.subr.mxu0 0.0
        %3038 = vmatpush1.msra.mxu0 0.0
        %3039 = vmatprep.subr.mxu0 0.0
        %3040 = vmatpush1.msra.mxu0 0.0
        %3041 = vmatprep.subr.mxu0 0.0
        %3042 = vmatpush1.msra.mxu0 0.0
        %3043 = vmatprep.subr.mxu0 0.0
        %3044 = vmatpush1.msra.mxu0 0.0
        %3045 = vmatprep.subr.mxu0 0.0
        %3046 = vmatpush1.msra.mxu0 0.0
        %3047 = vmatprep.subr.mxu0 %v2806
        %3048 = vmatpush1.msra.mxu0 %v2805
        %3049 = vmatprep.subr.mxu0 %v2798
        %3050 = vmatpush1.msra.mxu0 %v2797
        %3051 = vmatprep.subr.mxu0 %v2790
        %3052 = vmatpush1.msra.mxu0 %v2789
        %3053 = vmatprep.subr.mxu0 %v2782
        %3054 = vmatpush1.msra.mxu0 %v2781
        %3055 = vmatprep.subr.mxu0 0.0
        %3056 = vmatpush2.msra.mxu0 0.0
        %3057 = vmatprep.subr.mxu0 0.0
        %3058 = vmatpush2.msra.mxu0 0.0
        %3059 = vmatprep.subr.mxu0 0.0
        %3060 = vmatpush2.msra.mxu0 0.0
        %3061 = vmatprep.subr.mxu0 0.0
        %3062 = vmatpush2.msra.mxu0 0.0
        %3063 = vmatprep.subr.mxu0 0.0
        %3064 = vmatpush2.msra.mxu0 0.0
        %3065 = vmatprep.subr.mxu0 0.0
        %3066 = vmatpush2.msra.mxu0 0.0
        %3067 = vmatprep.subr.mxu0 0.0
        %3068 = vmatpush2.msra.mxu0 0.0
        %3069 = vmatprep.subr.mxu0 0.0
        %3070 = vmatpush2.msra.mxu0 0.0
        %3071 = vmatprep.subr.mxu0 0.0
        %3072 = vmatpush2.msra.mxu0 0.0
        %3073 = vmatprep.subr.mxu0 0.0
        %3074 = vmatpush2.msra.mxu0 0.0
        %3075 = vmatprep.subr.mxu0 0.0
        %3076 = vmatpush2.msra.mxu0 0.0
        %3077 = vmatprep.subr.mxu0 0.0
        %3078 = vmatpush2.msra.mxu0 0.0
        %3079 = vmatprep.subr.mxu0 0.0
        %3080 = vmatpush2.msra.mxu0 0.0
        %3081 = vmatprep.subr.mxu0 0.0
        %3082 = vmatpush2.msra.mxu0 0.0
        %3083 = vmatprep.subr.mxu0 0.0
        %3084 = vmatpush2.msra.mxu0 0.0
        %3085 = vmatprep.subr.mxu0 0.0
        %3086 = vmatpush2.msra.mxu0 0.0
        %3087 = vmatprep.mubr.f32.mxu0 0.0
        %3088 = vmatmul.mubr.f32.gmra.mxu0 %v2808
        %v3089 = vpop.f32.mrf.mxu0
        %v3090 = vadd.f32 0.0, %v3089
        %v3091 = vpop.f32.mrf.mxu0
        %v3092 = vadd.f32 0.0, %v3091
        %3093 = vdwg.mxu0
        %v3102 = vcombine.low %v2877, %v2879
        %v3103 = vcombine.low %v2948, %v2950
        %v3105 = vunpack.c.l.s4 1983009808
        %v3106 = vunpack.c.0.s8 %v3105
        %v3107 = vlaneseq
        %v3108 = vshrl.u32 %v3107, 7
        %v3109 = vsub.s32 %v3106, %v3108
        %v3110 = vrot.slane %v3102, %v3109
        %v3112 = vunpack.c.l.s4 1983009808
        %v3113 = vunpack.c.0.s8 %v3112
        %v3114 = vlaneseq
        %v3115 = vshrl.u32 %v3114, 7
        %v3116 = vsub.s32 %v3113, %v3115
        %v3117 = vrot.slane %v3103, %v3116
        %v3118 = vcombine.low %v3110, %v3117
        %v3119 = vcombine.low %v3019, %v3021
        %v3120 = vcombine.low %v3090, %v3092
        %v3122 = vunpack.c.l.s4 1983009808
        %v3123 = vunpack.c.0.s8 %v3122
        %v3124 = vlaneseq
        %v3125 = vshrl.u32 %v3124, 7
        %v3126 = vsub.s32 %v3123, %v3125
        %v3127 = vrot.slane %v3119, %v3126
        %v3129 = vunpack.c.l.s4 1983009808
        %v3130 = vunpack.c.0.s8 %v3129
        %v3131 = vlaneseq
        %v3132 = vshrl.u32 %v3131, 7
        %v3133 = vsub.s32 %v3130, %v3132
        %v3134 = vrot.slane %v3120, %v3133
        %v3135 = vcombine.low %v3127, %v3134
        %s3138 = scalar_lea.vmem %s189, 112
        %3139 = vst [vmem:[%s3138] sm:$0xff] %v3118
        %3140 = vst [vmem:[%s3138 + $0x8] sm:$0xff] %v3135
        %s3141 = smul.u32 8, %s16
        %p3142 = scmp.lt.s32.totalorder %s3141, 31
        %s3143 = scalar_select %p3142, %s3141, 31
        %s3144 = smul.addr %s3143, 8
        %s3145 = smul.addr %s3144, 2
        %s3146 = scalar_lea.vmem %s2, %s3145
        // Predicated region
        $region33: #{a_call__.5} parent=27 // pred_check
          %p3147 = pneg %p86
        $region34: #{a_call__.5} parent=27 // pred_check_branch
          %3149 = sbr.rel (%p3147) target = $region36
        $region35: #{a_call__.5} parent=27 // pred_region
          %s3150 = smul.u32 8, %s16
        $region36: #{a_call__.5} parent=27 // pred_fallthru
          _
      $region28: #{a_call__.5} parent=5 // pred_fallthru
        _
      %p3151 = scmp.le.s32.totalorder 2, %s11
      // Predicated region
      $region37: #{a_call__.5} parent=5 // pred_check
        %p3152 = pneg %p3151
      $region38: #{a_call__.5} parent=5 // pred_check_branch
        %3154 = sbr.rel (%p3152) target = $region40
      $region39: #{a_call__.5} parent=5 // pred_region
        %s3155 = ssub.s32 %s11, 2
        // Predicated region
        $region41: #{a_call__.5} parent=39 // pred_check
          %p3156 = pneg %p92
        $region42: #{a_call__.5} parent=39 // pred_check_branch
          %3158 = sbr.rel (%p3156) target = $region44
        $region43: #{a_call__.5} parent=39 // pred_region
          %s3159 = smul.u32 8, %s17
          %p3160 = scmp.lt.s32.totalorder %s3159, 31
          %s3161 = scalar_select %p3160, %s3159, 31
          %s3162 = smul.addr %s3161, 8
          %s3163 = smul.addr %s3162, 2
          %s3164 = scalar_lea.vmem %s2, %s3163
        $region44: #{a_call__.5} parent=39 // pred_fallthru
          _
      $region40: #{a_call__.5} parent=5 // pred_fallthru
        _
    $region6: #{a_call__.5} parent=1 // loop_footer
      %s15 = sadd.s32 1, %s11
    $region7: #{a_call__.5} parent=1 // loop_footer_branch
      %10 = sbr.rel target = $region3
    $region8: #{a_call__.5} parent=1 // loop_exit
      _
    %3165 = vsyncpa [#allocation3], 1
    %s3166 = scalar_lea.sflag [#allocation3], 1
    %3167 = vsyncpa %s3166, 1

</llo_original>
